<compile_context>
chip_gen: v6e
topology: v6e:2x2x1
jax: 0.10.0
libtpu: 0.0.40
codegen_flags: <defaults>
</compile_context>

<pallas_src>
import functools
import math

import jax
import jax.numpy as jnp
from jax.experimental import pallas as pl
from jax.experimental.pallas import tpu as pltpu

STATE_SIZE = 32
N_HEADS = 4
FF_DIM = int(4 * STATE_SIZE)   # ff_multiplier = 4
N_LAYERS = 2
OUT_DIM = 16                   # out_embedding_size


# ----------------------------------------------------------------------------
# Fused Pallas kernel: whole BERT forward for one batch-chunk per grid step
# ----------------------------------------------------------------------------
def _bert_fused_kernel(len_ref,                      # scalar-prefetch (SMEM)
                       x_ref, pe_ref,
                       wqkv_ref, bqkv_ref, wo_ref, bo_ref,
                       ln1g_ref, ln1b_ref,
                       w1_ref, b1_ref, w2_ref, b2_ref,
                       ln2g_ref, ln2b_ref,
                       dw1_ref, db1_ref, dw2_ref, db2_ref,
                       out_ref,
                       o_scratch,                    # VMEM [nb*S, D] f32
                       *, nb, seq, n_heads, n_layers, eps):
    f32, bf16 = jnp.float32, jnp.bfloat16
    S, H = seq, n_heads
    D = x_ref.shape[-1]
    Dh = D // H
    b0 = pl.program_id(0) * nb          # global batch offset of this grid step

    def mm(a, w):
        # MXU matmul: bf16 operands, f32 accumulation.
        return jnp.dot(a.astype(bf16), w.astype(bf16),
                       preferred_element_type=f32)

    def mm_nt_bf(a_bf, b_bf):
        # a @ b.T on pre-cast bf16 operands (NT dot_general, no transpose).
        return jax.lax.dot_general(
            a_bf, b_bf,
            dimension_numbers=(((1,), (1,)), ((), ())),
            preferred_element_type=f32)

    def layernorm(y, g, b):
        mu = jnp.mean(y, axis=-1, keepdims=True)
        var = jnp.mean(jnp.square(y - mu), axis=-1, keepdims=True)
        return (y - mu) * jax.lax.rsqrt(var + eps) * g + b

    # --- sinusoidal positional encoding add (scale_mode='none') ---
    h = x_ref[...].astype(f32) + pe_ref[...].astype(f32)            # [nb*S, D]

    # --- key-padding additive bias, pre-broadcast to [S, S] ONCE per batch
    #     (hoisted out of the (layer, head) loops) ---
    col = jax.lax.broadcasted_iota(jnp.int32, (S, S), 1)
    key_bias = [jnp.where(col >= len_ref[b0 + b], jnp.float32(-1e9),
                          jnp.float32(0.0)) for b in range(nb)]     # nb x [S,S]

    for l in range(n_layers):
        # ---- fused QKV projection (1/sqrt(Dh) folded into Q at init) ----
        qkv = mm(h, wqkv_ref[l]) + bqkv_ref[l]                      # [nb*S, 3D] f32
        qkv_bf = qkv.astype(bf16)                                   # single hoisted cast

        # ---- per-(batch, head) attention; head outputs written into their
        #      lane slot of one [nb*S, D] slab (single Wo matmul below) ----
        for b in range(nb):
            r0 = b * S
            bias_b = key_bias[b]
            for hd in range(H):
                c = hd * Dh
                qh = qkv_bf[r0:r0 + S, c:c + Dh]                    # [S, Dh] bf16
                kh = qkv_bf[r0:r0 + S, D + c:D + c + Dh]
                vh = qkv_bf[r0:r0 + S, 2 * D + c:2 * D + c + Dh]
                s = mm_nt_bf(qh, kh) + bias_b                       # [S, S] f32
                p = jnp.exp(s - jnp.max(s, axis=-1, keepdims=True))
                p = p * pl.reciprocal(jnp.sum(p, axis=-1, keepdims=True),
                                      approx=True)
                oh = jnp.dot(p.astype(bf16), vh,
                             preferred_element_type=f32)            # [S, Dh]
                o_scratch[r0:r0 + S, c:c + Dh] = oh

        # ---- single fused output projection per layer ----
        attn = mm(o_scratch[...], wo_ref[l]) + bo_ref[l]            # [nb*S, D]

        # ---- post-LN residual 1 ----
        h = layernorm(h + attn, ln1g_ref[l], ln1b_ref[l])

        # ---- FFN: ReLU(h W1 + b1) W2 + b2 ----
        ff = jnp.maximum(mm(h, w1_ref[l]) + b1_ref[l], 0.0)         # [nb*S, FF]
        ff = mm(ff, w2_ref[l]) + b2_ref[l]                          # [nb*S, D]

        # ---- post-LN residual 2 ----
        h = layernorm(h + ff, ln2g_ref[l], ln2b_ref[l])

    # ---- CLS (token 0 of every batch) via static sublane row slices ----
    if nb == 1:
        cls = h[0:1, :]
    else:
        cls = jnp.concatenate([h[b * S:b * S + 1, :] for b in range(nb)],
                              axis=0)                               # [nb, D]

    # ---- SinDecoder head ----
    # TODO(synk): SinDecoder internals unavailable; implemented as
    # Linear(D->D) + ReLU + Linear(D->OUT_DIM) MLP head.
    hid = jnp.maximum(mm(cls, dw1_ref[...]) + db1_ref[...], 0.0)    # [nb, D]
    out = mm(hid, dw2_ref[...]) + db2_ref[...]                      # [nb, OUT]
    out_ref[0] = out.astype(out_ref.dtype)


# ----------------------------------------------------------------------------
# Parameter setup (pre-stacked per-layer weights, scale folded into Q)
# ----------------------------------------------------------------------------
def sinusoidal_pe(length, d_model):
    pos = jnp.arange(length, dtype=jnp.float32)[:, None]
    div = jnp.exp(jnp.arange(0, d_model, 2, dtype=jnp.float32)
                  * (-math.log(10000.0) / d_model))
    pe = jnp.zeros((length, d_model), jnp.float32)
    pe = pe.at[:, 0::2].set(jnp.sin(pos * div))
    pe = pe.at[:, 1::2].set(jnp.cos(pos * div))
    return pe


def _dense_init(key, din, dout):
    w = jax.random.normal(key, (din, dout), jnp.float32) / math.sqrt(din)
    b = jnp.zeros((dout,), jnp.float32)
    return w, b


def init_params(key):
    keys = iter(jax.random.split(key, 64))
    scale = 1.0 / math.sqrt(STATE_SIZE // N_HEADS)     # folded into Q proj
    acc = {k: [] for k in ("wqkv", "bqkv", "wo", "bo", "ln1_g", "ln1_b",
                           "w1", "b1", "w2", "b2", "ln2_g", "ln2_b")}
    for _ in range(N_LAYERS):
        wq, bq = _dense_init(next(keys), STATE_SIZE, STATE_SIZE)
        wk, bk = _dense_init(next(keys), STATE_SIZE, STATE_SIZE)
        wv, bv = _dense_init(next(keys), STATE_SIZE, STATE_SIZE)
        acc["wqkv"].append(jnp.concatenate([wq * scale, wk, wv], axis=1))
        acc["bqkv"].append(jnp.concatenate([bq * scale, bk, bv])[None, :])
        wo, bo = _dense_init(next(keys), STATE_SIZE, STATE_SIZE)
        acc["wo"].append(wo)
        acc["bo"].append(bo[None, :])
        acc["ln1_g"].append(jnp.ones((1, STATE_SIZE), jnp.float32))
        acc["ln1_b"].append(jnp.zeros((1, STATE_SIZE), jnp.float32))
        w1, b1 = _dense_init(next(keys), STATE_SIZE, FF_DIM)
        w2, b2 = _dense_init(next(keys), FF_DIM, STATE_SIZE)
        acc["w1"].append(w1)
        acc["b1"].append(b1[None, :])
        acc["w2"].append(w2)
        acc["b2"].append(b2[None, :])
        acc["ln2_g"].append(jnp.ones((1, STATE_SIZE), jnp.float32))
        acc["ln2_b"].append(jnp.zeros((1, STATE_SIZE), jnp.float32))
    params = {k: jnp.stack(v) for k, v in acc.items()}
    dw1, db1 = _dense_init(next(keys), STATE_SIZE, STATE_SIZE)
    dw2, db2 = _dense_init(next(keys), STATE_SIZE, OUT_DIM)
    params.update({"dec_w1": dw1, "dec_b1": db1[None, :],
                   "dec_w2": dw2, "dec_b2": db2[None, :]})
    return params


# ----------------------------------------------------------------------------
# Wrapper: single pallas_call; batch-chunked grid (per-batch on v7x only)
# ----------------------------------------------------------------------------
def _batches_per_step(n_batch):
    """1 on v7x (shard batches across the 2 TensorCores), N otherwise."""
    try:
        kind = jax.devices()[0].device_kind.lower()
    except Exception:
        return n_batch
    if "v7" in kind or "7x" in kind:
        return 1
    return n_batch


def bert_forward(params, src, src_len):
    """src: [N, S, D] float32, src_len: [N] int32 -> [N, OUT_DIM]."""
    N, S, D = src.shape
    nb = _batches_per_step(N)                # batches processed per grid step
    grid = (N // nb,)
    x = src.reshape(N * S, D)                            # free reshape
    pe = jnp.tile(sinusoidal_pe(S, D), (N, 1))           # constant-folded

    kernel = functools.partial(
        _bert_fused_kernel,
        nb=nb, seq=S, n_heads=N_HEADS, n_layers=N_LAYERS, eps=1e-5)

    def act_spec():
        return pl.BlockSpec((nb * S, D), lambda i, len_ref: (i, 0))

    def full_spec(a):
        nd = a.ndim
        return pl.BlockSpec(a.shape, lambda i, len_ref, _z=(0,) * nd: _z)

    weights = (params["wqkv"], params["bqkv"], params["wo"], params["bo"],
               params["ln1_g"], params["ln1_b"],
               params["w1"], params["b1"], params["w2"], params["b2"],
               params["ln2_g"], params["ln2_b"],
               params["dec_w1"], params["dec_b1"],
               params["dec_w2"], params["dec_b2"])

    grid_spec = pltpu.PrefetchScalarGridSpec(
        num_scalar_prefetch=1,                 # src_len -> SMEM
        grid=grid,
        in_specs=[act_spec(), act_spec()] + [full_spec(w) for w in weights],
        out_specs=pl.BlockSpec((1, nb, OUT_DIM), lambda i, len_ref: (i, 0, 0)),
        scratch_shapes=[pltpu.VMEM((nb * S, D), jnp.float32)],
    )

    out = pl.pallas_call(
        kernel,
        grid_spec=grid_spec,
        out_shape=jax.ShapeDtypeStruct((N // nb, nb, OUT_DIM), jnp.float32),
        compiler_params=pltpu.CompilerParams(
            dimension_semantics=("parallel",)),
    )(src_len, x, pe, *weights)

    return out.reshape(N, OUT_DIM)


# ----------------------------------------------------------------------------
# Main
# ----------------------------------------------------------------------------
if __name__ == "__main__":
    N, S = 2, 8
    key = jax.random.PRNGKey(0)
    k_param, k_src = jax.random.split(key)

    params = init_params(k_param)
    src = jax.random.normal(k_src, (N, S, STATE_SIZE), jnp.float32)
    src_len = jnp.array([8, 5], dtype=jnp.int32)

    fwd = jax.jit(bert_forward)
    out = fwd(params, src, src_len)
    jax.block_until_ready(out)

    assert out.shape == (N, OUT_DIM), out.shape
    assert bool(jnp.all(jnp.isfinite(out)))
    print("KERNEL_OK")
</pallas_src>

<mosaic_0001>
module attributes {stable_mosaic.version = 11 : i64} {
  func.func @_bert_fused_kernel(%arg0: i32, %arg1: memref<2xi32, #tpu.memory_space<smem>>, %arg2: memref<16x32xf32, #tpu.memory_space<vmem>>, %arg3: memref<16x32xf32, #tpu.memory_space<vmem>>, %arg4: memref<2x32x96xf32, #tpu.memory_space<vmem>>, %arg5: memref<2x1x96xf32, #tpu.memory_space<vmem>>, %arg6: memref<2x32x32xf32, #tpu.memory_space<vmem>>, %arg7: memref<2x1x32xf32, #tpu.memory_space<vmem>>, %arg8: memref<2x1x32xf32, #tpu.memory_space<vmem>>, %arg9: memref<2x1x32xf32, #tpu.memory_space<vmem>>, %arg10: memref<2x32x128xf32, #tpu.memory_space<vmem>>, %arg11: memref<2x1x128xf32, #tpu.memory_space<vmem>>, %arg12: memref<2x128x32xf32, #tpu.memory_space<vmem>>, %arg13: memref<2x1x32xf32, #tpu.memory_space<vmem>>, %arg14: memref<2x1x32xf32, #tpu.memory_space<vmem>>, %arg15: memref<2x1x32xf32, #tpu.memory_space<vmem>>, %arg16: memref<32x32xf32, #tpu.memory_space<vmem>>, %arg17: memref<1x32xf32, #tpu.memory_space<vmem>>, %arg18: memref<32x16xf32, #tpu.memory_space<vmem>>, %arg19: memref<1x16xf32, #tpu.memory_space<vmem>>, %arg20: memref<1x2x16xf32, #tpu.memory_space<vmem>>, %arg21: memref<16x32xf32, #tpu.memory_space<vmem>>) attributes {dimension_semantics = [#tpu.dimension_semantics<parallel>], iteration_bounds = array<i64: 1>, scalar_prefetch = 1 : i64, scratch_operands = 1 : i64, tpu.core_type = #tpu.core_type<tc>, window_params = [{transform_indices = @transform_0, window_bounds = array<i64: 16, 32>}, {transform_indices = @transform_1, window_bounds = array<i64: 16, 32>}, {pipeline_mode = #tpu.pipeline_mode<synchronous>, transform_indices = @transform_2, window_bounds = array<i64: 2, 32, 96>}, {pipeline_mode = #tpu.pipeline_mode<synchronous>, transform_indices = @transform_3, window_bounds = array<i64: 2, 1, 96>}, {pipeline_mode = #tpu.pipeline_mode<synchronous>, transform_indices = @transform_4, window_bounds = array<i64: 2, 32, 32>}, {pipeline_mode = #tpu.pipeline_mode<synchronous>, transform_indices = @transform_5, window_bounds = array<i64: 2, 1, 32>}, {pipeline_mode = #tpu.pipeline_mode<synchronous>, transform_indices = @transform_6, window_bounds = array<i64: 2, 1, 32>}, {pipeline_mode = #tpu.pipeline_mode<synchronous>, transform_indices = @transform_7, window_bounds = array<i64: 2, 1, 32>}, {pipeline_mode = #tpu.pipeline_mode<synchronous>, transform_indices = @transform_8, window_bounds = array<i64: 2, 32, 128>}, {pipeline_mode = #tpu.pipeline_mode<synchronous>, transform_indices = @transform_9, window_bounds = array<i64: 2, 1, 128>}, {pipeline_mode = #tpu.pipeline_mode<synchronous>, transform_indices = @transform_10, window_bounds = array<i64: 2, 128, 32>}, {pipeline_mode = #tpu.pipeline_mode<synchronous>, transform_indices = @transform_11, window_bounds = array<i64: 2, 1, 32>}, {pipeline_mode = #tpu.pipeline_mode<synchronous>, transform_indices = @transform_12, window_bounds = array<i64: 2, 1, 32>}, {pipeline_mode = #tpu.pipeline_mode<synchronous>, transform_indices = @transform_13, window_bounds = array<i64: 2, 1, 32>}, {pipeline_mode = #tpu.pipeline_mode<synchronous>, transform_indices = @transform_14, window_bounds = array<i64: 32, 32>}, {pipeline_mode = #tpu.pipeline_mode<synchronous>, transform_indices = @transform_15, window_bounds = array<i64: 1, 32>}, {pipeline_mode = #tpu.pipeline_mode<synchronous>, transform_indices = @transform_16, window_bounds = array<i64: 32, 16>}, {pipeline_mode = #tpu.pipeline_mode<synchronous>, transform_indices = @transform_17, window_bounds = array<i64: 1, 16>}, {transform_indices = @transform_18, window_bounds = array<i64: 1, 2, 16>}]} {
    %c2_i32 = arith.constant 2 : i32
    %0 = arith.muli %arg0, %c2_i32 : i32
    %c0 = arith.constant 0 : index
    %c0_0 = arith.constant 0 : index
    %1 = vector.load %arg2[%c0, %c0_0] : memref<16x32xf32, #tpu.memory_space<vmem>>, vector<16x32xf32>
    %c0_1 = arith.constant 0 : index
    %c0_2 = arith.constant 0 : index
    %2 = vector.load %arg3[%c0_1, %c0_2] : memref<16x32xf32, #tpu.memory_space<vmem>>, vector<16x32xf32>
    %3 = arith.addf %1, %2 : vector<16x32xf32>
    %4 = tpu.iota {dimensions = array<i32: 1>} : vector<8x8xi32>
    %c0_i32 = arith.constant 0 : i32
    %5 = arith.addi %0, %c0_i32 : i32
    %6 = arith.index_cast %5 : i32 to index
    %7 = memref.load %arg1[%6] : memref<2xi32, #tpu.memory_space<smem>>
    %8 = vector.broadcast %7 : i32 to vector<8x8xi32>
    %9 = arith.cmpi sge, %4, %8 : vector<8x8xi32>
    %cst = arith.constant -1.000000e+09 : f32
    %cst_3 = arith.constant 0.000000e+00 : f32
    %10 = vector.broadcast %cst : f32 to vector<8x8xf32>
    %11 = vector.broadcast %cst_3 : f32 to vector<8x8xf32>
    %12 = arith.select %9, %10, %11 : vector<8x8xi1>, vector<8x8xf32>
    %c1_i32 = arith.constant 1 : i32
    %13 = arith.addi %0, %c1_i32 : i32
    %14 = arith.index_cast %13 : i32 to index
    %15 = memref.load %arg1[%14] : memref<2xi32, #tpu.memory_space<smem>>
    %16 = vector.broadcast %15 : i32 to vector<8x8xi32>
    %17 = arith.cmpi sge, %4, %16 : vector<8x8xi32>
    %cst_4 = arith.constant -1.000000e+09 : f32
    %cst_5 = arith.constant 0.000000e+00 : f32
    %18 = vector.broadcast %cst_4 : f32 to vector<8x8xf32>
    %19 = vector.broadcast %cst_5 : f32 to vector<8x8xf32>
    %20 = arith.select %17, %18, %19 : vector<8x8xi1>, vector<8x8xf32>
    %c0_6 = arith.constant 0 : index
    %c0_7 = arith.constant 0 : index
    %c0_8 = arith.constant 0 : index
    %21 = vector.load %arg4[%c0_6, %c0_7, %c0_8] : memref<2x32x96xf32, #tpu.memory_space<vmem>>, vector<1x32x96xf32>
    %22 = vector.shape_cast %21 : vector<1x32x96xf32> to vector<32x96xf32>
    %23 = arith.truncf %3 : vector<16x32xf32> to vector<16x32xbf16>
    %24 = arith.truncf %22 : vector<32x96xf32> to vector<32x96xbf16>
    %cst_9 = arith.constant dense<0.000000e+00> : vector<16x96xf32>
    %25 = tpu.matmul %23, %24, %cst_9 {dimension_numbers = #tpu.dot_dimension_numbers<[1], [0], [0], [1], [0, 0, 1, 1], [], []>} : vector<16x32xbf16>, vector<32x96xbf16>, vector<16x96xf32> -> vector<16x96xf32>
    %c0_10 = arith.constant 0 : index
    %c0_11 = arith.constant 0 : index
    %c0_12 = arith.constant 0 : index
    %26 = vector.load %arg5[%c0_10, %c0_11, %c0_12] : memref<2x1x96xf32, #tpu.memory_space<vmem>>, vector<1x1x96xf32>
    %27 = vector.shape_cast %26 : vector<1x1x96xf32> to vector<1x96xf32>
    %28 = vector.broadcast %27 : vector<1x96xf32> to vector<16x96xf32>
    %29 = arith.addf %25, %28 : vector<16x96xf32>
    %30 = arith.truncf %29 : vector<16x96xf32> to vector<16x96xbf16>
    %31 = vector.extract_strided_slice %30 {offsets = [0, 0], sizes = [8, 8], strides = [1, 1]} : vector<16x96xbf16> to vector<8x8xbf16>
    %32 = vector.extract_strided_slice %30 {offsets = [0, 32], sizes = [8, 8], strides = [1, 1]} : vector<16x96xbf16> to vector<8x8xbf16>
    %33 = vector.extract_strided_slice %30 {offsets = [0, 64], sizes = [8, 8], strides = [1, 1]} : vector<16x96xbf16> to vector<8x8xbf16>
    %cst_13 = arith.constant dense<0.000000e+00> : vector<8x8xf32>
    %34 = tpu.matmul %31, %32, %cst_13 {dimension_numbers = #tpu.dot_dimension_numbers<[1], [1], [0], [0], [0, 0, 1, 0], [], []>} : vector<8x8xbf16>, vector<8x8xbf16>, vector<8x8xf32> -> vector<8x8xf32>
    %35 = arith.addf %34, %12 : vector<8x8xf32>
    %cst_14 = arith.constant dense<0xFF800000> : vector<8xf32>
    %36 = vector.multi_reduction <maximumf>, %35, %cst_14 [1] : vector<8x8xf32> to vector<8xf32>
    %37 = vector.shape_cast %36 : vector<8xf32> to vector<8x1xf32>
    %38 = vector.broadcast %37 : vector<8x1xf32> to vector<8x8xf32>
    %39 = arith.subf %35, %38 : vector<8x8xf32>
    %40 = math.exp %39 : vector<8x8xf32>
    %cst_15 = arith.constant dense<0.000000e+00> : vector<8xf32>
    %41 = vector.multi_reduction <add>, %40, %cst_15 [1] : vector<8x8xf32> to vector<8xf32>
    %42 = vector.shape_cast %41 : vector<8xf32> to vector<8x1xf32>
    %43 = tpu.reciprocal %42 {approx = true} : vector<8x1xf32> -> vector<8x1xf32>
    %44 = vector.broadcast %43 : vector<8x1xf32> to vector<8x8xf32>
    %45 = arith.mulf %40, %44 : vector<8x8xf32>
    %46 = arith.truncf %45 : vector<8x8xf32> to vector<8x8xbf16>
    %cst_16 = arith.constant dense<0.000000e+00> : vector<8x8xf32>
    %47 = tpu.matmul %46, %33, %cst_16 {dimension_numbers = #tpu.dot_dimension_numbers<[1], [0], [0], [1], [0, 0, 1, 1], [], []>} : vector<8x8xbf16>, vector<8x8xbf16>, vector<8x8xf32> -> vector<8x8xf32>
    %c0_17 = arith.constant 0 : index
    %c0_18 = arith.constant 0 : index
    %48 = vector.load %arg21[%c0_17, %c0_18] : memref<16x32xf32, #tpu.memory_space<vmem>>, vector<8x8xf32>
    tpu.vector_store %arg21[%c0_17, %c0_18], %47 {strides = array<i32>} : memref<16x32xf32, #tpu.memory_space<vmem>>, vector<8x8xf32>,
    %49 = vector.extract_strided_slice %30 {offsets = [0, 8], sizes = [8, 8], strides = [1, 1]} : vector<16x96xbf16> to vector<8x8xbf16>
    %50 = vector.extract_strided_slice %30 {offsets = [0, 40], sizes = [8, 8], strides = [1, 1]} : vector<16x96xbf16> to vector<8x8xbf16>
    %51 = vector.extract_strided_slice %30 {offsets = [0, 72], sizes = [8, 8], strides = [1, 1]} : vector<16x96xbf16> to vector<8x8xbf16>
    %cst_19 = arith.constant dense<0.000000e+00> : vector<8x8xf32>
    %52 = tpu.matmul %49, %50, %cst_19 {dimension_numbers = #tpu.dot_dimension_numbers<[1], [1], [0], [0], [0, 0, 1, 0], [], []>} : vector<8x8xbf16>, vector<8x8xbf16>, vector<8x8xf32> -> vector<8x8xf32>
    %53 = arith.addf %52, %12 : vector<8x8xf32>
    %cst_20 = arith.constant dense<0xFF800000> : vector<8xf32>
    %54 = vector.multi_reduction <maximumf>, %53, %cst_20 [1] : vector<8x8xf32> to vector<8xf32>
    %55 = vector.shape_cast %54 : vector<8xf32> to vector<8x1xf32>
    %56 = vector.broadcast %55 : vector<8x1xf32> to vector<8x8xf32>
    %57 = arith.subf %53, %56 : vector<8x8xf32>
    %58 = math.exp %57 : vector<8x8xf32>
    %cst_21 = arith.constant dense<0.000000e+00> : vector<8xf32>
    %59 = vector.multi_reduction <add>, %58, %cst_21 [1] : vector<8x8xf32> to vector<8xf32>
    %60 = vector.shape_cast %59 : vector<8xf32> to vector<8x1xf32>
    %61 = tpu.reciprocal %60 {approx = true} : vector<8x1xf32> -> vector<8x1xf32>
    %62 = vector.broadcast %61 : vector<8x1xf32> to vector<8x8xf32>
    %63 = arith.mulf %58, %62 : vector<8x8xf32>
    %64 = arith.truncf %63 : vector<8x8xf32> to vector<8x8xbf16>
    %cst_22 = arith.constant dense<0.000000e+00> : vector<8x8xf32>
    %65 = tpu.matmul %64, %51, %cst_22 {dimension_numbers = #tpu.dot_dimension_numbers<[1], [0], [0], [1], [0, 0, 1, 1], [], []>} : vector<8x8xbf16>, vector<8x8xbf16>, vector<8x8xf32> -> vector<8x8xf32>
    %c0_23 = arith.constant 0 : index
    %c8 = arith.constant 8 : index
    %66 = vector.load %arg21[%c0_23, %c8] : memref<16x32xf32, #tpu.memory_space<vmem>>, vector<8x8xf32>
    tpu.vector_store %arg21[%c0_23, %c8], %65 {strides = array<i32>} : memref<16x32xf32, #tpu.memory_space<vmem>>, vector<8x8xf32>,
    %67 = vector.extract_strided_slice %30 {offsets = [0, 16], sizes = [8, 8], strides = [1, 1]} : vector<16x96xbf16> to vector<8x8xbf16>
    %68 = vector.extract_strided_slice %30 {offsets = [0, 48], sizes = [8, 8], strides = [1, 1]} : vector<16x96xbf16> to vector<8x8xbf16>
    %69 = vector.extract_strided_slice %30 {offsets = [0, 80], sizes = [8, 8], strides = [1, 1]} : vector<16x96xbf16> to vector<8x8xbf16>
    %cst_24 = arith.constant dense<0.000000e+00> : vector<8x8xf32>
    %70 = tpu.matmul %67, %68, %cst_24 {dimension_numbers = #tpu.dot_dimension_numbers<[1], [1], [0], [0], [0, 0, 1, 0], [], []>} : vector<8x8xbf16>, vector<8x8xbf16>, vector<8x8xf32> -> vector<8x8xf32>
    %71 = arith.addf %70, %12 : vector<8x8xf32>
    %cst_25 = arith.constant dense<0xFF800000> : vector<8xf32>
    %72 = vector.multi_reduction <maximumf>, %71, %cst_25 [1] : vector<8x8xf32> to vector<8xf32>
    %73 = vector.shape_cast %72 : vector<8xf32> to vector<8x1xf32>
    %74 = vector.broadcast %73 : vector<8x1xf32> to vector<8x8xf32>
    %75 = arith.subf %71, %74 : vector<8x8xf32>
    %76 = math.exp %75 : vector<8x8xf32>
    %cst_26 = arith.constant dense<0.000000e+00> : vector<8xf32>
    %77 = vector.multi_reduction <add>, %76, %cst_26 [1] : vector<8x8xf32> to vector<8xf32>
    %78 = vector.shape_cast %77 : vector<8xf32> to vector<8x1xf32>
    %79 = tpu.reciprocal %78 {approx = true} : vector<8x1xf32> -> vector<8x1xf32>
    %80 = vector.broadcast %79 : vector<8x1xf32> to vector<8x8xf32>
    %81 = arith.mulf %76, %80 : vector<8x8xf32>
    %82 = arith.truncf %81 : vector<8x8xf32> to vector<8x8xbf16>
    %cst_27 = arith.constant dense<0.000000e+00> : vector<8x8xf32>
    %83 = tpu.matmul %82, %69, %cst_27 {dimension_numbers = #tpu.dot_dimension_numbers<[1], [0], [0], [1], [0, 0, 1, 1], [], []>} : vector<8x8xbf16>, vector<8x8xbf16>, vector<8x8xf32> -> vector<8x8xf32>
    %c0_28 = arith.constant 0 : index
    %c16 = arith.constant 16 : index
    %84 = vector.load %arg21[%c0_28, %c16] : memref<16x32xf32, #tpu.memory_space<vmem>>, vector<8x8xf32>
    tpu.vector_store %arg21[%c0_28, %c16], %83 {strides = array<i32>} : memref<16x32xf32, #tpu.memory_space<vmem>>, vector<8x8xf32>,
    %85 = vector.extract_strided_slice %30 {offsets = [0, 24], sizes = [8, 8], strides = [1, 1]} : vector<16x96xbf16> to vector<8x8xbf16>
    %86 = vector.extract_strided_slice %30 {offsets = [0, 56], sizes = [8, 8], strides = [1, 1]} : vector<16x96xbf16> to vector<8x8xbf16>
    %87 = vector.extract_strided_slice %30 {offsets = [0, 88], sizes = [8, 8], strides = [1, 1]} : vector<16x96xbf16> to vector<8x8xbf16>
    %cst_29 = arith.constant dense<0.000000e+00> : vector<8x8xf32>
    %88 = tpu.matmul %85, %86, %cst_29 {dimension_numbers = #tpu.dot_dimension_numbers<[1], [1], [0], [0], [0, 0, 1, 0], [], []>} : vector<8x8xbf16>, vector<8x8xbf16>, vector<8x8xf32> -> vector<8x8xf32>
    %89 = arith.addf %88, %12 : vector<8x8xf32>
    %cst_30 = arith.constant dense<0xFF800000> : vector<8xf32>
    %90 = vector.multi_reduction <maximumf>, %89, %cst_30 [1] : vector<8x8xf32> to vector<8xf32>
    %91 = vector.shape_cast %90 : vector<8xf32> to vector<8x1xf32>
    %92 = vector.broadcast %91 : vector<8x1xf32> to vector<8x8xf32>
    %93 = arith.subf %89, %92 : vector<8x8xf32>
    %94 = math.exp %93 : vector<8x8xf32>
    %cst_31 = arith.constant dense<0.000000e+00> : vector<8xf32>
    %95 = vector.multi_reduction <add>, %94, %cst_31 [1] : vector<8x8xf32> to vector<8xf32>
    %96 = vector.shape_cast %95 : vector<8xf32> to vector<8x1xf32>
    %97 = tpu.reciprocal %96 {approx = true} : vector<8x1xf32> -> vector<8x1xf32>
    %98 = vector.broadcast %97 : vector<8x1xf32> to vector<8x8xf32>
    %99 = arith.mulf %94, %98 : vector<8x8xf32>
    %100 = arith.truncf %99 : vector<8x8xf32> to vector<8x8xbf16>
    %cst_32 = arith.constant dense<0.000000e+00> : vector<8x8xf32>
    %101 = tpu.matmul %100, %87, %cst_32 {dimension_numbers = #tpu.dot_dimension_numbers<[1], [0], [0], [1], [0, 0, 1, 1], [], []>} : vector<8x8xbf16>, vector<8x8xbf16>, vector<8x8xf32> -> vector<8x8xf32>
    %c0_33 = arith.constant 0 : index
    %c24 = arith.constant 24 : index
    %102 = vector.load %arg21[%c0_33, %c24] : memref<16x32xf32, #tpu.memory_space<vmem>>, vector<8x8xf32>
    tpu.vector_store %arg21[%c0_33, %c24], %101 {strides = array<i32>} : memref<16x32xf32, #tpu.memory_space<vmem>>, vector<8x8xf32>,
    %103 = vector.extract_strided_slice %30 {offsets = [8, 0], sizes = [8, 8], strides = [1, 1]} : vector<16x96xbf16> to vector<8x8xbf16>
    %104 = vector.extract_strided_slice %30 {offsets = [8, 32], sizes = [8, 8], strides = [1, 1]} : vector<16x96xbf16> to vector<8x8xbf16>
    %105 = vector.extract_strided_slice %30 {offsets = [8, 64], sizes = [8, 8], strides = [1, 1]} : vector<16x96xbf16> to vector<8x8xbf16>
    %cst_34 = arith.constant dense<0.000000e+00> : vector<8x8xf32>
    %106 = tpu.matmul %103, %104, %cst_34 {dimension_numbers = #tpu.dot_dimension_numbers<[1], [1], [0], [0], [0, 0, 1, 0], [], []>} : vector<8x8xbf16>, vector<8x8xbf16>, vector<8x8xf32> -> vector<8x8xf32>
    %107 = arith.addf %106, %20 : vector<8x8xf32>
    %cst_35 = arith.constant dense<0xFF800000> : vector<8xf32>
    %108 = vector.multi_reduction <maximumf>, %107, %cst_35 [1] : vector<8x8xf32> to vector<8xf32>
    %109 = vector.shape_cast %108 : vector<8xf32> to vector<8x1xf32>
    %110 = vector.broadcast %109 : vector<8x1xf32> to vector<8x8xf32>
    %111 = arith.subf %107, %110 : vector<8x8xf32>
    %112 = math.exp %111 : vector<8x8xf32>
    %cst_36 = arith.constant dense<0.000000e+00> : vector<8xf32>
    %113 = vector.multi_reduction <add>, %112, %cst_36 [1] : vector<8x8xf32> to vector<8xf32>
    %114 = vector.shape_cast %113 : vector<8xf32> to vector<8x1xf32>
    %115 = tpu.reciprocal %114 {approx = true} : vector<8x1xf32> -> vector<8x1xf32>
    %116 = vector.broadcast %115 : vector<8x1xf32> to vector<8x8xf32>
    %117 = arith.mulf %112, %116 : vector<8x8xf32>
    %118 = arith.truncf %117 : vector<8x8xf32> to vector<8x8xbf16>
    %cst_37 = arith.constant dense<0.000000e+00> : vector<8x8xf32>
    %119 = tpu.matmul %118, %105, %cst_37 {dimension_numbers = #tpu.dot_dimension_numbers<[1], [0], [0], [1], [0, 0, 1, 1], [], []>} : vector<8x8xbf16>, vector<8x8xbf16>, vector<8x8xf32> -> vector<8x8xf32>
    %c8_38 = arith.constant 8 : index
    %c0_39 = arith.constant 0 : index
    %120 = vector.load %arg21[%c8_38, %c0_39] : memref<16x32xf32, #tpu.memory_space<vmem>>, vector<8x8xf32>
    tpu.vector_store %arg21[%c8_38, %c0_39], %119 {strides = array<i32>} : memref<16x32xf32, #tpu.memory_space<vmem>>, vector<8x8xf32>,
    %121 = vector.extract_strided_slice %30 {offsets = [8, 8], sizes = [8, 8], strides = [1, 1]} : vector<16x96xbf16> to vector<8x8xbf16>
    %122 = vector.extract_strided_slice %30 {offsets = [8, 40], sizes = [8, 8], strides = [1, 1]} : vector<16x96xbf16> to vector<8x8xbf16>
    %123 = vector.extract_strided_slice %30 {offsets = [8, 72], sizes = [8, 8], strides = [1, 1]} : vector<16x96xbf16> to vector<8x8xbf16>
    %cst_40 = arith.constant dense<0.000000e+00> : vector<8x8xf32>
    %124 = tpu.matmul %121, %122, %cst_40 {dimension_numbers = #tpu.dot_dimension_numbers<[1], [1], [0], [0], [0, 0, 1, 0], [], []>} : vector<8x8xbf16>, vector<8x8xbf16>, vector<8x8xf32> -> vector<8x8xf32>
    %125 = arith.addf %124, %20 : vector<8x8xf32>
    %cst_41 = arith.constant dense<0xFF800000> : vector<8xf32>
    %126 = vector.multi_reduction <maximumf>, %125, %cst_41 [1] : vector<8x8xf32> to vector<8xf32>
    %127 = vector.shape_cast %126 : vector<8xf32> to vector<8x1xf32>
    %128 = vector.broadcast %127 : vector<8x1xf32> to vector<8x8xf32>
    %129 = arith.subf %125, %128 : vector<8x8xf32>
    %130 = math.exp %129 : vector<8x8xf32>
    %cst_42 = arith.constant dense<0.000000e+00> : vector<8xf32>
    %131 = vector.multi_reduction <add>, %130, %cst_42 [1] : vector<8x8xf32> to vector<8xf32>
    %132 = vector.shape_cast %131 : vector<8xf32> to vector<8x1xf32>
    %133 = tpu.reciprocal %132 {approx = true} : vector<8x1xf32> -> vector<8x1xf32>
    %134 = vector.broadcast %133 : vector<8x1xf32> to vector<8x8xf32>
    %135 = arith.mulf %130, %134 : vector<8x8xf32>
    %136 = arith.truncf %135 : vector<8x8xf32> to vector<8x8xbf16>
    %cst_43 = arith.constant dense<0.000000e+00> : vector<8x8xf32>
    %137 = tpu.matmul %136, %123, %cst_43 {dimension_numbers = #tpu.dot_dimension_numbers<[1], [0], [0], [1], [0, 0, 1, 1], [], []>} : vector<8x8xbf16>, vector<8x8xbf16>, vector<8x8xf32> -> vector<8x8xf32>
    %c8_44 = arith.constant 8 : index
    %c8_45 = arith.constant 8 : index
    %138 = vector.load %arg21[%c8_44, %c8_45] : memref<16x32xf32, #tpu.memory_space<vmem>>, vector<8x8xf32>
    tpu.vector_store %arg21[%c8_44, %c8_45], %137 {strides = array<i32>} : memref<16x32xf32, #tpu.memory_space<vmem>>, vector<8x8xf32>,
    %139 = vector.extract_strided_slice %30 {offsets = [8, 16], sizes = [8, 8], strides = [1, 1]} : vector<16x96xbf16> to vector<8x8xbf16>
    %140 = vector.extract_strided_slice %30 {offsets = [8, 48], sizes = [8, 8], strides = [1, 1]} : vector<16x96xbf16> to vector<8x8xbf16>
    %141 = vector.extract_strided_slice %30 {offsets = [8, 80], sizes = [8, 8], strides = [1, 1]} : vector<16x96xbf16> to vector<8x8xbf16>
    %cst_46 = arith.constant dense<0.000000e+00> : vector<8x8xf32>
    %142 = tpu.matmul %139, %140, %cst_46 {dimension_numbers = #tpu.dot_dimension_numbers<[1], [1], [0], [0], [0, 0, 1, 0], [], []>} : vector<8x8xbf16>, vector<8x8xbf16>, vector<8x8xf32> -> vector<8x8xf32>
    %143 = arith.addf %142, %20 : vector<8x8xf32>
    %cst_47 = arith.constant dense<0xFF800000> : vector<8xf32>
    %144 = vector.multi_reduction <maximumf>, %143, %cst_47 [1] : vector<8x8xf32> to vector<8xf32>
    %145 = vector.shape_cast %144 : vector<8xf32> to vector<8x1xf32>
    %146 = vector.broadcast %145 : vector<8x1xf32> to vector<8x8xf32>
    %147 = arith.subf %143, %146 : vector<8x8xf32>
    %148 = math.exp %147 : vector<8x8xf32>
    %cst_48 = arith.constant dense<0.000000e+00> : vector<8xf32>
    %149 = vector.multi_reduction <add>, %148, %cst_48 [1] : vector<8x8xf32> to vector<8xf32>
    %150 = vector.shape_cast %149 : vector<8xf32> to vector<8x1xf32>
    %151 = tpu.reciprocal %150 {approx = true} : vector<8x1xf32> -> vector<8x1xf32>
    %152 = vector.broadcast %151 : vector<8x1xf32> to vector<8x8xf32>
    %153 = arith.mulf %148, %152 : vector<8x8xf32>
    %154 = arith.truncf %153 : vector<8x8xf32> to vector<8x8xbf16>
    %cst_49 = arith.constant dense<0.000000e+00> : vector<8x8xf32>
    %155 = tpu.matmul %154, %141, %cst_49 {dimension_numbers = #tpu.dot_dimension_numbers<[1], [0], [0], [1], [0, 0, 1, 1], [], []>} : vector<8x8xbf16>, vector<8x8xbf16>, vector<8x8xf32> -> vector<8x8xf32>
    %c8_50 = arith.constant 8 : index
    %c16_51 = arith.constant 16 : index
    %156 = vector.load %arg21[%c8_50, %c16_51] : memref<16x32xf32, #tpu.memory_space<vmem>>, vector<8x8xf32>
    tpu.vector_store %arg21[%c8_50, %c16_51], %155 {strides = array<i32>} : memref<16x32xf32, #tpu.memory_space<vmem>>, vector<8x8xf32>,
    %157 = vector.extract_strided_slice %30 {offsets = [8, 24], sizes = [8, 8], strides = [1, 1]} : vector<16x96xbf16> to vector<8x8xbf16>
    %158 = vector.extract_strided_slice %30 {offsets = [8, 56], sizes = [8, 8], strides = [1, 1]} : vector<16x96xbf16> to vector<8x8xbf16>
    %159 = vector.extract_strided_slice %30 {offsets = [8, 88], sizes = [8, 8], strides = [1, 1]} : vector<16x96xbf16> to vector<8x8xbf16>
    %cst_52 = arith.constant dense<0.000000e+00> : vector<8x8xf32>
    %160 = tpu.matmul %157, %158, %cst_52 {dimension_numbers = #tpu.dot_dimension_numbers<[1], [1], [0], [0], [0, 0, 1, 0], [], []>} : vector<8x8xbf16>, vector<8x8xbf16>, vector<8x8xf32> -> vector<8x8xf32>
    %161 = arith.addf %160, %20 : vector<8x8xf32>
    %cst_53 = arith.constant dense<0xFF800000> : vector<8xf32>
    %162 = vector.multi_reduction <maximumf>, %161, %cst_53 [1] : vector<8x8xf32> to vector<8xf32>
    %163 = vector.shape_cast %162 : vector<8xf32> to vector<8x1xf32>
    %164 = vector.broadcast %163 : vector<8x1xf32> to vector<8x8xf32>
    %165 = arith.subf %161, %164 : vector<8x8xf32>
    %166 = math.exp %165 : vector<8x8xf32>
    %cst_54 = arith.constant dense<0.000000e+00> : vector<8xf32>
    %167 = vector.multi_reduction <add>, %166, %cst_54 [1] : vector<8x8xf32> to vector<8xf32>
    %168 = vector.shape_cast %167 : vector<8xf32> to vector<8x1xf32>
    %169 = tpu.reciprocal %168 {approx = true} : vector<8x1xf32> -> vector<8x1xf32>
    %170 = vector.broadcast %169 : vector<8x1xf32> to vector<8x8xf32>
    %171 = arith.mulf %166, %170 : vector<8x8xf32>
    %172 = arith.truncf %171 : vector<8x8xf32> to vector<8x8xbf16>
    %cst_55 = arith.constant dense<0.000000e+00> : vector<8x8xf32>
    %173 = tpu.matmul %172, %159, %cst_55 {dimension_numbers = #tpu.dot_dimension_numbers<[1], [0], [0], [1], [0, 0, 1, 1], [], []>} : vector<8x8xbf16>, vector<8x8xbf16>, vector<8x8xf32> -> vector<8x8xf32>
    %c8_56 = arith.constant 8 : index
    %c24_57 = arith.constant 24 : index
    %174 = vector.load %arg21[%c8_56, %c24_57] : memref<16x32xf32, #tpu.memory_space<vmem>>, vector<8x8xf32>
    tpu.vector_store %arg21[%c8_56, %c24_57], %173 {strides = array<i32>} : memref<16x32xf32, #tpu.memory_space<vmem>>, vector<8x8xf32>,
    %c0_58 = arith.constant 0 : index
    %c0_59 = arith.constant 0 : index
    %175 = vector.load %arg21[%c0_58, %c0_59] : memref<16x32xf32, #tpu.memory_space<vmem>>, vector<16x32xf32>
    %c0_60 = arith.constant 0 : index
    %c0_61 = arith.constant 0 : index
    %c0_62 = arith.constant 0 : index
    %176 = vector.load %arg6[%c0_60, %c0_61, %c0_62] : memref<2x32x32xf32, #tpu.memory_space<vmem>>, vector<1x32x32xf32>
    %177 = vector.shape_cast %176 : vector<1x32x32xf32> to vector<32x32xf32>
    %178 = arith.truncf %175 : vector<16x32xf32> to vector<16x32xbf16>
    %179 = arith.truncf %177 : vector<32x32xf32> to vector<32x32xbf16>
    %cst_63 = arith.constant dense<0.000000e+00> : vector<16x32xf32>
    %180 = tpu.matmul %178, %179, %cst_63 {dimension_numbers = #tpu.dot_dimension_numbers<[1], [0], [0], [1], [0, 0, 1, 1], [], []>} : vector<16x32xbf16>, vector<32x32xbf16>, vector<16x32xf32> -> vector<16x32xf32>
    %c0_64 = arith.constant 0 : index
    %c0_65 = arith.constant 0 : index
    %c0_66 = arith.constant 0 : index
    %181 = vector.load %arg7[%c0_64, %c0_65, %c0_66] : memref<2x1x32xf32, #tpu.memory_space<vmem>>, vector<1x1x32xf32>
    %182 = vector.shape_cast %181 : vector<1x1x32xf32> to vector<1x32xf32>
    %183 = vector.broadcast %182 : vector<1x32xf32> to vector<16x32xf32>
    %184 = arith.addf %180, %183 : vector<16x32xf32>
    %185 = arith.addf %3, %184 : vector<16x32xf32>
    %c0_67 = arith.constant 0 : index
    %c0_68 = arith.constant 0 : index
    %c0_69 = arith.constant 0 : index
    %186 = vector.load %arg8[%c0_67, %c0_68, %c0_69] : memref<2x1x32xf32, #tpu.memory_space<vmem>>, vector<1x1x32xf32>
    %187 = vector.shape_cast %186 : vector<1x1x32xf32> to vector<1x32xf32>
    %c0_70 = arith.constant 0 : index
    %c0_71 = arith.constant 0 : index
    %c0_72 = arith.constant 0 : index
    %188 = vector.load %arg9[%c0_70, %c0_71, %c0_72] : memref<2x1x32xf32, #tpu.memory_space<vmem>>, vector<1x1x32xf32>
    %189 = vector.shape_cast %188 : vector<1x1x32xf32> to vector<1x32xf32>
    %cst_73 = arith.constant dense<0.000000e+00> : vector<16xf32>
    %190 = vector.multi_reduction <add>, %185, %cst_73 [1] : vector<16x32xf32> to vector<16xf32>
    %191 = vector.shape_cast %190 : vector<16xf32> to vector<16x1xf32>
    %cst_74 = arith.constant 3.200000e+01 : f32
    %192 = vector.broadcast %cst_74 : f32 to vector<16x1xf32>
    %193 = arith.divf %191, %192 : vector<16x1xf32>
    %194 = vector.broadcast %193 : vector<16x1xf32> to vector<16x32xf32>
    %195 = arith.subf %185, %194 : vector<16x32xf32>
    %196 = arith.mulf %195, %195 : vector<16x32xf32>
    %cst_75 = arith.constant dense<0.000000e+00> : vector<16xf32>
    %197 = vector.multi_reduction <add>, %196, %cst_75 [1] : vector<16x32xf32> to vector<16xf32>
    %198 = vector.shape_cast %197 : vector<16xf32> to vector<16x1xf32>
    %cst_76 = arith.constant 3.200000e+01 : f32
    %199 = vector.broadcast %cst_76 : f32 to vector<16x1xf32>
    %200 = arith.divf %198, %199 : vector<16x1xf32>
    %201 = vector.broadcast %193 : vector<16x1xf32> to vector<16x32xf32>
    %202 = arith.subf %185, %201 : vector<16x32xf32>
    %cst_77 = arith.constant 9.99999974E-6 : f32
    %203 = vector.broadcast %cst_77 : f32 to vector<16x1xf32>
    %204 = arith.addf %200, %203 : vector<16x1xf32>
    %205 = math.rsqrt %204 : vector<16x1xf32>
    %206 = vector.broadcast %205 : vector<16x1xf32> to vector<16x32xf32>
    %207 = arith.mulf %202, %206 : vector<16x32xf32>
    %208 = vector.broadcast %187 : vector<1x32xf32> to vector<16x32xf32>
    %209 = arith.mulf %207, %208 : vector<16x32xf32>
    %210 = vector.broadcast %189 : vector<1x32xf32> to vector<16x32xf32>
    %211 = arith.addf %209, %210 : vector<16x32xf32>
    %c0_78 = arith.constant 0 : index
    %c0_79 = arith.constant 0 : index
    %c0_80 = arith.constant 0 : index
    %212 = vector.load %arg10[%c0_78, %c0_79, %c0_80] : memref<2x32x128xf32, #tpu.memory_space<vmem>>, vector<1x32x128xf32>
    %213 = vector.shape_cast %212 : vector<1x32x128xf32> to vector<32x128xf32>
    %214 = arith.truncf %211 : vector<16x32xf32> to vector<16x32xbf16>
    %215 = arith.truncf %213 : vector<32x128xf32> to vector<32x128xbf16>
    %cst_81 = arith.constant dense<0.000000e+00> : vector<16x128xf32>
    %216 = tpu.matmul %214, %215, %cst_81 {dimension_numbers = #tpu.dot_dimension_numbers<[1], [0], [0], [1], [0, 0, 1, 1], [], []>} : vector<16x32xbf16>, vector<32x128xbf16>, vector<16x128xf32> -> vector<16x128xf32>
    %c0_82 = arith.constant 0 : index
    %c0_83 = arith.constant 0 : index
    %c0_84 = arith.constant 0 : index
    %217 = vector.load %arg11[%c0_82, %c0_83, %c0_84] : memref<2x1x128xf32, #tpu.memory_space<vmem>>, vector<1x1x128xf32>
    %218 = vector.shape_cast %217 : vector<1x1x128xf32> to vector<1x128xf32>
    %219 = vector.broadcast %218 : vector<1x128xf32> to vector<16x128xf32>
    %220 = arith.addf %216, %219 : vector<16x128xf32>
    %cst_85 = arith.constant 0.000000e+00 : f32
    %221 = vector.broadcast %cst_85 : f32 to vector<16x128xf32>
    %222 = arith.maximumf %220, %221 : vector<16x128xf32>
    %c0_86 = arith.constant 0 : index
    %c0_87 = arith.constant 0 : index
    %c0_88 = arith.constant 0 : index
    %223 = vector.load %arg12[%c0_86, %c0_87, %c0_88] : memref<2x128x32xf32, #tpu.memory_space<vmem>>, vector<1x128x32xf32>
    %224 = vector.shape_cast %223 : vector<1x128x32xf32> to vector<128x32xf32>
    %225 = arith.truncf %222 : vector<16x128xf32> to vector<16x128xbf16>
    %226 = arith.truncf %224 : vector<128x32xf32> to vector<128x32xbf16>
    %cst_89 = arith.constant dense<0.000000e+00> : vector<16x32xf32>
    %227 = tpu.matmul %225, %226, %cst_89 {dimension_numbers = #tpu.dot_dimension_numbers<[1], [0], [0], [1], [0, 0, 1, 1], [], []>} : vector<16x128xbf16>, vector<128x32xbf16>, vector<16x32xf32> -> vector<16x32xf32>
    %c0_90 = arith.constant 0 : index
    %c0_91 = arith.constant 0 : index
    %c0_92 = arith.constant 0 : index
    %228 = vector.load %arg13[%c0_90, %c0_91, %c0_92] : memref<2x1x32xf32, #tpu.memory_space<vmem>>, vector<1x1x32xf32>
    %229 = vector.shape_cast %228 : vector<1x1x32xf32> to vector<1x32xf32>
    %230 = vector.broadcast %229 : vector<1x32xf32> to vector<16x32xf32>
    %231 = arith.addf %227, %230 : vector<16x32xf32>
    %232 = arith.addf %211, %231 : vector<16x32xf32>
    %c0_93 = arith.constant 0 : index
    %c0_94 = arith.constant 0 : index
    %c0_95 = arith.constant 0 : index
    %233 = vector.load %arg14[%c0_93, %c0_94, %c0_95] : memref<2x1x32xf32, #tpu.memory_space<vmem>>, vector<1x1x32xf32>
    %234 = vector.shape_cast %233 : vector<1x1x32xf32> to vector<1x32xf32>
    %c0_96 = arith.constant 0 : index
    %c0_97 = arith.constant 0 : index
    %c0_98 = arith.constant 0 : index
    %235 = vector.load %arg15[%c0_96, %c0_97, %c0_98] : memref<2x1x32xf32, #tpu.memory_space<vmem>>, vector<1x1x32xf32>
    %236 = vector.shape_cast %235 : vector<1x1x32xf32> to vector<1x32xf32>
    %cst_99 = arith.constant dense<0.000000e+00> : vector<16xf32>
    %237 = vector.multi_reduction <add>, %232, %cst_99 [1] : vector<16x32xf32> to vector<16xf32>
    %238 = vector.shape_cast %237 : vector<16xf32> to vector<16x1xf32>
    %cst_100 = arith.constant 3.200000e+01 : f32
    %239 = vector.broadcast %cst_100 : f32 to vector<16x1xf32>
    %240 = arith.divf %238, %239 : vector<16x1xf32>
    %241 = vector.broadcast %240 : vector<16x1xf32> to vector<16x32xf32>
    %242 = arith.subf %232, %241 : vector<16x32xf32>
    %243 = arith.mulf %242, %242 : vector<16x32xf32>
    %cst_101 = arith.constant dense<0.000000e+00> : vector<16xf32>
    %244 = vector.multi_reduction <add>, %243, %cst_101 [1] : vector<16x32xf32> to vector<16xf32>
    %245 = vector.shape_cast %244 : vector<16xf32> to vector<16x1xf32>
    %cst_102 = arith.constant 3.200000e+01 : f32
    %246 = vector.broadcast %cst_102 : f32 to vector<16x1xf32>
    %247 = arith.divf %245, %246 : vector<16x1xf32>
    %248 = vector.broadcast %240 : vector<16x1xf32> to vector<16x32xf32>
    %249 = arith.subf %232, %248 : vector<16x32xf32>
    %cst_103 = arith.constant 9.99999974E-6 : f32
    %250 = vector.broadcast %cst_103 : f32 to vector<16x1xf32>
    %251 = arith.addf %247, %250 : vector<16x1xf32>
    %252 = math.rsqrt %251 : vector<16x1xf32>
    %253 = vector.broadcast %252 : vector<16x1xf32> to vector<16x32xf32>
    %254 = arith.mulf %249, %253 : vector<16x32xf32>
    %255 = vector.broadcast %234 : vector<1x32xf32> to vector<16x32xf32>
    %256 = arith.mulf %254, %255 : vector<16x32xf32>
    %257 = vector.broadcast %236 : vector<1x32xf32> to vector<16x32xf32>
    %258 = arith.addf %256, %257 : vector<16x32xf32>
    %c1 = arith.constant 1 : index
    %c0_104 = arith.constant 0 : index
    %c0_105 = arith.constant 0 : index
    %259 = vector.load %arg4[%c1, %c0_104, %c0_105] : memref<2x32x96xf32, #tpu.memory_space<vmem>>, vector<1x32x96xf32>
    %260 = vector.shape_cast %259 : vector<1x32x96xf32> to vector<32x96xf32>
    %261 = arith.truncf %258 : vector<16x32xf32> to vector<16x32xbf16>
    %262 = arith.truncf %260 : vector<32x96xf32> to vector<32x96xbf16>
    %cst_106 = arith.constant dense<0.000000e+00> : vector<16x96xf32>
    %263 = tpu.matmul %261, %262, %cst_106 {dimension_numbers = #tpu.dot_dimension_numbers<[1], [0], [0], [1], [0, 0, 1, 1], [], []>} : vector<16x32xbf16>, vector<32x96xbf16>, vector<16x96xf32> -> vector<16x96xf32>
    %c1_107 = arith.constant 1 : index
    %c0_108 = arith.constant 0 : index
    %c0_109 = arith.constant 0 : index
    %264 = vector.load %arg5[%c1_107, %c0_108, %c0_109] : memref<2x1x96xf32, #tpu.memory_space<vmem>>, vector<1x1x96xf32>
    %265 = vector.shape_cast %264 : vector<1x1x96xf32> to vector<1x96xf32>
    %266 = vector.broadcast %265 : vector<1x96xf32> to vector<16x96xf32>
    %267 = arith.addf %263, %266 : vector<16x96xf32>
    %268 = arith.truncf %267 : vector<16x96xf32> to vector<16x96xbf16>
    %269 = vector.extract_strided_slice %268 {offsets = [0, 0], sizes = [8, 8], strides = [1, 1]} : vector<16x96xbf16> to vector<8x8xbf16>
    %270 = vector.extract_strided_slice %268 {offsets = [0, 32], sizes = [8, 8], strides = [1, 1]} : vector<16x96xbf16> to vector<8x8xbf16>
    %271 = vector.extract_strided_slice %268 {offsets = [0, 64], sizes = [8, 8], strides = [1, 1]} : vector<16x96xbf16> to vector<8x8xbf16>
    %cst_110 = arith.constant dense<0.000000e+00> : vector<8x8xf32>
    %272 = tpu.matmul %269, %270, %cst_110 {dimension_numbers = #tpu.dot_dimension_numbers<[1], [1], [0], [0], [0, 0, 1, 0], [], []>} : vector<8x8xbf16>, vector<8x8xbf16>, vector<8x8xf32> -> vector<8x8xf32>
    %273 = arith.addf %272, %12 : vector<8x8xf32>
    %cst_111 = arith.constant dense<0xFF800000> : vector<8xf32>
    %274 = vector.multi_reduction <maximumf>, %273, %cst_111 [1] : vector<8x8xf32> to vector<8xf32>
    %275 = vector.shape_cast %274 : vector<8xf32> to vector<8x1xf32>
    %276 = vector.broadcast %275 : vector<8x1xf32> to vector<8x8xf32>
    %277 = arith.subf %273, %276 : vector<8x8xf32>
    %278 = math.exp %277 : vector<8x8xf32>
    %cst_112 = arith.constant dense<0.000000e+00> : vector<8xf32>
    %279 = vector.multi_reduction <add>, %278, %cst_112 [1] : vector<8x8xf32> to vector<8xf32>
    %280 = vector.shape_cast %279 : vector<8xf32> to vector<8x1xf32>
    %281 = tpu.reciprocal %280 {approx = true} : vector<8x1xf32> -> vector<8x1xf32>
    %282 = vector.broadcast %281 : vector<8x1xf32> to vector<8x8xf32>
    %283 = arith.mulf %278, %282 : vector<8x8xf32>
    %284 = arith.truncf %283 : vector<8x8xf32> to vector<8x8xbf16>
    %cst_113 = arith.constant dense<0.000000e+00> : vector<8x8xf32>
    %285 = tpu.matmul %284, %271, %cst_113 {dimension_numbers = #tpu.dot_dimension_numbers<[1], [0], [0], [1], [0, 0, 1, 1], [], []>} : vector<8x8xbf16>, vector<8x8xbf16>, vector<8x8xf32> -> vector<8x8xf32>
    %c0_114 = arith.constant 0 : index
    %c0_115 = arith.constant 0 : index
    %286 = vector.load %arg21[%c0_114, %c0_115] : memref<16x32xf32, #tpu.memory_space<vmem>>, vector<8x8xf32>
    tpu.vector_store %arg21[%c0_114, %c0_115], %285 {strides = array<i32>} : memref<16x32xf32, #tpu.memory_space<vmem>>, vector<8x8xf32>,
    %287 = vector.extract_strided_slice %268 {offsets = [0, 8], sizes = [8, 8], strides = [1, 1]} : vector<16x96xbf16> to vector<8x8xbf16>
    %288 = vector.extract_strided_slice %268 {offsets = [0, 40], sizes = [8, 8], strides = [1, 1]} : vector<16x96xbf16> to vector<8x8xbf16>
    %289 = vector.extract_strided_slice %268 {offsets = [0, 72], sizes = [8, 8], strides = [1, 1]} : vector<16x96xbf16> to vector<8x8xbf16>
    %cst_116 = arith.constant dense<0.000000e+00> : vector<8x8xf32>
    %290 = tpu.matmul %287, %288, %cst_116 {dimension_numbers = #tpu.dot_dimension_numbers<[1], [1], [0], [0], [0, 0, 1, 0], [], []>} : vector<8x8xbf16>, vector<8x8xbf16>, vector<8x8xf32> -> vector<8x8xf32>
    %291 = arith.addf %290, %12 : vector<8x8xf32>
    %cst_117 = arith.constant dense<0xFF800000> : vector<8xf32>
    %292 = vector.multi_reduction <maximumf>, %291, %cst_117 [1] : vector<8x8xf32> to vector<8xf32>
    %293 = vector.shape_cast %292 : vector<8xf32> to vector<8x1xf32>
    %294 = vector.broadcast %293 : vector<8x1xf32> to vector<8x8xf32>
    %295 = arith.subf %291, %294 : vector<8x8xf32>
    %296 = math.exp %295 : vector<8x8xf32>
    %cst_118 = arith.constant dense<0.000000e+00> : vector<8xf32>
    %297 = vector.multi_reduction <add>, %296, %cst_118 [1] : vector<8x8xf32> to vector<8xf32>
    %298 = vector.shape_cast %297 : vector<8xf32> to vector<8x1xf32>
    %299 = tpu.reciprocal %298 {approx = true} : vector<8x1xf32> -> vector<8x1xf32>
    %300 = vector.broadcast %299 : vector<8x1xf32> to vector<8x8xf32>
    %301 = arith.mulf %296, %300 : vector<8x8xf32>
    %302 = arith.truncf %301 : vector<8x8xf32> to vector<8x8xbf16>
    %cst_119 = arith.constant dense<0.000000e+00> : vector<8x8xf32>
    %303 = tpu.matmul %302, %289, %cst_119 {dimension_numbers = #tpu.dot_dimension_numbers<[1], [0], [0], [1], [0, 0, 1, 1], [], []>} : vector<8x8xbf16>, vector<8x8xbf16>, vector<8x8xf32> -> vector<8x8xf32>
    %c0_120 = arith.constant 0 : index
    %c8_121 = arith.constant 8 : index
    %304 = vector.load %arg21[%c0_120, %c8_121] : memref<16x32xf32, #tpu.memory_space<vmem>>, vector<8x8xf32>
    tpu.vector_store %arg21[%c0_120, %c8_121], %303 {strides = array<i32>} : memref<16x32xf32, #tpu.memory_space<vmem>>, vector<8x8xf32>,
    %305 = vector.extract_strided_slice %268 {offsets = [0, 16], sizes = [8, 8], strides = [1, 1]} : vector<16x96xbf16> to vector<8x8xbf16>
    %306 = vector.extract_strided_slice %268 {offsets = [0, 48], sizes = [8, 8], strides = [1, 1]} : vector<16x96xbf16> to vector<8x8xbf16>
    %307 = vector.extract_strided_slice %268 {offsets = [0, 80], sizes = [8, 8], strides = [1, 1]} : vector<16x96xbf16> to vector<8x8xbf16>
    %cst_122 = arith.constant dense<0.000000e+00> : vector<8x8xf32>
    %308 = tpu.matmul %305, %306, %cst_122 {dimension_numbers = #tpu.dot_dimension_numbers<[1], [1], [0], [0], [0, 0, 1, 0], [], []>} : vector<8x8xbf16>, vector<8x8xbf16>, vector<8x8xf32> -> vector<8x8xf32>
    %309 = arith.addf %308, %12 : vector<8x8xf32>
    %cst_123 = arith.constant dense<0xFF800000> : vector<8xf32>
    %310 = vector.multi_reduction <maximumf>, %309, %cst_123 [1] : vector<8x8xf32> to vector<8xf32>
    %311 = vector.shape_cast %310 : vector<8xf32> to vector<8x1xf32>
    %312 = vector.broadcast %311 : vector<8x1xf32> to vector<8x8xf32>
    %313 = arith.subf %309, %312 : vector<8x8xf32>
    %314 = math.exp %313 : vector<8x8xf32>
    %cst_124 = arith.constant dense<0.000000e+00> : vector<8xf32>
    %315 = vector.multi_reduction <add>, %314, %cst_124 [1] : vector<8x8xf32> to vector<8xf32>
    %316 = vector.shape_cast %315 : vector<8xf32> to vector<8x1xf32>
    %317 = tpu.reciprocal %316 {approx = true} : vector<8x1xf32> -> vector<8x1xf32>
    %318 = vector.broadcast %317 : vector<8x1xf32> to vector<8x8xf32>
    %319 = arith.mulf %314, %318 : vector<8x8xf32>
    %320 = arith.truncf %319 : vector<8x8xf32> to vector<8x8xbf16>
    %cst_125 = arith.constant dense<0.000000e+00> : vector<8x8xf32>
    %321 = tpu.matmul %320, %307, %cst_125 {dimension_numbers = #tpu.dot_dimension_numbers<[1], [0], [0], [1], [0, 0, 1, 1], [], []>} : vector<8x8xbf16>, vector<8x8xbf16>, vector<8x8xf32> -> vector<8x8xf32>
    %c0_126 = arith.constant 0 : index
    %c16_127 = arith.constant 16 : index
    %322 = vector.load %arg21[%c0_126, %c16_127] : memref<16x32xf32, #tpu.memory_space<vmem>>, vector<8x8xf32>
    tpu.vector_store %arg21[%c0_126, %c16_127], %321 {strides = array<i32>} : memref<16x32xf32, #tpu.memory_space<vmem>>, vector<8x8xf32>,
    %323 = vector.extract_strided_slice %268 {offsets = [0, 24], sizes = [8, 8], strides = [1, 1]} : vector<16x96xbf16> to vector<8x8xbf16>
    %324 = vector.extract_strided_slice %268 {offsets = [0, 56], sizes = [8, 8], strides = [1, 1]} : vector<16x96xbf16> to vector<8x8xbf16>
    %325 = vector.extract_strided_slice %268 {offsets = [0, 88], sizes = [8, 8], strides = [1, 1]} : vector<16x96xbf16> to vector<8x8xbf16>
    %cst_128 = arith.constant dense<0.000000e+00> : vector<8x8xf32>
    %326 = tpu.matmul %323, %324, %cst_128 {dimension_numbers = #tpu.dot_dimension_numbers<[1], [1], [0], [0], [0, 0, 1, 0], [], []>} : vector<8x8xbf16>, vector<8x8xbf16>, vector<8x8xf32> -> vector<8x8xf32>
    %327 = arith.addf %326, %12 : vector<8x8xf32>
    %cst_129 = arith.constant dense<0xFF800000> : vector<8xf32>
    %328 = vector.multi_reduction <maximumf>, %327, %cst_129 [1] : vector<8x8xf32> to vector<8xf32>
    %329 = vector.shape_cast %328 : vector<8xf32> to vector<8x1xf32>
    %330 = vector.broadcast %329 : vector<8x1xf32> to vector<8x8xf32>
    %331 = arith.subf %327, %330 : vector<8x8xf32>
    %332 = math.exp %331 : vector<8x8xf32>
    %cst_130 = arith.constant dense<0.000000e+00> : vector<8xf32>
    %333 = vector.multi_reduction <add>, %332, %cst_130 [1] : vector<8x8xf32> to vector<8xf32>
    %334 = vector.shape_cast %333 : vector<8xf32> to vector<8x1xf32>
    %335 = tpu.reciprocal %334 {approx = true} : vector<8x1xf32> -> vector<8x1xf32>
    %336 = vector.broadcast %335 : vector<8x1xf32> to vector<8x8xf32>
    %337 = arith.mulf %332, %336 : vector<8x8xf32>
    %338 = arith.truncf %337 : vector<8x8xf32> to vector<8x8xbf16>
    %cst_131 = arith.constant dense<0.000000e+00> : vector<8x8xf32>
    %339 = tpu.matmul %338, %325, %cst_131 {dimension_numbers = #tpu.dot_dimension_numbers<[1], [0], [0], [1], [0, 0, 1, 1], [], []>} : vector<8x8xbf16>, vector<8x8xbf16>, vector<8x8xf32> -> vector<8x8xf32>
    %c0_132 = arith.constant 0 : index
    %c24_133 = arith.constant 24 : index
    %340 = vector.load %arg21[%c0_132, %c24_133] : memref<16x32xf32, #tpu.memory_space<vmem>>, vector<8x8xf32>
    tpu.vector_store %arg21[%c0_132, %c24_133], %339 {strides = array<i32>} : memref<16x32xf32, #tpu.memory_space<vmem>>, vector<8x8xf32>,
    %341 = vector.extract_strided_slice %268 {offsets = [8, 0], sizes = [8, 8], strides = [1, 1]} : vector<16x96xbf16> to vector<8x8xbf16>
    %342 = vector.extract_strided_slice %268 {offsets = [8, 32], sizes = [8, 8], strides = [1, 1]} : vector<16x96xbf16> to vector<8x8xbf16>
    %343 = vector.extract_strided_slice %268 {offsets = [8, 64], sizes = [8, 8], strides = [1, 1]} : vector<16x96xbf16> to vector<8x8xbf16>
    %cst_134 = arith.constant dense<0.000000e+00> : vector<8x8xf32>
    %344 = tpu.matmul %341, %342, %cst_134 {dimension_numbers = #tpu.dot_dimension_numbers<[1], [1], [0], [0], [0, 0, 1, 0], [], []>} : vector<8x8xbf16>, vector<8x8xbf16>, vector<8x8xf32> -> vector<8x8xf32>
    %345 = arith.addf %344, %20 : vector<8x8xf32>
    %cst_135 = arith.constant dense<0xFF800000> : vector<8xf32>
    %346 = vector.multi_reduction <maximumf>, %345, %cst_135 [1] : vector<8x8xf32> to vector<8xf32>
    %347 = vector.shape_cast %346 : vector<8xf32> to vector<8x1xf32>
    %348 = vector.broadcast %347 : vector<8x1xf32> to vector<8x8xf32>
    %349 = arith.subf %345, %348 : vector<8x8xf32>
    %350 = math.exp %349 : vector<8x8xf32>
    %cst_136 = arith.constant dense<0.000000e+00> : vector<8xf32>
    %351 = vector.multi_reduction <add>, %350, %cst_136 [1] : vector<8x8xf32> to vector<8xf32>
    %352 = vector.shape_cast %351 : vector<8xf32> to vector<8x1xf32>
    %353 = tpu.reciprocal %352 {approx = true} : vector<8x1xf32> -> vector<8x1xf32>
    %354 = vector.broadcast %353 : vector<8x1xf32> to vector<8x8xf32>
    %355 = arith.mulf %350, %354 : vector<8x8xf32>
    %356 = arith.truncf %355 : vector<8x8xf32> to vector<8x8xbf16>
    %cst_137 = arith.constant dense<0.000000e+00> : vector<8x8xf32>
    %357 = tpu.matmul %356, %343, %cst_137 {dimension_numbers = #tpu.dot_dimension_numbers<[1], [0], [0], [1], [0, 0, 1, 1], [], []>} : vector<8x8xbf16>, vector<8x8xbf16>, vector<8x8xf32> -> vector<8x8xf32>
    %c8_138 = arith.constant 8 : index
    %c0_139 = arith.constant 0 : index
    %358 = vector.load %arg21[%c8_138, %c0_139] : memref<16x32xf32, #tpu.memory_space<vmem>>, vector<8x8xf32>
    tpu.vector_store %arg21[%c8_138, %c0_139], %357 {strides = array<i32>} : memref<16x32xf32, #tpu.memory_space<vmem>>, vector<8x8xf32>,
    %359 = vector.extract_strided_slice %268 {offsets = [8, 8], sizes = [8, 8], strides = [1, 1]} : vector<16x96xbf16> to vector<8x8xbf16>
    %360 = vector.extract_strided_slice %268 {offsets = [8, 40], sizes = [8, 8], strides = [1, 1]} : vector<16x96xbf16> to vector<8x8xbf16>
    %361 = vector.extract_strided_slice %268 {offsets = [8, 72], sizes = [8, 8], strides = [1, 1]} : vector<16x96xbf16> to vector<8x8xbf16>
    %cst_140 = arith.constant dense<0.000000e+00> : vector<8x8xf32>
    %362 = tpu.matmul %359, %360, %cst_140 {dimension_numbers = #tpu.dot_dimension_numbers<[1], [1], [0], [0], [0, 0, 1, 0], [], []>} : vector<8x8xbf16>, vector<8x8xbf16>, vector<8x8xf32> -> vector<8x8xf32>
    %363 = arith.addf %362, %20 : vector<8x8xf32>
    %cst_141 = arith.constant dense<0xFF800000> : vector<8xf32>
    %364 = vector.multi_reduction <maximumf>, %363, %cst_141 [1] : vector<8x8xf32> to vector<8xf32>
    %365 = vector.shape_cast %364 : vector<8xf32> to vector<8x1xf32>
    %366 = vector.broadcast %365 : vector<8x1xf32> to vector<8x8xf32>
    %367 = arith.subf %363, %366 : vector<8x8xf32>
    %368 = math.exp %367 : vector<8x8xf32>
    %cst_142 = arith.constant dense<0.000000e+00> : vector<8xf32>
    %369 = vector.multi_reduction <add>, %368, %cst_142 [1] : vector<8x8xf32> to vector<8xf32>
    %370 = vector.shape_cast %369 : vector<8xf32> to vector<8x1xf32>
    %371 = tpu.reciprocal %370 {approx = true} : vector<8x1xf32> -> vector<8x1xf32>
    %372 = vector.broadcast %371 : vector<8x1xf32> to vector<8x8xf32>
    %373 = arith.mulf %368, %372 : vector<8x8xf32>
    %374 = arith.truncf %373 : vector<8x8xf32> to vector<8x8xbf16>
    %cst_143 = arith.constant dense<0.000000e+00> : vector<8x8xf32>
    %375 = tpu.matmul %374, %361, %cst_143 {dimension_numbers = #tpu.dot_dimension_numbers<[1], [0], [0], [1], [0, 0, 1, 1], [], []>} : vector<8x8xbf16>, vector<8x8xbf16>, vector<8x8xf32> -> vector<8x8xf32>
    %c8_144 = arith.constant 8 : index
    %c8_145 = arith.constant 8 : index
    %376 = vector.load %arg21[%c8_144, %c8_145] : memref<16x32xf32, #tpu.memory_space<vmem>>, vector<8x8xf32>
    tpu.vector_store %arg21[%c8_144, %c8_145], %375 {strides = array<i32>} : memref<16x32xf32, #tpu.memory_space<vmem>>, vector<8x8xf32>,
    %377 = vector.extract_strided_slice %268 {offsets = [8, 16], sizes = [8, 8], strides = [1, 1]} : vector<16x96xbf16> to vector<8x8xbf16>
    %378 = vector.extract_strided_slice %268 {offsets = [8, 48], sizes = [8, 8], strides = [1, 1]} : vector<16x96xbf16> to vector<8x8xbf16>
    %379 = vector.extract_strided_slice %268 {offsets = [8, 80], sizes = [8, 8], strides = [1, 1]} : vector<16x96xbf16> to vector<8x8xbf16>
    %cst_146 = arith.constant dense<0.000000e+00> : vector<8x8xf32>
    %380 = tpu.matmul %377, %378, %cst_146 {dimension_numbers = #tpu.dot_dimension_numbers<[1], [1], [0], [0], [0, 0, 1, 0], [], []>} : vector<8x8xbf16>, vector<8x8xbf16>, vector<8x8xf32> -> vector<8x8xf32>
    %381 = arith.addf %380, %20 : vector<8x8xf32>
    %cst_147 = arith.constant dense<0xFF800000> : vector<8xf32>
    %382 = vector.multi_reduction <maximumf>, %381, %cst_147 [1] : vector<8x8xf32> to vector<8xf32>
    %383 = vector.shape_cast %382 : vector<8xf32> to vector<8x1xf32>
    %384 = vector.broadcast %383 : vector<8x1xf32> to vector<8x8xf32>
    %385 = arith.subf %381, %384 : vector<8x8xf32>
    %386 = math.exp %385 : vector<8x8xf32>
    %cst_148 = arith.constant dense<0.000000e+00> : vector<8xf32>
    %387 = vector.multi_reduction <add>, %386, %cst_148 [1] : vector<8x8xf32> to vector<8xf32>
    %388 = vector.shape_cast %387 : vector<8xf32> to vector<8x1xf32>
    %389 = tpu.reciprocal %388 {approx = true} : vector<8x1xf32> -> vector<8x1xf32>
    %390 = vector.broadcast %389 : vector<8x1xf32> to vector<8x8xf32>
    %391 = arith.mulf %386, %390 : vector<8x8xf32>
    %392 = arith.truncf %391 : vector<8x8xf32> to vector<8x8xbf16>
    %cst_149 = arith.constant dense<0.000000e+00> : vector<8x8xf32>
    %393 = tpu.matmul %392, %379, %cst_149 {dimension_numbers = #tpu.dot_dimension_numbers<[1], [0], [0], [1], [0, 0, 1, 1], [], []>} : vector<8x8xbf16>, vector<8x8xbf16>, vector<8x8xf32> -> vector<8x8xf32>
    %c8_150 = arith.constant 8 : index
    %c16_151 = arith.constant 16 : index
    %394 = vector.load %arg21[%c8_150, %c16_151] : memref<16x32xf32, #tpu.memory_space<vmem>>, vector<8x8xf32>
    tpu.vector_store %arg21[%c8_150, %c16_151], %393 {strides = array<i32>} : memref<16x32xf32, #tpu.memory_space<vmem>>, vector<8x8xf32>,
    %395 = vector.extract_strided_slice %268 {offsets = [8, 24], sizes = [8, 8], strides = [1, 1]} : vector<16x96xbf16> to vector<8x8xbf16>
    %396 = vector.extract_strided_slice %268 {offsets = [8, 56], sizes = [8, 8], strides = [1, 1]} : vector<16x96xbf16> to vector<8x8xbf16>
    %397 = vector.extract_strided_slice %268 {offsets = [8, 88], sizes = [8, 8], strides = [1, 1]} : vector<16x96xbf16> to vector<8x8xbf16>
    %cst_152 = arith.constant dense<0.000000e+00> : vector<8x8xf32>
    %398 = tpu.matmul %395, %396, %cst_152 {dimension_numbers = #tpu.dot_dimension_numbers<[1], [1], [0], [0], [0, 0, 1, 0], [], []>} : vector<8x8xbf16>, vector<8x8xbf16>, vector<8x8xf32> -> vector<8x8xf32>
    %399 = arith.addf %398, %20 : vector<8x8xf32>
    %cst_153 = arith.constant dense<0xFF800000> : vector<8xf32>
    %400 = vector.multi_reduction <maximumf>, %399, %cst_153 [1] : vector<8x8xf32> to vector<8xf32>
    %401 = vector.shape_cast %400 : vector<8xf32> to vector<8x1xf32>
    %402 = vector.broadcast %401 : vector<8x1xf32> to vector<8x8xf32>
    %403 = arith.subf %399, %402 : vector<8x8xf32>
    %404 = math.exp %403 : vector<8x8xf32>
    %cst_154 = arith.constant dense<0.000000e+00> : vector<8xf32>
    %405 = vector.multi_reduction <add>, %404, %cst_154 [1] : vector<8x8xf32> to vector<8xf32>
    %406 = vector.shape_cast %405 : vector<8xf32> to vector<8x1xf32>
    %407 = tpu.reciprocal %406 {approx = true} : vector<8x1xf32> -> vector<8x1xf32>
    %408 = vector.broadcast %407 : vector<8x1xf32> to vector<8x8xf32>
    %409 = arith.mulf %404, %408 : vector<8x8xf32>
    %410 = arith.truncf %409 : vector<8x8xf32> to vector<8x8xbf16>
    %cst_155 = arith.constant dense<0.000000e+00> : vector<8x8xf32>
    %411 = tpu.matmul %410, %397, %cst_155 {dimension_numbers = #tpu.dot_dimension_numbers<[1], [0], [0], [1], [0, 0, 1, 1], [], []>} : vector<8x8xbf16>, vector<8x8xbf16>, vector<8x8xf32> -> vector<8x8xf32>
    %c8_156 = arith.constant 8 : index
    %c24_157 = arith.constant 24 : index
    %412 = vector.load %arg21[%c8_156, %c24_157] : memref<16x32xf32, #tpu.memory_space<vmem>>, vector<8x8xf32>
    tpu.vector_store %arg21[%c8_156, %c24_157], %411 {strides = array<i32>} : memref<16x32xf32, #tpu.memory_space<vmem>>, vector<8x8xf32>,
    %c0_158 = arith.constant 0 : index
    %c0_159 = arith.constant 0 : index
    %413 = vector.load %arg21[%c0_158, %c0_159] : memref<16x32xf32, #tpu.memory_space<vmem>>, vector<16x32xf32>
    %c1_160 = arith.constant 1 : index
    %c0_161 = arith.constant 0 : index
    %c0_162 = arith.constant 0 : index
    %414 = vector.load %arg6[%c1_160, %c0_161, %c0_162] : memref<2x32x32xf32, #tpu.memory_space<vmem>>, vector<1x32x32xf32>
    %415 = vector.shape_cast %414 : vector<1x32x32xf32> to vector<32x32xf32>
    %416 = arith.truncf %413 : vector<16x32xf32> to vector<16x32xbf16>
    %417 = arith.truncf %415 : vector<32x32xf32> to vector<32x32xbf16>
    %cst_163 = arith.constant dense<0.000000e+00> : vector<16x32xf32>
    %418 = tpu.matmul %416, %417, %cst_163 {dimension_numbers = #tpu.dot_dimension_numbers<[1], [0], [0], [1], [0, 0, 1, 1], [], []>} : vector<16x32xbf16>, vector<32x32xbf16>, vector<16x32xf32> -> vector<16x32xf32>
    %c1_164 = arith.constant 1 : index
    %c0_165 = arith.constant 0 : index
    %c0_166 = arith.constant 0 : index
    %419 = vector.load %arg7[%c1_164, %c0_165, %c0_166] : memref<2x1x32xf32, #tpu.memory_space<vmem>>, vector<1x1x32xf32>
    %420 = vector.shape_cast %419 : vector<1x1x32xf32> to vector<1x32xf32>
    %421 = vector.broadcast %420 : vector<1x32xf32> to vector<16x32xf32>
    %422 = arith.addf %418, %421 : vector<16x32xf32>
    %423 = arith.addf %258, %422 : vector<16x32xf32>
    %c1_167 = arith.constant 1 : index
    %c0_168 = arith.constant 0 : index
    %c0_169 = arith.constant 0 : index
    %424 = vector.load %arg8[%c1_167, %c0_168, %c0_169] : memref<2x1x32xf32, #tpu.memory_space<vmem>>, vector<1x1x32xf32>
    %425 = vector.shape_cast %424 : vector<1x1x32xf32> to vector<1x32xf32>
    %c1_170 = arith.constant 1 : index
    %c0_171 = arith.constant 0 : index
    %c0_172 = arith.constant 0 : index
    %426 = vector.load %arg9[%c1_170, %c0_171, %c0_172] : memref<2x1x32xf32, #tpu.memory_space<vmem>>, vector<1x1x32xf32>
    %427 = vector.shape_cast %426 : vector<1x1x32xf32> to vector<1x32xf32>
    %cst_173 = arith.constant dense<0.000000e+00> : vector<16xf32>
    %428 = vector.multi_reduction <add>, %423, %cst_173 [1] : vector<16x32xf32> to vector<16xf32>
    %429 = vector.shape_cast %428 : vector<16xf32> to vector<16x1xf32>
    %cst_174 = arith.constant 3.200000e+01 : f32
    %430 = vector.broadcast %cst_174 : f32 to vector<16x1xf32>
    %431 = arith.divf %429, %430 : vector<16x1xf32>
    %432 = vector.broadcast %431 : vector<16x1xf32> to vector<16x32xf32>
    %433 = arith.subf %423, %432 : vector<16x32xf32>
    %434 = arith.mulf %433, %433 : vector<16x32xf32>
    %cst_175 = arith.constant dense<0.000000e+00> : vector<16xf32>
    %435 = vector.multi_reduction <add>, %434, %cst_175 [1] : vector<16x32xf32> to vector<16xf32>
    %436 = vector.shape_cast %435 : vector<16xf32> to vector<16x1xf32>
    %cst_176 = arith.constant 3.200000e+01 : f32
    %437 = vector.broadcast %cst_176 : f32 to vector<16x1xf32>
    %438 = arith.divf %436, %437 : vector<16x1xf32>
    %439 = vector.broadcast %431 : vector<16x1xf32> to vector<16x32xf32>
    %440 = arith.subf %423, %439 : vector<16x32xf32>
    %cst_177 = arith.constant 9.99999974E-6 : f32
    %441 = vector.broadcast %cst_177 : f32 to vector<16x1xf32>
    %442 = arith.addf %438, %441 : vector<16x1xf32>
    %443 = math.rsqrt %442 : vector<16x1xf32>
    %444 = vector.broadcast %443 : vector<16x1xf32> to vector<16x32xf32>
    %445 = arith.mulf %440, %444 : vector<16x32xf32>
    %446 = vector.broadcast %425 : vector<1x32xf32> to vector<16x32xf32>
    %447 = arith.mulf %445, %446 : vector<16x32xf32>
    %448 = vector.broadcast %427 : vector<1x32xf32> to vector<16x32xf32>
    %449 = arith.addf %447, %448 : vector<16x32xf32>
    %c1_178 = arith.constant 1 : index
    %c0_179 = arith.constant 0 : index
    %c0_180 = arith.constant 0 : index
    %450 = vector.load %arg10[%c1_178, %c0_179, %c0_180] : memref<2x32x128xf32, #tpu.memory_space<vmem>>, vector<1x32x128xf32>
    %451 = vector.shape_cast %450 : vector<1x32x128xf32> to vector<32x128xf32>
    %452 = arith.truncf %449 : vector<16x32xf32> to vector<16x32xbf16>
    %453 = arith.truncf %451 : vector<32x128xf32> to vector<32x128xbf16>
    %cst_181 = arith.constant dense<0.000000e+00> : vector<16x128xf32>
    %454 = tpu.matmul %452, %453, %cst_181 {dimension_numbers = #tpu.dot_dimension_numbers<[1], [0], [0], [1], [0, 0, 1, 1], [], []>} : vector<16x32xbf16>, vector<32x128xbf16>, vector<16x128xf32> -> vector<16x128xf32>
    %c1_182 = arith.constant 1 : index
    %c0_183 = arith.constant 0 : index
    %c0_184 = arith.constant 0 : index
    %455 = vector.load %arg11[%c1_182, %c0_183, %c0_184] : memref<2x1x128xf32, #tpu.memory_space<vmem>>, vector<1x1x128xf32>
    %456 = vector.shape_cast %455 : vector<1x1x128xf32> to vector<1x128xf32>
    %457 = vector.broadcast %456 : vector<1x128xf32> to vector<16x128xf32>
    %458 = arith.addf %454, %457 : vector<16x128xf32>
    %cst_185 = arith.constant 0.000000e+00 : f32
    %459 = vector.broadcast %cst_185 : f32 to vector<16x128xf32>
    %460 = arith.maximumf %458, %459 : vector<16x128xf32>
    %c1_186 = arith.constant 1 : index
    %c0_187 = arith.constant 0 : index
    %c0_188 = arith.constant 0 : index
    %461 = vector.load %arg12[%c1_186, %c0_187, %c0_188] : memref<2x128x32xf32, #tpu.memory_space<vmem>>, vector<1x128x32xf32>
    %462 = vector.shape_cast %461 : vector<1x128x32xf32> to vector<128x32xf32>
    %463 = arith.truncf %460 : vector<16x128xf32> to vector<16x128xbf16>
    %464 = arith.truncf %462 : vector<128x32xf32> to vector<128x32xbf16>
    %cst_189 = arith.constant dense<0.000000e+00> : vector<16x32xf32>
    %465 = tpu.matmul %463, %464, %cst_189 {dimension_numbers = #tpu.dot_dimension_numbers<[1], [0], [0], [1], [0, 0, 1, 1], [], []>} : vector<16x128xbf16>, vector<128x32xbf16>, vector<16x32xf32> -> vector<16x32xf32>
    %c1_190 = arith.constant 1 : index
    %c0_191 = arith.constant 0 : index
    %c0_192 = arith.constant 0 : index
    %466 = vector.load %arg13[%c1_190, %c0_191, %c0_192] : memref<2x1x32xf32, #tpu.memory_space<vmem>>, vector<1x1x32xf32>
    %467 = vector.shape_cast %466 : vector<1x1x32xf32> to vector<1x32xf32>
    %468 = vector.broadcast %467 : vector<1x32xf32> to vector<16x32xf32>
    %469 = arith.addf %465, %468 : vector<16x32xf32>
    %470 = arith.addf %449, %469 : vector<16x32xf32>
    %c1_193 = arith.constant 1 : index
    %c0_194 = arith.constant 0 : index
    %c0_195 = arith.constant 0 : index
    %471 = vector.load %arg14[%c1_193, %c0_194, %c0_195] : memref<2x1x32xf32, #tpu.memory_space<vmem>>, vector<1x1x32xf32>
    %472 = vector.shape_cast %471 : vector<1x1x32xf32> to vector<1x32xf32>
    %c1_196 = arith.constant 1 : index
    %c0_197 = arith.constant 0 : index
    %c0_198 = arith.constant 0 : index
    %473 = vector.load %arg15[%c1_196, %c0_197, %c0_198] : memref<2x1x32xf32, #tpu.memory_space<vmem>>, vector<1x1x32xf32>
    %474 = vector.shape_cast %473 : vector<1x1x32xf32> to vector<1x32xf32>
    %cst_199 = arith.constant dense<0.000000e+00> : vector<16xf32>
    %475 = vector.multi_reduction <add>, %470, %cst_199 [1] : vector<16x32xf32> to vector<16xf32>
    %476 = vector.shape_cast %475 : vector<16xf32> to vector<16x1xf32>
    %cst_200 = arith.constant 3.200000e+01 : f32
    %477 = vector.broadcast %cst_200 : f32 to vector<16x1xf32>
    %478 = arith.divf %476, %477 : vector<16x1xf32>
    %479 = vector.broadcast %478 : vector<16x1xf32> to vector<16x32xf32>
    %480 = arith.subf %470, %479 : vector<16x32xf32>
    %481 = arith.mulf %480, %480 : vector<16x32xf32>
    %cst_201 = arith.constant dense<0.000000e+00> : vector<16xf32>
    %482 = vector.multi_reduction <add>, %481, %cst_201 [1] : vector<16x32xf32> to vector<16xf32>
    %483 = vector.shape_cast %482 : vector<16xf32> to vector<16x1xf32>
    %cst_202 = arith.constant 3.200000e+01 : f32
    %484 = vector.broadcast %cst_202 : f32 to vector<16x1xf32>
    %485 = arith.divf %483, %484 : vector<16x1xf32>
    %486 = vector.broadcast %478 : vector<16x1xf32> to vector<16x32xf32>
    %487 = arith.subf %470, %486 : vector<16x32xf32>
    %cst_203 = arith.constant 9.99999974E-6 : f32
    %488 = vector.broadcast %cst_203 : f32 to vector<16x1xf32>
    %489 = arith.addf %485, %488 : vector<16x1xf32>
    %490 = math.rsqrt %489 : vector<16x1xf32>
    %491 = vector.broadcast %490 : vector<16x1xf32> to vector<16x32xf32>
    %492 = arith.mulf %487, %491 : vector<16x32xf32>
    %493 = vector.broadcast %472 : vector<1x32xf32> to vector<16x32xf32>
    %494 = arith.mulf %492, %493 : vector<16x32xf32>
    %495 = vector.broadcast %474 : vector<1x32xf32> to vector<16x32xf32>
    %496 = arith.addf %494, %495 : vector<16x32xf32>
    %497 = vector.extract_strided_slice %496 {offsets = [0, 0], sizes = [1, 32], strides = [1, 1]} : vector<16x32xf32> to vector<1x32xf32>
    %498 = vector.extract_strided_slice %496 {offsets = [8, 0], sizes = [1, 32], strides = [1, 1]} : vector<16x32xf32> to vector<1x32xf32>
    %499 = tpu.concatenate %497, %498 in 0 : vector<1x32xf32>, vector<1x32xf32> -> vector<2x32xf32>
    %c0_204 = arith.constant 0 : index
    %c0_205 = arith.constant 0 : index
    %500 = vector.load %arg16[%c0_204, %c0_205] : memref<32x32xf32, #tpu.memory_space<vmem>>, vector<32x32xf32>
    %501 = arith.truncf %499 : vector<2x32xf32> to vector<2x32xbf16>
    %502 = arith.truncf %500 : vector<32x32xf32> to vector<32x32xbf16>
    %cst_206 = arith.constant dense<0.000000e+00> : vector<2x32xf32>
    %503 = tpu.matmul %501, %502, %cst_206 {dimension_numbers = #tpu.dot_dimension_numbers<[1], [0], [0], [1], [0, 0, 1, 1], [], []>} : vector<2x32xbf16>, vector<32x32xbf16>, vector<2x32xf32> -> vector<2x32xf32>
    %c0_207 = arith.constant 0 : index
    %c0_208 = arith.constant 0 : index
    %504 = vector.load %arg17[%c0_207, %c0_208] : memref<1x32xf32, #tpu.memory_space<vmem>>, vector<1x32xf32>
    %505 = vector.broadcast %504 : vector<1x32xf32> to vector<2x32xf32>
    %506 = arith.addf %503, %505 : vector<2x32xf32>
    %cst_209 = arith.constant 0.000000e+00 : f32
    %507 = vector.broadcast %cst_209 : f32 to vector<2x32xf32>
    %508 = arith.maximumf %506, %507 : vector<2x32xf32>
    %c0_210 = arith.constant 0 : index
    %c0_211 = arith.constant 0 : index
    %509 = vector.load %arg18[%c0_210, %c0_211] : memref<32x16xf32, #tpu.memory_space<vmem>>, vector<32x16xf32>
    %510 = arith.truncf %508 : vector<2x32xf32> to vector<2x32xbf16>
    %511 = arith.truncf %509 : vector<32x16xf32> to vector<32x16xbf16>
    %cst_212 = arith.constant dense<0.000000e+00> : vector<2x16xf32>
    %512 = tpu.matmul %510, %511, %cst_212 {dimension_numbers = #tpu.dot_dimension_numbers<[1], [0], [0], [1], [0, 0, 1, 1], [], []>} : vector<2x32xbf16>, vector<32x16xbf16>, vector<2x16xf32> -> vector<2x16xf32>
    %c0_213 = arith.constant 0 : index
    %c0_214 = arith.constant 0 : index
    %513 = vector.load %arg19[%c0_213, %c0_214] : memref<1x16xf32, #tpu.memory_space<vmem>>, vector<1x16xf32>
    %514 = vector.broadcast %513 : vector<1x16xf32> to vector<2x16xf32>
    %515 = arith.addf %512, %514 : vector<2x16xf32>
    %c0_215 = arith.constant 0 : index
    %c0_216 = arith.constant 0 : index
    %c0_217 = arith.constant 0 : index
    %516 = vector.load %arg20[%c0_215, %c0_216, %c0_217] : memref<1x2x16xf32, #tpu.memory_space<vmem>>, vector<1x2x16xf32>
    %517 = vector.shape_cast %516 : vector<1x2x16xf32> to vector<2x16xf32>
    %518 = vector.shape_cast %515 : vector<2x16xf32> to vector<1x2x16xf32>
    tpu.vector_store %arg20[%c0_215, %c0_216, %c0_217], %518 {strides = array<i32>} : memref<1x2x16xf32, #tpu.memory_space<vmem>>, vector<1x2x16xf32>,
    return
  }
  func.func @transform_0(%arg0: i32, %arg1: memref<2xi32, #tpu.memory_space<smem>>) -> (i32, i32) {
    %c0_i32 = arith.constant 0 : i32
    %c0_i32_0 = arith.constant 0 : i32
    return %arg0, %c0_i32 : i32, i32
  }
  func.func @transform_1(%arg0: i32, %arg1: memref<2xi32, #tpu.memory_space<smem>>) -> (i32, i32) {
    %c0_i32 = arith.constant 0 : i32
    %c0_i32_0 = arith.constant 0 : i32
    return %arg0, %c0_i32 : i32, i32
  }
  func.func @transform_2(%arg0: i32, %arg1: memref<2xi32, #tpu.memory_space<smem>>) -> (i32, i32, i32) {
    %c0_i32 = arith.constant 0 : i32
    %c0_i32_0 = arith.constant 0 : i32
    %c0_i32_1 = arith.constant 0 : i32
    %c0_i32_2 = arith.constant 0 : i32
    return %c0_i32, %c0_i32_0, %c0_i32_1 : i32, i32, i32
  }
  func.func @transform_3(%arg0: i32, %arg1: memref<2xi32, #tpu.memory_space<smem>>) -> (i32, i32, i32) {
    %c0_i32 = arith.constant 0 : i32
    %c0_i32_0 = arith.constant 0 : i32
    %c0_i32_1 = arith.constant 0 : i32
    %c0_i32_2 = arith.constant 0 : i32
    return %c0_i32, %c0_i32_0, %c0_i32_1 : i32, i32, i32
  }
  func.func @transform_4(%arg0: i32, %arg1: memref<2xi32, #tpu.memory_space<smem>>) -> (i32, i32, i32) {
    %c0_i32 = arith.constant 0 : i32
    %c0_i32_0 = arith.constant 0 : i32
    %c0_i32_1 = arith.constant 0 : i32
    %c0_i32_2 = arith.constant 0 : i32
    return %c0_i32, %c0_i32_0, %c0_i32_1 : i32, i32, i32
  }
  func.func @transform_5(%arg0: i32, %arg1: memref<2xi32, #tpu.memory_space<smem>>) -> (i32, i32, i32) {
    %c0_i32 = arith.constant 0 : i32
    %c0_i32_0 = arith.constant 0 : i32
    %c0_i32_1 = arith.constant 0 : i32
    %c0_i32_2 = arith.constant 0 : i32
    return %c0_i32, %c0_i32_0, %c0_i32_1 : i32, i32, i32
  }
  func.func @transform_6(%arg0: i32, %arg1: memref<2xi32, #tpu.memory_space<smem>>) -> (i32, i32, i32) {
    %c0_i32 = arith.constant 0 : i32
    %c0_i32_0 = arith.constant 0 : i32
    %c0_i32_1 = arith.constant 0 : i32
    %c0_i32_2 = arith.constant 0 : i32
    return %c0_i32, %c0_i32_0, %c0_i32_1 : i32, i32, i32
  }
  func.func @transform_7(%arg0: i32, %arg1: memref<2xi32, #tpu.memory_space<smem>>) -> (i32, i32, i32) {
    %c0_i32 = arith.constant 0 : i32
    %c0_i32_0 = arith.constant 0 : i32
    %c0_i32_1 = arith.constant 0 : i32
    %c0_i32_2 = arith.constant 0 : i32
    return %c0_i32, %c0_i32_0, %c0_i32_1 : i32, i32, i32
  }
  func.func @transform_8(%arg0: i32, %arg1: memref<2xi32, #tpu.memory_space<smem>>) -> (i32, i32, i32) {
    %c0_i32 = arith.constant 0 : i32
    %c0_i32_0 = arith.constant 0 : i32
    %c0_i32_1 = arith.constant 0 : i32
    %c0_i32_2 = arith.constant 0 : i32
    return %c0_i32, %c0_i32_0, %c0_i32_1 : i32, i32, i32
  }
  func.func @transform_9(%arg0: i32, %arg1: memref<2xi32, #tpu.memory_space<smem>>) -> (i32, i32, i32) {
    %c0_i32 = arith.constant 0 : i32
    %c0_i32_0 = arith.constant 0 : i32
    %c0_i32_1 = arith.constant 0 : i32
    %c0_i32_2 = arith.constant 0 : i32
    return %c0_i32, %c0_i32_0, %c0_i32_1 : i32, i32, i32
  }
  func.func @transform_10(%arg0: i32, %arg1: memref<2xi32, #tpu.memory_space<smem>>) -> (i32, i32, i32) {
    %c0_i32 = arith.constant 0 : i32
    %c0_i32_0 = arith.constant 0 : i32
    %c0_i32_1 = arith.constant 0 : i32
    %c0_i32_2 = arith.constant 0 : i32
    return %c0_i32, %c0_i32_0, %c0_i32_1 : i32, i32, i32
  }
  func.func @transform_11(%arg0: i32, %arg1: memref<2xi32, #tpu.memory_space<smem>>) -> (i32, i32, i32) {
    %c0_i32 = arith.constant 0 : i32
    %c0_i32_0 = arith.constant 0 : i32
    %c0_i32_1 = arith.constant 0 : i32
    %c0_i32_2 = arith.constant 0 : i32
    return %c0_i32, %c0_i32_0, %c0_i32_1 : i32, i32, i32
  }
  func.func @transform_12(%arg0: i32, %arg1: memref<2xi32, #tpu.memory_space<smem>>) -> (i32, i32, i32) {
    %c0_i32 = arith.constant 0 : i32
    %c0_i32_0 = arith.constant 0 : i32
    %c0_i32_1 = arith.constant 0 : i32
    %c0_i32_2 = arith.constant 0 : i32
    return %c0_i32, %c0_i32_0, %c0_i32_1 : i32, i32, i32
  }
  func.func @transform_13(%arg0: i32, %arg1: memref<2xi32, #tpu.memory_space<smem>>) -> (i32, i32, i32) {
    %c0_i32 = arith.constant 0 : i32
    %c0_i32_0 = arith.constant 0 : i32
    %c0_i32_1 = arith.constant 0 : i32
    %c0_i32_2 = arith.constant 0 : i32
    return %c0_i32, %c0_i32_0, %c0_i32_1 : i32, i32, i32
  }
  func.func @transform_14(%arg0: i32, %arg1: memref<2xi32, #tpu.memory_space<smem>>) -> (i32, i32) {
    %c0_i32 = arith.constant 0 : i32
    %c0_i32_0 = arith.constant 0 : i32
    %c0_i32_1 = arith.constant 0 : i32
    return %c0_i32, %c0_i32_0 : i32, i32
  }
  func.func @transform_15(%arg0: i32, %arg1: memref<2xi32, #tpu.memory_space<smem>>) -> (i32, i32) {
    %c0_i32 = arith.constant 0 : i32
    %c0_i32_0 = arith.constant 0 : i32
    %c0_i32_1 = arith.constant 0 : i32
    return %c0_i32, %c0_i32_0 : i32, i32
  }
  func.func @transform_16(%arg0: i32, %arg1: memref<2xi32, #tpu.memory_space<smem>>) -> (i32, i32) {
    %c0_i32 = arith.constant 0 : i32
    %c0_i32_0 = arith.constant 0 : i32
    %c0_i32_1 = arith.constant 0 : i32
    return %c0_i32, %c0_i32_0 : i32, i32
  }
  func.func @transform_17(%arg0: i32, %arg1: memref<2xi32, #tpu.memory_space<smem>>) -> (i32, i32) {
    %c0_i32 = arith.constant 0 : i32
    %c0_i32_0 = arith.constant 0 : i32
    %c0_i32_1 = arith.constant 0 : i32
    return %c0_i32, %c0_i32_0 : i32, i32
  }
  func.func @transform_18(%arg0: i32, %arg1: memref<2xi32, #tpu.memory_space<smem>>) -> (i32, i32, i32) {
    %c0_i32 = arith.constant 0 : i32
    %c0_i32_0 = arith.constant 0 : i32
    %c0_i32_1 = arith.constant 0 : i32
    return %arg0, %c0_i32, %c0_i32_0 : i32, i32, i32
  }
}

</mosaic_0001>

<llo_original>
// kernel: bert_forward.1
$region0: #{bert_forward.1}
  #allocation0 [shape = 'u32[]', space=smem, size = 0x4, offset = 0x4, fixed_abs, tag = 'smem constant byte address 0x4 - core index']
  #allocation1 [shape = 'u32[144,128]{1,0:T(1,128)}', space=vmem, size = 0x12000, scoped, tag = 'internal scratch']
  #allocation2 [shape = 'f32[16,32]{1,0:T(8,128)}', space=vmem, size = 0x2000, scoped, tag = 'scratch operand']
  #allocation3 [shape = 's32[1]{0}', space=sflag, size = 0x4, scoped, tag = 'scoped memory for bert_forward.1']
  #allocation4 [shape = 'u8[512]{0}', space=smem, size = 0x200, scoped, tag = 'prefetched SMEM operand 0']
  %s0 = inlined_call_operand.vmem [shape: s32[2], index: 0, kind: input, shape index: {}]
  %s1 = inlined_call_operand.vmem [shape: f32[16,32], index: 1, kind: input, shape index: {}]
  %s2 = inlined_call_operand.vmem [shape: f32[16,32], index: 2, kind: input, shape index: {}]
  %s3 = inlined_call_operand.vmem [shape: f32[2,32,96], index: 3, kind: input, shape index: {}]
  %s4 = inlined_call_operand.vmem [shape: f32[2,1,96], index: 4, kind: input, shape index: {}]
  %s5 = inlined_call_operand.vmem [shape: f32[2,32,32], index: 5, kind: input, shape index: {}]
  %s6 = inlined_call_operand.vmem [shape: f32[2,1,32], index: 6, kind: input, shape index: {}]
  %s7 = inlined_call_operand.vmem [shape: f32[2,1,32], index: 7, kind: input, shape index: {}]
  %s8 = inlined_call_operand.vmem [shape: f32[2,1,32], index: 8, kind: input, shape index: {}]
  %s9 = inlined_call_operand.vmem [shape: f32[2,32,128], index: 9, kind: input, shape index: {}]
  %s10 = inlined_call_operand.vmem [shape: f32[2,1,128], index: 10, kind: input, shape index: {}]
  %s11 = inlined_call_operand.vmem [shape: f32[2,128,32], index: 11, kind: input, shape index: {}]
  %s12 = inlined_call_operand.vmem [shape: f32[2,1,32], index: 12, kind: input, shape index: {}]
  %s13 = inlined_call_operand.vmem [shape: f32[2,1,32], index: 13, kind: input, shape index: {}]
  %s14 = inlined_call_operand.vmem [shape: f32[2,1,32], index: 14, kind: input, shape index: {}]
  %s15 = inlined_call_operand.vmem [shape: f32[32,32], index: 15, kind: input, shape index: {}]
  %s16 = inlined_call_operand.vmem [shape: f32[1,32], index: 16, kind: input, shape index: {}]
  %s17 = inlined_call_operand.vmem [shape: f32[32,16], index: 17, kind: input, shape index: {}]
  %s18 = inlined_call_operand.vmem [shape: f32[1,16], index: 18, kind: input, shape index: {}]
  %s19 = inlined_call_operand.hbm [shape: f32[1,2,16], index: 19, kind: output, shape index: {}]
  %s20 = sld [smem:[#allocation0]]
  $region82: #{bert_forward.1} parent=0
    _
  %s22 = ssub.s32 1, %s20
  %s23 = scalar_select 0, %s22, %s20
  %s24 = sshll.u32 %s0, 4
  %s25 = int_to_ptr.vmem [resolvable:$true] %s24
  %27 = dma.vmem_to_smem %s25, 16, [#allocation4], [#allocation3]
  %28 = dma.done [#allocation3], 16
  %29 = sfence
  $region1: #{bert_forward.1} parent=0
    #allocation5 [shape = 'u8[1024]{0}', space=vmem, size = 0x400, scoped, tag = 'output window, operand 0, single buffered']
    #allocation6 [shape = 's32[1]{0}', space=sflag, size = 0x4, scoped, tag = 'scoped memory for bert_forward.1']
    %30 = vsyncpa [#allocation6], 0
    // Predicated region
    $region2: #{bert_forward.1} parent=1 // pred_check
      _
    $region3: #{bert_forward.1} parent=1 // pred_check_branch
      %32 = sbr.rel (0) target = $region5
    $region4: #{bert_forward.1} parent=1 // pred_region
      _
    $region5: #{bert_forward.1} parent=1 // pred_fallthru
      _
    // Predicated region
    $region6: #{bert_forward.1} parent=1 // pred_check
      _
    $region7: #{bert_forward.1} parent=1 // pred_check_branch
      %34 = sbr.rel (0) target = $region9
    $region8: #{bert_forward.1} parent=1 // pred_region
      _
    $region9: #{bert_forward.1} parent=1 // pred_fallthru
      _
    // Predicated region
    $region10: #{bert_forward.1} parent=1 // pred_check
      _
    $region11: #{bert_forward.1} parent=1 // pred_check_branch
      %36 = sbr.rel (0) target = $region13
    $region12: #{bert_forward.1} parent=1 // pred_region
      _
    $region13: #{bert_forward.1} parent=1 // pred_fallthru
      _
    // Predicated region
    $region14: #{bert_forward.1} parent=1 // pred_check
      _
    $region15: #{bert_forward.1} parent=1 // pred_check_branch
      %38 = sbr.rel (0) target = $region17
    $region16: #{bert_forward.1} parent=1 // pred_region
      _
    $region17: #{bert_forward.1} parent=1 // pred_fallthru
      _
    // Predicated region
    $region18: #{bert_forward.1} parent=1 // pred_check
      _
    $region19: #{bert_forward.1} parent=1 // pred_check_branch
      %40 = sbr.rel (0) target = $region21
    $region20: #{bert_forward.1} parent=1 // pred_region
      _
    $region21: #{bert_forward.1} parent=1 // pred_fallthru
      _
    // Predicated region
    $region22: #{bert_forward.1} parent=1 // pred_check
      _
    $region23: #{bert_forward.1} parent=1 // pred_check_branch
      %42 = sbr.rel (0) target = $region25
    $region24: #{bert_forward.1} parent=1 // pred_region
      _
    $region25: #{bert_forward.1} parent=1 // pred_fallthru
      _
    // Predicated region
    $region26: #{bert_forward.1} parent=1 // pred_check
      _
    $region27: #{bert_forward.1} parent=1 // pred_check_branch
      %44 = sbr.rel (0) target = $region29
    $region28: #{bert_forward.1} parent=1 // pred_region
      _
    $region29: #{bert_forward.1} parent=1 // pred_fallthru
      _
    // Predicated region
    $region30: #{bert_forward.1} parent=1 // pred_check
      _
    $region31: #{bert_forward.1} parent=1 // pred_check_branch
      %46 = sbr.rel (0) target = $region33
    $region32: #{bert_forward.1} parent=1 // pred_region
      _
    $region33: #{bert_forward.1} parent=1 // pred_fallthru
      _
    // Predicated region
    $region34: #{bert_forward.1} parent=1 // pred_check
      _
    $region35: #{bert_forward.1} parent=1 // pred_check_branch
      %48 = sbr.rel (0) target = $region37
    $region36: #{bert_forward.1} parent=1 // pred_region
      _
    $region37: #{bert_forward.1} parent=1 // pred_fallthru
      _
    // Predicated region
    $region38: #{bert_forward.1} parent=1 // pred_check
      _
    $region39: #{bert_forward.1} parent=1 // pred_check_branch
      %50 = sbr.rel (0) target = $region41
    $region40: #{bert_forward.1} parent=1 // pred_region
      _
    $region41: #{bert_forward.1} parent=1 // pred_fallthru
      _
    // Predicated region
    $region42: #{bert_forward.1} parent=1 // pred_check
      _
    $region43: #{bert_forward.1} parent=1 // pred_check_branch
      %52 = sbr.rel (0) target = $region45
    $region44: #{bert_forward.1} parent=1 // pred_region
      _
    $region45: #{bert_forward.1} parent=1 // pred_fallthru
      _
    // Predicated region
    $region46: #{bert_forward.1} parent=1 // pred_check
      _
    $region47: #{bert_forward.1} parent=1 // pred_check_branch
      %54 = sbr.rel (0) target = $region49
    $region48: #{bert_forward.1} parent=1 // pred_region
      _
    $region49: #{bert_forward.1} parent=1 // pred_fallthru
      _
    // Predicated region
    $region50: #{bert_forward.1} parent=1 // pred_check
      _
    $region51: #{bert_forward.1} parent=1 // pred_check_branch
      %56 = sbr.rel (0) target = $region53
    $region52: #{bert_forward.1} parent=1 // pred_region
      _
    $region53: #{bert_forward.1} parent=1 // pred_fallthru
      _
    // Predicated region
    $region54: #{bert_forward.1} parent=1 // pred_check
      _
    $region55: #{bert_forward.1} parent=1 // pred_check_branch
      %58 = sbr.rel (0) target = $region57
    $region56: #{bert_forward.1} parent=1 // pred_region
      _
    $region57: #{bert_forward.1} parent=1 // pred_fallthru
      _
    // Predicated region
    $region58: #{bert_forward.1} parent=1 // pred_check
      _
    $region59: #{bert_forward.1} parent=1 // pred_check_branch
      %60 = sbr.rel (0) target = $region61
    $region60: #{bert_forward.1} parent=1 // pred_region
      _
    $region61: #{bert_forward.1} parent=1 // pred_fallthru
      _
    // Predicated region
    $region62: #{bert_forward.1} parent=1 // pred_check
      _
    $region63: #{bert_forward.1} parent=1 // pred_check_branch
      %62 = sbr.rel (0) target = $region65
    $region64: #{bert_forward.1} parent=1 // pred_region
      _
    $region65: #{bert_forward.1} parent=1 // pred_fallthru
      _
    // Predicated region
    $region66: #{bert_forward.1} parent=1 // pred_check
      _
    $region67: #{bert_forward.1} parent=1 // pred_check_branch
      %64 = sbr.rel (0) target = $region69
    $region68: #{bert_forward.1} parent=1 // pred_region
      _
    $region69: #{bert_forward.1} parent=1 // pred_fallthru
      _
    // Predicated region
    $region70: #{bert_forward.1} parent=1 // pred_check
      _
    $region71: #{bert_forward.1} parent=1 // pred_check_branch
      %66 = sbr.rel (0) target = $region73
    $region72: #{bert_forward.1} parent=1 // pred_region
      _
    $region73: #{bert_forward.1} parent=1 // pred_fallthru
      _
    %s68 = smul.u32 0, 2
    %v69 = vld [vmem:[%s1] sm:$0xff]
    %v70 = vld [vmem:[%s1 + $0x8] sm:$0xff]
    %v71 = vld [vmem:[%s2] sm:$0xff]
    %v72 = vld [vmem:[%s2 + $0x8] sm:$0xff]
    %v73 = vadd.f32 %v69, %v71
    %v74 = vadd.f32 %v70, %v72
    %v75 = vlaneseq
    %v76 = vand.u32 %v75, 127
    %s77 = sld [smem:[#allocation4 + %s68]]
    %v78 = vstv %s77
    %vm79 = vcmp.ge.s32.totalorder %v76, %v78
    %v80 = vsel %vm79, -1e+09, 0.0
    %s81 = sadd.s32 %s68, 1
    %s82 = sld [smem:[#allocation4 + %s81]]
    %v83 = vstv %s82
    %vm84 = vcmp.ge.s32.totalorder %v76, %v83
    %v85 = vsel %vm84, -1e+09, 0.0
    %v86 = vld [vmem:[%s3] sm:$0xff]
    %v87 = vld [vmem:[%s3 + $0x8] sm:$0xff]
    %v88 = vld [vmem:[%s3 + $0x10] sm:$0xff]
    %v89 = vld [vmem:[%s3 + $0x18] sm:$0xff]
    %v90 = vpack.c.bf16 %v74, %v73
    %v91 = vpack.c.bf16 %v87, %v86
    %v92 = vpack.c.bf16 %v89, %v88
    %v93 = vld [vmem:[%s4] sm:$0x1]
    %v95 = vlaneseq
    %v96 = vshrl.u32 %v95, 7
    %v97 = vsub.s32 0, %v96
    %v98 = vrot.slane %v93, %v97
    %vm100 = vcmask 261120
    %v102 = vsel %vm100, %v90, 0
    %104 = vmatprep.subr.bf16.mxu0 0
    %105 = vmatpush1.bf16.msra.mxu0 0
    %106 = vmatprep.subr.bf16.mxu0 0
    %107 = vmatpush1.bf16.msra.mxu0 0
    %108 = vmatprep.subr.bf16.mxu0 0
    %109 = vmatpush1.bf16.msra.mxu0 0
    %110 = vmatprep.subr.bf16.mxu0 0
    %111 = vmatpush1.bf16.msra.mxu0 0
    %112 = vmatprep.subr.bf16.mxu0 0
    %113 = vmatpush1.bf16.msra.mxu0 0
    %114 = vmatprep.subr.bf16.mxu0 0
    %115 = vmatpush1.bf16.msra.mxu0 0
    %116 = vmatprep.subr.bf16.mxu0 0
    %117 = vmatpush1.bf16.msra.mxu0 %v92
    %118 = vmatprep.subr.bf16.mxu0 0
    %119 = vmatpush1.bf16.msra.mxu0 %v91
    %120 = vmatprep.subr.bf16.mxu0 0
    %121 = vmatpush2.bf16.msra.mxu0 0
    %122 = vmatprep.subr.bf16.mxu0 0
    %123 = vmatpush2.bf16.msra.mxu0 0
    %124 = vmatprep.subr.bf16.mxu0 0
    %125 = vmatpush2.bf16.msra.mxu0 0
    %126 = vmatprep.subr.bf16.mxu0 0
    %127 = vmatpush2.bf16.msra.mxu0 0
    %128 = vmatprep.subr.bf16.mxu0 0
    %129 = vmatpush2.bf16.msra.mxu0 0
    %130 = vmatprep.subr.bf16.mxu0 0
    %131 = vmatpush2.bf16.msra.mxu0 0
    %132 = vmatprep.subr.bf16.mxu0 0
    %133 = vmatpush2.bf16.msra.mxu0 0
    %134 = vmatprep.subr.bf16.mxu0 0
    %135 = vmatpush2.bf16.msra.mxu0 0
    %136 = vmatprep.mubr.bf16.mxu0 0
    %137 = vmatmul.mubr.bf16.gmra.mxu0 %v102
    %v138 = vpop.f32.mrf.mxu0
    %v139 = vadd.f32 %v98, %v138
    %v140 = vpop.f32.mrf.mxu0
    %v141 = vpop.f32.mrf.mxu0
    %v142 = vadd.f32 %v98, %v141
    %v143 = vpop.f32.mrf.mxu0
    %144 = vdwg.mxu0
    %v145 = vpack.c.bf16 %v142, %v139
    %147 = vrot.lane.b32.xlu0 %v145, 96
    %v148 = vpop.permute.xlu0 %147
    %vm149 = vcmask 64512
    %v151 = vsel %vm149, %v145, 0
    %v154 = vsel %vm149, %v148, 0
    %156 = vmatprep.subr.bf16.mxu0 0
    %157 = vmatpush1.bf16.xpose.msra.mxu0 0
    %158 = vmatprep.subr.bf16.mxu0 0
    %159 = vmatpush1.bf16.xpose.msra.mxu0 0
    %160 = vmatprep.subr.bf16.mxu0 0
    %161 = vmatpush1.bf16.xpose.msra.mxu0 0
    %162 = vmatprep.subr.bf16.mxu0 0
    %163 = vmatpush1.bf16.xpose.msra.mxu0 0
    %164 = vmatprep.subr.bf16.mxu0 0
    %165 = vmatpush1.bf16.xpose.msra.mxu0 0
    %166 = vmatprep.subr.bf16.mxu0 0
    %167 = vmatpush1.bf16.xpose.msra.mxu0 0
    %168 = vmatprep.subr.bf16.mxu0 0
    %169 = vmatpush1.bf16.xpose.msra.mxu0 0
    %170 = vmatprep.subr.bf16.mxu0 0
    %171 = vmatpush1.bf16.xpose.msra.mxu0 %v154
    %172 = vmatprep.subr.bf16.mxu0 0
    %173 = vmatpush2.bf16.xpose.msra.mxu0 0
    %174 = vmatprep.subr.bf16.mxu0 0
    %175 = vmatpush2.bf16.xpose.msra.mxu0 0
    %176 = vmatprep.subr.bf16.mxu0 0
    %177 = vmatpush2.bf16.xpose.msra.mxu0 0
    %178 = vmatprep.subr.bf16.mxu0 0
    %179 = vmatpush2.bf16.xpose.msra.mxu0 0
    %180 = vmatprep.subr.bf16.mxu0 0
    %181 = vmatpush2.bf16.xpose.msra.mxu0 0
    %182 = vmatprep.subr.bf16.mxu0 0
    %183 = vmatpush2.bf16.xpose.msra.mxu0 0
    %184 = vmatprep.subr.bf16.mxu0 0
    %185 = vmatpush2.bf16.xpose.msra.mxu0 0
    %186 = vmatprep.subr.bf16.mxu0 0
    %187 = vmatpush2.bf16.xpose.msra.mxu0 0
    %188 = vmatprep.mubr.bf16.mxu0 0
    %189 = vmatmul.mubr.bf16.gmra.mxu0 %v151
    %v190 = vpop.f32.mrf.mxu0
    %v191 = vadd.f32 %v80, %v190
    %v192 = vpop.f32.mrf.mxu0
    %v193 = vpop.f32.mrf.mxu0
    %v194 = vpop.f32.mrf.mxu0
    %195 = vdwg.mxu0
    %v196 = vsel %vm149, %v191, -inf
    %197 = vmax.xlane.f32.xlu0 %v196
    %v198 = vpop.xlane.xlu0 %197
    %v199 = vsub.f32 %v191, %v198
    %v200 = vmul.f32 %v199, 1.442695
    %v201 = vpow.pop %v200
    %v202 = vsel %vm149, %v201, 0.0
    %203 = vadd.xlane.f32.xlu0 %v202
    %v204 = vpop.xlane.xlu0 %203
    %v205 = vrcp.pop %v204
    %v206 = vmul.f32 %v201, %v205
    %v207 = vpack.c.bf16 %v206, %v206
    %208 = vrot.lane.b32.xlu0 %v145, 64
    %v209 = vpop.permute.xlu0 %208
    %v211 = vsel %vm149, %v207, 0
    %vm213 = vcmask 1043456
    %v215 = vsel %vm213, %v209, 0
    %217 = vmatprep.subr.bf16.mxu0 0
    %218 = vmatpush1.bf16.msra.mxu0 0
    %219 = vmatprep.subr.bf16.mxu0 0
    %220 = vmatpush1.bf16.msra.mxu0 0
    %221 = vmatprep.subr.bf16.mxu0 0
    %222 = vmatpush1.bf16.msra.mxu0 0
    %223 = vmatprep.subr.bf16.mxu0 0
    %224 = vmatpush1.bf16.msra.mxu0 0
    %225 = vmatprep.subr.bf16.mxu0 0
    %226 = vmatpush1.bf16.msra.mxu0 0
    %227 = vmatprep.subr.bf16.mxu0 0
    %228 = vmatpush1.bf16.msra.mxu0 0
    %229 = vmatprep.subr.bf16.mxu0 0
    %230 = vmatpush1.bf16.msra.mxu0 0
    %231 = vmatprep.subr.bf16.mxu0 0
    %232 = vmatpush1.bf16.msra.mxu0 %v215
    %233 = vmatprep.subr.bf16.mxu0 0
    %234 = vmatpush2.bf16.msra.mxu0 0
    %235 = vmatprep.subr.bf16.mxu0 0
    %236 = vmatpush2.bf16.msra.mxu0 0
    %237 = vmatprep.subr.bf16.mxu0 0
    %238 = vmatpush2.bf16.msra.mxu0 0
    %239 = vmatprep.subr.bf16.mxu0 0
    %240 = vmatpush2.bf16.msra.mxu0 0
    %241 = vmatprep.subr.bf16.mxu0 0
    %242 = vmatpush2.bf16.msra.mxu0 0
    %243 = vmatprep.subr.bf16.mxu0 0
    %244 = vmatpush2.bf16.msra.mxu0 0
    %245 = vmatprep.subr.bf16.mxu0 0
    %246 = vmatpush2.bf16.msra.mxu0 0
    %247 = vmatprep.subr.bf16.mxu0 0
    %248 = vmatpush2.bf16.msra.mxu0 0
    %249 = vmatprep.mubr.bf16.mxu0 0
    %250 = vmatmul.mubr.bf16.gmra.mxu0 %v211
    %v251 = vpop.f32.mrf.mxu0
    %v252 = vadd.f32 0.0, %v251
    %v253 = vpop.f32.mrf.mxu0
    %v254 = vpop.f32.mrf.mxu0
    %v255 = vpop.f32.mrf.mxu0
    %256 = vdwg.mxu0
    %257 = vst.msk [vmem:[#allocation2] sm:$0xff] %vm149, %v252
    %258 = vrot.lane.b32.xlu0 %v145, 120
    %v259 = vpop.permute.xlu0 %258
    %260 = vrot.lane.b32.xlu0 %v145, 88
    %v261 = vpop.permute.xlu0 %260
    %v263 = vsel %vm149, %v259, 0
    %v266 = vsel %vm149, %v261, 0
    %268 = vmatprep.subr.bf16.mxu0 0
    %269 = vmatpush1.bf16.xpose.msra.mxu0 0
    %270 = vmatprep.subr.bf16.mxu0 0
    %271 = vmatpush1.bf16.xpose.msra.mxu0 0
    %272 = vmatprep.subr.bf16.mxu0 0
    %273 = vmatpush1.bf16.xpose.msra.mxu0 0
    %274 = vmatprep.subr.bf16.mxu0 0
    %275 = vmatpush1.bf16.xpose.msra.mxu0 0
    %276 = vmatprep.subr.bf16.mxu0 0
    %277 = vmatpush1.bf16.xpose.msra.mxu0 0
    %278 = vmatprep.subr.bf16.mxu0 0
    %279 = vmatpush1.bf16.xpose.msra.mxu0 0
    %280 = vmatprep.subr.bf16.mxu0 0
    %281 = vmatpush1.bf16.xpose.msra.mxu0 0
    %282 = vmatprep.subr.bf16.mxu0 0
    %283 = vmatpush1.bf16.xpose.msra.mxu0 %v266
    %284 = vmatprep.subr.bf16.mxu0 0
    %285 = vmatpush2.bf16.xpose.msra.mxu0 0
    %286 = vmatprep.subr.bf16.mxu0 0
    %287 = vmatpush2.bf16.xpose.msra.mxu0 0
    %288 = vmatprep.subr.bf16.mxu0 0
    %289 = vmatpush2.bf16.xpose.msra.mxu0 0
    %290 = vmatprep.subr.bf16.mxu0 0
    %291 = vmatpush2.bf16.xpose.msra.mxu0 0
    %292 = vmatprep.subr.bf16.mxu0 0
    %293 = vmatpush2.bf16.xpose.msra.mxu0 0
    %294 = vmatprep.subr.bf16.mxu0 0
    %295 = vmatpush2.bf16.xpose.msra.mxu0 0
    %296 = vmatprep.subr.bf16.mxu0 0
    %297 = vmatpush2.bf16.xpose.msra.mxu0 0
    %298 = vmatprep.subr.bf16.mxu0 0
    %299 = vmatpush2.bf16.xpose.msra.mxu0 0
    %300 = vmatprep.mubr.bf16.mxu0 0
    %301 = vmatmul.mubr.bf16.gmra.mxu0 %v263
    %v302 = vpop.f32.mrf.mxu0
    %v303 = vadd.f32 %v80, %v302
    %v304 = vpop.f32.mrf.mxu0
    %v305 = vpop.f32.mrf.mxu0
    %v306 = vpop.f32.mrf.mxu0
    %307 = vdwg.mxu0
    %v308 = vsel %vm149, %v303, -inf
    %309 = vmax.xlane.f32.xlu0 %v308
    %v310 = vpop.xlane.xlu0 %309
    %v311 = vsub.f32 %v303, %v310
    %v312 = vmul.f32 %v311, 1.442695
    %v313 = vpow.pop %v312
    %v314 = vsel %vm149, %v313, 0.0
    %315 = vadd.xlane.f32.xlu0 %v314
    %v316 = vpop.xlane.xlu0 %315
    %v317 = vrcp.pop %v316
    %v318 = vmul.f32 %v313, %v317
    %v319 = vpack.c.bf16 %v318, %v318
    %320 = vrot.lane.b32.xlu0 %v145, 56
    %v321 = vpop.permute.xlu0 %320
    %v323 = vsel %vm149, %v319, 0
    %v326 = vsel %vm213, %v321, 0
    %328 = vmatprep.subr.bf16.mxu0 0
    %329 = vmatpush1.bf16.msra.mxu0 0
    %330 = vmatprep.subr.bf16.mxu0 0
    %331 = vmatpush1.bf16.msra.mxu0 0
    %332 = vmatprep.subr.bf16.mxu0 0
    %333 = vmatpush1.bf16.msra.mxu0 0
    %334 = vmatprep.subr.bf16.mxu0 0
    %335 = vmatpush1.bf16.msra.mxu0 0
    %336 = vmatprep.subr.bf16.mxu0 0
    %337 = vmatpush1.bf16.msra.mxu0 0
    %338 = vmatprep.subr.bf16.mxu0 0
    %339 = vmatpush1.bf16.msra.mxu0 0
    %340 = vmatprep.subr.bf16.mxu0 0
    %341 = vmatpush1.bf16.msra.mxu0 0
    %342 = vmatprep.subr.bf16.mxu0 0
    %343 = vmatpush1.bf16.msra.mxu0 %v326
    %344 = vmatprep.subr.bf16.mxu0 0
    %345 = vmatpush2.bf16.msra.mxu0 0
    %346 = vmatprep.subr.bf16.mxu0 0
    %347 = vmatpush2.bf16.msra.mxu0 0
    %348 = vmatprep.subr.bf16.mxu0 0
    %349 = vmatpush2.bf16.msra.mxu0 0
    %350 = vmatprep.subr.bf16.mxu0 0
    %351 = vmatpush2.bf16.msra.mxu0 0
    %352 = vmatprep.subr.bf16.mxu0 0
    %353 = vmatpush2.bf16.msra.mxu0 0
    %354 = vmatprep.subr.bf16.mxu0 0
    %355 = vmatpush2.bf16.msra.mxu0 0
    %356 = vmatprep.subr.bf16.mxu0 0
    %357 = vmatpush2.bf16.msra.mxu0 0
    %358 = vmatprep.subr.bf16.mxu0 0
    %359 = vmatpush2.bf16.msra.mxu0 0
    %360 = vmatprep.mubr.bf16.mxu0 0
    %361 = vmatmul.mubr.bf16.gmra.mxu0 %v323
    %v362 = vpop.f32.mrf.mxu0
    %v363 = vadd.f32 0.0, %v362
    %v364 = vpop.f32.mrf.mxu0
    %v365 = vpop.f32.mrf.mxu0
    %v366 = vpop.f32.mrf.mxu0
    %367 = vdwg.mxu0
    %369 = vrot.lane.b32.xlu0 %v363, 8
    %v370 = vpop.permute.xlu0 %369
    %vm372 = vcmask 130112
    %373 = vst.msk [vmem:[#allocation2] sm:$0xff] %vm372, %v370
    %374 = vrot.lane.b32.xlu0 %v145, 112
    %v375 = vpop.permute.xlu0 %374
    %376 = vrot.lane.b32.xlu0 %v145, 80
    %v377 = vpop.permute.xlu0 %376
    %v379 = vsel %vm149, %v375, 0
    %v382 = vsel %vm149, %v377, 0
    %384 = vmatprep.subr.bf16.mxu0 0
    %385 = vmatpush1.bf16.xpose.msra.mxu0 0
    %386 = vmatprep.subr.bf16.mxu0 0
    %387 = vmatpush1.bf16.xpose.msra.mxu0 0
    %388 = vmatprep.subr.bf16.mxu0 0
    %389 = vmatpush1.bf16.xpose.msra.mxu0 0
    %390 = vmatprep.subr.bf16.mxu0 0
    %391 = vmatpush1.bf16.xpose.msra.mxu0 0
    %392 = vmatprep.subr.bf16.mxu0 0
    %393 = vmatpush1.bf16.xpose.msra.mxu0 0
    %394 = vmatprep.subr.bf16.mxu0 0
    %395 = vmatpush1.bf16.xpose.msra.mxu0 0
    %396 = vmatprep.subr.bf16.mxu0 0
    %397 = vmatpush1.bf16.xpose.msra.mxu0 0
    %398 = vmatprep.subr.bf16.mxu0 0
    %399 = vmatpush1.bf16.xpose.msra.mxu0 %v382
    %400 = vmatprep.subr.bf16.mxu0 0
    %401 = vmatpush2.bf16.xpose.msra.mxu0 0
    %402 = vmatprep.subr.bf16.mxu0 0
    %403 = vmatpush2.bf16.xpose.msra.mxu0 0
    %404 = vmatprep.subr.bf16.mxu0 0
    %405 = vmatpush2.bf16.xpose.msra.mxu0 0
    %406 = vmatprep.subr.bf16.mxu0 0
    %407 = vmatpush2.bf16.xpose.msra.mxu0 0
    %408 = vmatprep.subr.bf16.mxu0 0
    %409 = vmatpush2.bf16.xpose.msra.mxu0 0
    %410 = vmatprep.subr.bf16.mxu0 0
    %411 = vmatpush2.bf16.xpose.msra.mxu0 0
    %412 = vmatprep.subr.bf16.mxu0 0
    %413 = vmatpush2.bf16.xpose.msra.mxu0 0
    %414 = vmatprep.subr.bf16.mxu0 0
    %415 = vmatpush2.bf16.xpose.msra.mxu0 0
    %416 = vmatprep.mubr.bf16.mxu0 0
    %417 = vmatmul.mubr.bf16.gmra.mxu0 %v379
    %v418 = vpop.f32.mrf.mxu0
    %v419 = vadd.f32 %v80, %v418
    %v420 = vpop.f32.mrf.mxu0
    %v421 = vpop.f32.mrf.mxu0
    %v422 = vpop.f32.mrf.mxu0
    %423 = vdwg.mxu0
    %v424 = vsel %vm149, %v419, -inf
    %425 = vmax.xlane.f32.xlu0 %v424
    %v426 = vpop.xlane.xlu0 %425
    %v427 = vsub.f32 %v419, %v426
    %v428 = vmul.f32 %v427, 1.442695
    %v429 = vpow.pop %v428
    %v430 = vsel %vm149, %v429, 0.0
    %431 = vadd.xlane.f32.xlu0 %v430
    %v432 = vpop.xlane.xlu0 %431
    %v433 = vrcp.pop %v432
    %v434 = vmul.f32 %v429, %v433
    %v435 = vpack.c.bf16 %v434, %v434
    %436 = vrot.lane.b32.xlu0 %v145, 48
    %v437 = vpop.permute.xlu0 %436
    %v439 = vsel %vm149, %v435, 0
    %v442 = vsel %vm213, %v437, 0
    %444 = vmatprep.subr.bf16.mxu0 0
    %445 = vmatpush1.bf16.msra.mxu0 0
    %446 = vmatprep.subr.bf16.mxu0 0
    %447 = vmatpush1.bf16.msra.mxu0 0
    %448 = vmatprep.subr.bf16.mxu0 0
    %449 = vmatpush1.bf16.msra.mxu0 0
    %450 = vmatprep.subr.bf16.mxu0 0
    %451 = vmatpush1.bf16.msra.mxu0 0
    %452 = vmatprep.subr.bf16.mxu0 0
    %453 = vmatpush1.bf16.msra.mxu0 0
    %454 = vmatprep.subr.bf16.mxu0 0
    %455 = vmatpush1.bf16.msra.mxu0 0
    %456 = vmatprep.subr.bf16.mxu0 0
    %457 = vmatpush1.bf16.msra.mxu0 0
    %458 = vmatprep.subr.bf16.mxu0 0
    %459 = vmatpush1.bf16.msra.mxu0 %v442
    %460 = vmatprep.subr.bf16.mxu0 0
    %461 = vmatpush2.bf16.msra.mxu0 0
    %462 = vmatprep.subr.bf16.mxu0 0
    %463 = vmatpush2.bf16.msra.mxu0 0
    %464 = vmatprep.subr.bf16.mxu0 0
    %465 = vmatpush2.bf16.msra.mxu0 0
    %466 = vmatprep.subr.bf16.mxu0 0
    %467 = vmatpush2.bf16.msra.mxu0 0
    %468 = vmatprep.subr.bf16.mxu0 0
    %469 = vmatpush2.bf16.msra.mxu0 0
    %470 = vmatprep.subr.bf16.mxu0 0
    %471 = vmatpush2.bf16.msra.mxu0 0
    %472 = vmatprep.subr.bf16.mxu0 0
    %473 = vmatpush2.bf16.msra.mxu0 0
    %474 = vmatprep.subr.bf16.mxu0 0
    %475 = vmatpush2.bf16.msra.mxu0 0
    %476 = vmatprep.mubr.bf16.mxu0 0
    %477 = vmatmul.mubr.bf16.gmra.mxu0 %v439
    %v478 = vpop.f32.mrf.mxu0
    %v479 = vadd.f32 0.0, %v478
    %v480 = vpop.f32.mrf.mxu0
    %v481 = vpop.f32.mrf.mxu0
    %v482 = vpop.f32.mrf.mxu0
    %483 = vdwg.mxu0
    %485 = vrot.lane.b32.xlu0 %v479, 16
    %v486 = vpop.permute.xlu0 %485
    %vm488 = vcmask 195712
    %489 = vst.msk [vmem:[#allocation2] sm:$0xff] %vm488, %v486
    %490 = vrot.lane.b32.xlu0 %v145, 104
    %v491 = vpop.permute.xlu0 %490
    %492 = vrot.lane.b32.xlu0 %v145, 72
    %v493 = vpop.permute.xlu0 %492
    %v495 = vsel %vm149, %v491, 0
    %v498 = vsel %vm149, %v493, 0
    %500 = vmatprep.subr.bf16.mxu0 0
    %501 = vmatpush1.bf16.xpose.msra.mxu0 0
    %502 = vmatprep.subr.bf16.mxu0 0
    %503 = vmatpush1.bf16.xpose.msra.mxu0 0
    %504 = vmatprep.subr.bf16.mxu0 0
    %505 = vmatpush1.bf16.xpose.msra.mxu0 0
    %506 = vmatprep.subr.bf16.mxu0 0
    %507 = vmatpush1.bf16.xpose.msra.mxu0 0
    %508 = vmatprep.subr.bf16.mxu0 0
    %509 = vmatpush1.bf16.xpose.msra.mxu0 0
    %510 = vmatprep.subr.bf16.mxu0 0
    %511 = vmatpush1.bf16.xpose.msra.mxu0 0
    %512 = vmatprep.subr.bf16.mxu0 0
    %513 = vmatpush1.bf16.xpose.msra.mxu0 0
    %514 = vmatprep.subr.bf16.mxu0 0
    %515 = vmatpush1.bf16.xpose.msra.mxu0 %v498
    %516 = vmatprep.subr.bf16.mxu0 0
    %517 = vmatpush2.bf16.xpose.msra.mxu0 0
    %518 = vmatprep.subr.bf16.mxu0 0
    %519 = vmatpush2.bf16.xpose.msra.mxu0 0
    %520 = vmatprep.subr.bf16.mxu0 0
    %521 = vmatpush2.bf16.xpose.msra.mxu0 0
    %522 = vmatprep.subr.bf16.mxu0 0
    %523 = vmatpush2.bf16.xpose.msra.mxu0 0
    %524 = vmatprep.subr.bf16.mxu0 0
    %525 = vmatpush2.bf16.xpose.msra.mxu0 0
    %526 = vmatprep.subr.bf16.mxu0 0
    %527 = vmatpush2.bf16.xpose.msra.mxu0 0
    %528 = vmatprep.subr.bf16.mxu0 0
    %529 = vmatpush2.bf16.xpose.msra.mxu0 0
    %530 = vmatprep.subr.bf16.mxu0 0
    %531 = vmatpush2.bf16.xpose.msra.mxu0 0
    %532 = vmatprep.mubr.bf16.mxu0 0
    %533 = vmatmul.mubr.bf16.gmra.mxu0 %v495
    %v534 = vpop.f32.mrf.mxu0
    %v535 = vadd.f32 %v80, %v534
    %v536 = vpop.f32.mrf.mxu0
    %v537 = vpop.f32.mrf.mxu0
    %v538 = vpop.f32.mrf.mxu0
    %539 = vdwg.mxu0
    %v540 = vsel %vm149, %v535, -inf
    %541 = vmax.xlane.f32.xlu0 %v540
    %v542 = vpop.xlane.xlu0 %541
    %v543 = vsub.f32 %v535, %v542
    %v544 = vmul.f32 %v543, 1.442695
    %v545 = vpow.pop %v544
    %v546 = vsel %vm149, %v545, 0.0
    %547 = vadd.xlane.f32.xlu0 %v546
    %v548 = vpop.xlane.xlu0 %547
    %v549 = vrcp.pop %v548
    %v550 = vmul.f32 %v545, %v549
    %v551 = vpack.c.bf16 %v550, %v550
    %552 = vrot.lane.b32.xlu0 %v145, 40
    %v553 = vpop.permute.xlu0 %552
    %v555 = vsel %vm149, %v551, 0
    %v558 = vsel %vm213, %v553, 0
    %560 = vmatprep.subr.bf16.mxu0 0
    %561 = vmatpush1.bf16.msra.mxu0 0
    %562 = vmatprep.subr.bf16.mxu0 0
    %563 = vmatpush1.bf16.msra.mxu0 0
    %564 = vmatprep.subr.bf16.mxu0 0
    %565 = vmatpush1.bf16.msra.mxu0 0
    %566 = vmatprep.subr.bf16.mxu0 0
    %567 = vmatpush1.bf16.msra.mxu0 0
    %568 = vmatprep.subr.bf16.mxu0 0
    %569 = vmatpush1.bf16.msra.mxu0 0
    %570 = vmatprep.subr.bf16.mxu0 0
    %571 = vmatpush1.bf16.msra.mxu0 0
    %572 = vmatprep.subr.bf16.mxu0 0
    %573 = vmatpush1.bf16.msra.mxu0 0
    %574 = vmatprep.subr.bf16.mxu0 0
    %575 = vmatpush1.bf16.msra.mxu0 %v558
    %576 = vmatprep.subr.bf16.mxu0 0
    %577 = vmatpush2.bf16.msra.mxu0 0
    %578 = vmatprep.subr.bf16.mxu0 0
    %579 = vmatpush2.bf16.msra.mxu0 0
    %580 = vmatprep.subr.bf16.mxu0 0
    %581 = vmatpush2.bf16.msra.mxu0 0
    %582 = vmatprep.subr.bf16.mxu0 0
    %583 = vmatpush2.bf16.msra.mxu0 0
    %584 = vmatprep.subr.bf16.mxu0 0
    %585 = vmatpush2.bf16.msra.mxu0 0
    %586 = vmatprep.subr.bf16.mxu0 0
    %587 = vmatpush2.bf16.msra.mxu0 0
    %588 = vmatprep.subr.bf16.mxu0 0
    %589 = vmatpush2.bf16.msra.mxu0 0
    %590 = vmatprep.subr.bf16.mxu0 0
    %591 = vmatpush2.bf16.msra.mxu0 0
    %592 = vmatprep.mubr.bf16.mxu0 0
    %593 = vmatmul.mubr.bf16.gmra.mxu0 %v555
    %v594 = vpop.f32.mrf.mxu0
    %v595 = vadd.f32 0.0, %v594
    %v596 = vpop.f32.mrf.mxu0
    %v597 = vpop.f32.mrf.mxu0
    %v598 = vpop.f32.mrf.mxu0
    %599 = vdwg.mxu0
    %601 = vrot.lane.b32.xlu0 %v595, 24
    %v602 = vpop.permute.xlu0 %601
    %vm604 = vcmask 261312
    %605 = vst.msk [vmem:[#allocation2] sm:$0xff] %vm604, %v602
    %v606 = vrot.slane %v145, 4
    %607 = vrot.lane.b32.xlu0 %v606, 96
    %v608 = vpop.permute.xlu0 %607
    %v610 = vsel %vm149, %v606, 0
    %v613 = vsel %vm149, %v608, 0
    %615 = vmatprep.subr.bf16.mxu0 0
    %616 = vmatpush1.bf16.xpose.msra.mxu0 0
    %617 = vmatprep.subr.bf16.mxu0 0
    %618 = vmatpush1.bf16.xpose.msra.mxu0 0
    %619 = vmatprep.subr.bf16.mxu0 0
    %620 = vmatpush1.bf16.xpose.msra.mxu0 0
    %621 = vmatprep.subr.bf16.mxu0 0
    %622 = vmatpush1.bf16.xpose.msra.mxu0 0
    %623 = vmatprep.subr.bf16.mxu0 0
    %624 = vmatpush1.bf16.xpose.msra.mxu0 0
    %625 = vmatprep.subr.bf16.mxu0 0
    %626 = vmatpush1.bf16.xpose.msra.mxu0 0
    %627 = vmatprep.subr.bf16.mxu0 0
    %628 = vmatpush1.bf16.xpose.msra.mxu0 0
    %629 = vmatprep.subr.bf16.mxu0 0
    %630 = vmatpush1.bf16.xpose.msra.mxu0 %v613
    %631 = vmatprep.subr.bf16.mxu0 0
    %632 = vmatpush2.bf16.xpose.msra.mxu0 0
    %633 = vmatprep.subr.bf16.mxu0 0
    %634 = vmatpush2.bf16.xpose.msra.mxu0 0
    %635 = vmatprep.subr.bf16.mxu0 0
    %636 = vmatpush2.bf16.xpose.msra.mxu0 0
    %637 = vmatprep.subr.bf16.mxu0 0
    %638 = vmatpush2.bf16.xpose.msra.mxu0 0
    %639 = vmatprep.subr.bf16.mxu0 0
    %640 = vmatpush2.bf16.xpose.msra.mxu0 0
    %641 = vmatprep.subr.bf16.mxu0 0
    %642 = vmatpush2.bf16.xpose.msra.mxu0 0
    %643 = vmatprep.subr.bf16.mxu0 0
    %644 = vmatpush2.bf16.xpose.msra.mxu0 0
    %645 = vmatprep.subr.bf16.mxu0 0
    %646 = vmatpush2.bf16.xpose.msra.mxu0 0
    %647 = vmatprep.mubr.bf16.mxu0 0
    %648 = vmatmul.mubr.bf16.gmra.mxu0 %v610
    %v649 = vpop.f32.mrf.mxu0
    %v650 = vadd.f32 %v85, %v649
    %v651 = vpop.f32.mrf.mxu0
    %v652 = vpop.f32.mrf.mxu0
    %v653 = vpop.f32.mrf.mxu0
    %654 = vdwg.mxu0
    %v655 = vsel %vm149, %v650, -inf
    %656 = vmax.xlane.f32.xlu0 %v655
    %v657 = vpop.xlane.xlu0 %656
    %v658 = vsub.f32 %v650, %v657
    %v659 = vmul.f32 %v658, 1.442695
    %v660 = vpow.pop %v659
    %v661 = vsel %vm149, %v660, 0.0
    %662 = vadd.xlane.f32.xlu0 %v661
    %v663 = vpop.xlane.xlu0 %662
    %v664 = vrcp.pop %v663
    %v665 = vmul.f32 %v660, %v664
    %v666 = vpack.c.bf16 %v665, %v665
    %667 = vrot.lane.b32.xlu0 %v606, 64
    %v668 = vpop.permute.xlu0 %667
    %v670 = vsel %vm149, %v666, 0
    %v673 = vsel %vm213, %v668, 0
    %675 = vmatprep.subr.bf16.mxu0 0
    %676 = vmatpush1.bf16.msra.mxu0 0
    %677 = vmatprep.subr.bf16.mxu0 0
    %678 = vmatpush1.bf16.msra.mxu0 0
    %679 = vmatprep.subr.bf16.mxu0 0
    %680 = vmatpush1.bf16.msra.mxu0 0
    %681 = vmatprep.subr.bf16.mxu0 0
    %682 = vmatpush1.bf16.msra.mxu0 0
    %683 = vmatprep.subr.bf16.mxu0 0
    %684 = vmatpush1.bf16.msra.mxu0 0
    %685 = vmatprep.subr.bf16.mxu0 0
    %686 = vmatpush1.bf16.msra.mxu0 0
    %687 = vmatprep.subr.bf16.mxu0 0
    %688 = vmatpush1.bf16.msra.mxu0 0
    %689 = vmatprep.subr.bf16.mxu0 0
    %690 = vmatpush1.bf16.msra.mxu0 %v673
    %691 = vmatprep.subr.bf16.mxu0 0
    %692 = vmatpush2.bf16.msra.mxu0 0
    %693 = vmatprep.subr.bf16.mxu0 0
    %694 = vmatpush2.bf16.msra.mxu0 0
    %695 = vmatprep.subr.bf16.mxu0 0
    %696 = vmatpush2.bf16.msra.mxu0 0
    %697 = vmatprep.subr.bf16.mxu0 0
    %698 = vmatpush2.bf16.msra.mxu0 0
    %699 = vmatprep.subr.bf16.mxu0 0
    %700 = vmatpush2.bf16.msra.mxu0 0
    %701 = vmatprep.subr.bf16.mxu0 0
    %702 = vmatpush2.bf16.msra.mxu0 0
    %703 = vmatprep.subr.bf16.mxu0 0
    %704 = vmatpush2.bf16.msra.mxu0 0
    %705 = vmatprep.subr.bf16.mxu0 0
    %706 = vmatpush2.bf16.msra.mxu0 0
    %707 = vmatprep.mubr.bf16.mxu0 0
    %708 = vmatmul.mubr.bf16.gmra.mxu0 %v670
    %v709 = vpop.f32.mrf.mxu0
    %v710 = vadd.f32 0.0, %v709
    %v711 = vpop.f32.mrf.mxu0
    %v712 = vpop.f32.mrf.mxu0
    %v713 = vpop.f32.mrf.mxu0
    %714 = vdwg.mxu0
    %715 = vst.msk [vmem:[#allocation2 + $0x8] sm:$0xff] %vm149, %v710
    %716 = vrot.lane.b32.xlu0 %v606, 120
    %v717 = vpop.permute.xlu0 %716
    %718 = vrot.lane.b32.xlu0 %v606, 88
    %v719 = vpop.permute.xlu0 %718
    %v721 = vsel %vm149, %v717, 0
    %v724 = vsel %vm149, %v719, 0
    %726 = vmatprep.subr.bf16.mxu0 0
    %727 = vmatpush1.bf16.xpose.msra.mxu0 0
    %728 = vmatprep.subr.bf16.mxu0 0
    %729 = vmatpush1.bf16.xpose.msra.mxu0 0
    %730 = vmatprep.subr.bf16.mxu0 0
    %731 = vmatpush1.bf16.xpose.msra.mxu0 0
    %732 = vmatprep.subr.bf16.mxu0 0
    %733 = vmatpush1.bf16.xpose.msra.mxu0 0
    %734 = vmatprep.subr.bf16.mxu0 0
    %735 = vmatpush1.bf16.xpose.msra.mxu0 0
    %736 = vmatprep.subr.bf16.mxu0 0
    %737 = vmatpush1.bf16.xpose.msra.mxu0 0
    %738 = vmatprep.subr.bf16.mxu0 0
    %739 = vmatpush1.bf16.xpose.msra.mxu0 0
    %740 = vmatprep.subr.bf16.mxu0 0
    %741 = vmatpush1.bf16.xpose.msra.mxu0 %v724
    %742 = vmatprep.subr.bf16.mxu0 0
    %743 = vmatpush2.bf16.xpose.msra.mxu0 0
    %744 = vmatprep.subr.bf16.mxu0 0
    %745 = vmatpush2.bf16.xpose.msra.mxu0 0
    %746 = vmatprep.subr.bf16.mxu0 0
    %747 = vmatpush2.bf16.xpose.msra.mxu0 0
    %748 = vmatprep.subr.bf16.mxu0 0
    %749 = vmatpush2.bf16.xpose.msra.mxu0 0
    %750 = vmatprep.subr.bf16.mxu0 0
    %751 = vmatpush2.bf16.xpose.msra.mxu0 0
    %752 = vmatprep.subr.bf16.mxu0 0
    %753 = vmatpush2.bf16.xpose.msra.mxu0 0
    %754 = vmatprep.subr.bf16.mxu0 0
    %755 = vmatpush2.bf16.xpose.msra.mxu0 0
    %756 = vmatprep.subr.bf16.mxu0 0
    %757 = vmatpush2.bf16.xpose.msra.mxu0 0
    %758 = vmatprep.mubr.bf16.mxu0 0
    %759 = vmatmul.mubr.bf16.gmra.mxu0 %v721
    %v760 = vpop.f32.mrf.mxu0
    %v761 = vadd.f32 %v85, %v760
    %v762 = vpop.f32.mrf.mxu0
    %v763 = vpop.f32.mrf.mxu0
    %v764 = vpop.f32.mrf.mxu0
    %765 = vdwg.mxu0
    %v766 = vsel %vm149, %v761, -inf
    %767 = vmax.xlane.f32.xlu0 %v766
    %v768 = vpop.xlane.xlu0 %767
    %v769 = vsub.f32 %v761, %v768
    %v770 = vmul.f32 %v769, 1.442695
    %v771 = vpow.pop %v770
    %v772 = vsel %vm149, %v771, 0.0
    %773 = vadd.xlane.f32.xlu0 %v772
    %v774 = vpop.xlane.xlu0 %773
    %v775 = vrcp.pop %v774
    %v776 = vmul.f32 %v771, %v775
    %v777 = vpack.c.bf16 %v776, %v776
    %778 = vrot.lane.b32.xlu0 %v606, 56
    %v779 = vpop.permute.xlu0 %778
    %v781 = vsel %vm149, %v777, 0
    %v784 = vsel %vm213, %v779, 0
    %786 = vmatprep.subr.bf16.mxu0 0
    %787 = vmatpush1.bf16.msra.mxu0 0
    %788 = vmatprep.subr.bf16.mxu0 0
    %789 = vmatpush1.bf16.msra.mxu0 0
    %790 = vmatprep.subr.bf16.mxu0 0
    %791 = vmatpush1.bf16.msra.mxu0 0
    %792 = vmatprep.subr.bf16.mxu0 0
    %793 = vmatpush1.bf16.msra.mxu0 0
    %794 = vmatprep.subr.bf16.mxu0 0
    %795 = vmatpush1.bf16.msra.mxu0 0
    %796 = vmatprep.subr.bf16.mxu0 0
    %797 = vmatpush1.bf16.msra.mxu0 0
    %798 = vmatprep.subr.bf16.mxu0 0
    %799 = vmatpush1.bf16.msra.mxu0 0
    %800 = vmatprep.subr.bf16.mxu0 0
    %801 = vmatpush1.bf16.msra.mxu0 %v784
    %802 = vmatprep.subr.bf16.mxu0 0
    %803 = vmatpush2.bf16.msra.mxu0 0
    %804 = vmatprep.subr.bf16.mxu0 0
    %805 = vmatpush2.bf16.msra.mxu0 0
    %806 = vmatprep.subr.bf16.mxu0 0
    %807 = vmatpush2.bf16.msra.mxu0 0
    %808 = vmatprep.subr.bf16.mxu0 0
    %809 = vmatpush2.bf16.msra.mxu0 0
    %810 = vmatprep.subr.bf16.mxu0 0
    %811 = vmatpush2.bf16.msra.mxu0 0
    %812 = vmatprep.subr.bf16.mxu0 0
    %813 = vmatpush2.bf16.msra.mxu0 0
    %814 = vmatprep.subr.bf16.mxu0 0
    %815 = vmatpush2.bf16.msra.mxu0 0
    %816 = vmatprep.subr.bf16.mxu0 0
    %817 = vmatpush2.bf16.msra.mxu0 0
    %818 = vmatprep.mubr.bf16.mxu0 0
    %819 = vmatmul.mubr.bf16.gmra.mxu0 %v781
    %v820 = vpop.f32.mrf.mxu0
    %v821 = vadd.f32 0.0, %v820
    %v822 = vpop.f32.mrf.mxu0
    %v823 = vpop.f32.mrf.mxu0
    %v824 = vpop.f32.mrf.mxu0
    %825 = vdwg.mxu0
    %827 = vrot.lane.b32.xlu0 %v821, 8
    %v828 = vpop.permute.xlu0 %827
    %830 = vst.msk [vmem:[#allocation2 + $0x8] sm:$0xff] %vm372, %v828
    %831 = vrot.lane.b32.xlu0 %v606, 112
    %v832 = vpop.permute.xlu0 %831
    %833 = vrot.lane.b32.xlu0 %v606, 80
    %v834 = vpop.permute.xlu0 %833
    %v836 = vsel %vm149, %v832, 0
    %v839 = vsel %vm149, %v834, 0
    %841 = vmatprep.subr.bf16.mxu0 0
    %842 = vmatpush1.bf16.xpose.msra.mxu0 0
    %843 = vmatprep.subr.bf16.mxu0 0
    %844 = vmatpush1.bf16.xpose.msra.mxu0 0
    %845 = vmatprep.subr.bf16.mxu0 0
    %846 = vmatpush1.bf16.xpose.msra.mxu0 0
    %847 = vmatprep.subr.bf16.mxu0 0
    %848 = vmatpush1.bf16.xpose.msra.mxu0 0
    %849 = vmatprep.subr.bf16.mxu0 0
    %850 = vmatpush1.bf16.xpose.msra.mxu0 0
    %851 = vmatprep.subr.bf16.mxu0 0
    %852 = vmatpush1.bf16.xpose.msra.mxu0 0
    %853 = vmatprep.subr.bf16.mxu0 0
    %854 = vmatpush1.bf16.xpose.msra.mxu0 0
    %855 = vmatprep.subr.bf16.mxu0 0
    %856 = vmatpush1.bf16.xpose.msra.mxu0 %v839
    %857 = vmatprep.subr.bf16.mxu0 0
    %858 = vmatpush2.bf16.xpose.msra.mxu0 0
    %859 = vmatprep.subr.bf16.mxu0 0
    %860 = vmatpush2.bf16.xpose.msra.mxu0 0
    %861 = vmatprep.subr.bf16.mxu0 0
    %862 = vmatpush2.bf16.xpose.msra.mxu0 0
    %863 = vmatprep.subr.bf16.mxu0 0
    %864 = vmatpush2.bf16.xpose.msra.mxu0 0
    %865 = vmatprep.subr.bf16.mxu0 0
    %866 = vmatpush2.bf16.xpose.msra.mxu0 0
    %867 = vmatprep.subr.bf16.mxu0 0
    %868 = vmatpush2.bf16.xpose.msra.mxu0 0
    %869 = vmatprep.subr.bf16.mxu0 0
    %870 = vmatpush2.bf16.xpose.msra.mxu0 0
    %871 = vmatprep.subr.bf16.mxu0 0
    %872 = vmatpush2.bf16.xpose.msra.mxu0 0
    %873 = vmatprep.mubr.bf16.mxu0 0
    %874 = vmatmul.mubr.bf16.gmra.mxu0 %v836
    %v875 = vpop.f32.mrf.mxu0
    %v876 = vadd.f32 %v85, %v875
    %v877 = vpop.f32.mrf.mxu0
    %v878 = vpop.f32.mrf.mxu0
    %v879 = vpop.f32.mrf.mxu0
    %880 = vdwg.mxu0
    %v881 = vsel %vm149, %v876, -inf
    %882 = vmax.xlane.f32.xlu0 %v881
    %v883 = vpop.xlane.xlu0 %882
    %v884 = vsub.f32 %v876, %v883
    %v885 = vmul.f32 %v884, 1.442695
    %v886 = vpow.pop %v885
    %v887 = vsel %vm149, %v886, 0.0
    %888 = vadd.xlane.f32.xlu0 %v887
    %v889 = vpop.xlane.xlu0 %888
    %v890 = vrcp.pop %v889
    %v891 = vmul.f32 %v886, %v890
    %v892 = vpack.c.bf16 %v891, %v891
    %893 = vrot.lane.b32.xlu0 %v606, 48
    %v894 = vpop.permute.xlu0 %893
    %v896 = vsel %vm149, %v892, 0
    %v899 = vsel %vm213, %v894, 0
    %901 = vmatprep.subr.bf16.mxu0 0
    %902 = vmatpush1.bf16.msra.mxu0 0
    %903 = vmatprep.subr.bf16.mxu0 0
    %904 = vmatpush1.bf16.msra.mxu0 0
    %905 = vmatprep.subr.bf16.mxu0 0
    %906 = vmatpush1.bf16.msra.mxu0 0
    %907 = vmatprep.subr.bf16.mxu0 0
    %908 = vmatpush1.bf16.msra.mxu0 0
    %909 = vmatprep.subr.bf16.mxu0 0
    %910 = vmatpush1.bf16.msra.mxu0 0
    %911 = vmatprep.subr.bf16.mxu0 0
    %912 = vmatpush1.bf16.msra.mxu0 0
    %913 = vmatprep.subr.bf16.mxu0 0
    %914 = vmatpush1.bf16.msra.mxu0 0
    %915 = vmatprep.subr.bf16.mxu0 0
    %916 = vmatpush1.bf16.msra.mxu0 %v899
    %917 = vmatprep.subr.bf16.mxu0 0
    %918 = vmatpush2.bf16.msra.mxu0 0
    %919 = vmatprep.subr.bf16.mxu0 0
    %920 = vmatpush2.bf16.msra.mxu0 0
    %921 = vmatprep.subr.bf16.mxu0 0
    %922 = vmatpush2.bf16.msra.mxu0 0
    %923 = vmatprep.subr.bf16.mxu0 0
    %924 = vmatpush2.bf16.msra.mxu0 0
    %925 = vmatprep.subr.bf16.mxu0 0
    %926 = vmatpush2.bf16.msra.mxu0 0
    %927 = vmatprep.subr.bf16.mxu0 0
    %928 = vmatpush2.bf16.msra.mxu0 0
    %929 = vmatprep.subr.bf16.mxu0 0
    %930 = vmatpush2.bf16.msra.mxu0 0
    %931 = vmatprep.subr.bf16.mxu0 0
    %932 = vmatpush2.bf16.msra.mxu0 0
    %933 = vmatprep.mubr.bf16.mxu0 0
    %934 = vmatmul.mubr.bf16.gmra.mxu0 %v896
    %v935 = vpop.f32.mrf.mxu0
    %v936 = vadd.f32 0.0, %v935
    %v937 = vpop.f32.mrf.mxu0
    %v938 = vpop.f32.mrf.mxu0
    %v939 = vpop.f32.mrf.mxu0
    %940 = vdwg.mxu0
    %942 = vrot.lane.b32.xlu0 %v936, 16
    %v943 = vpop.permute.xlu0 %942
    %945 = vst.msk [vmem:[#allocation2 + $0x8] sm:$0xff] %vm488, %v943
    %946 = vrot.lane.b32.xlu0 %v606, 104
    %v947 = vpop.permute.xlu0 %946
    %948 = vrot.lane.b32.xlu0 %v606, 72
    %v949 = vpop.permute.xlu0 %948
    %v951 = vsel %vm149, %v947, 0
    %v954 = vsel %vm149, %v949, 0
    %956 = vmatprep.subr.bf16.mxu0 0
    %957 = vmatpush1.bf16.xpose.msra.mxu0 0
    %958 = vmatprep.subr.bf16.mxu0 0
    %959 = vmatpush1.bf16.xpose.msra.mxu0 0
    %960 = vmatprep.subr.bf16.mxu0 0
    %961 = vmatpush1.bf16.xpose.msra.mxu0 0
    %962 = vmatprep.subr.bf16.mxu0 0
    %963 = vmatpush1.bf16.xpose.msra.mxu0 0
    %964 = vmatprep.subr.bf16.mxu0 0
    %965 = vmatpush1.bf16.xpose.msra.mxu0 0
    %966 = vmatprep.subr.bf16.mxu0 0
    %967 = vmatpush1.bf16.xpose.msra.mxu0 0
    %968 = vmatprep.subr.bf16.mxu0 0
    %969 = vmatpush1.bf16.xpose.msra.mxu0 0
    %970 = vmatprep.subr.bf16.mxu0 0
    %971 = vmatpush1.bf16.xpose.msra.mxu0 %v954
    %972 = vmatprep.subr.bf16.mxu0 0
    %973 = vmatpush2.bf16.xpose.msra.mxu0 0
    %974 = vmatprep.subr.bf16.mxu0 0
    %975 = vmatpush2.bf16.xpose.msra.mxu0 0
    %976 = vmatprep.subr.bf16.mxu0 0
    %977 = vmatpush2.bf16.xpose.msra.mxu0 0
    %978 = vmatprep.subr.bf16.mxu0 0
    %979 = vmatpush2.bf16.xpose.msra.mxu0 0
    %980 = vmatprep.subr.bf16.mxu0 0
    %981 = vmatpush2.bf16.xpose.msra.mxu0 0
    %982 = vmatprep.subr.bf16.mxu0 0
    %983 = vmatpush2.bf16.xpose.msra.mxu0 0
    %984 = vmatprep.subr.bf16.mxu0 0
    %985 = vmatpush2.bf16.xpose.msra.mxu0 0
    %986 = vmatprep.subr.bf16.mxu0 0
    %987 = vmatpush2.bf16.xpose.msra.mxu0 0
    %988 = vmatprep.mubr.bf16.mxu0 0
    %989 = vmatmul.mubr.bf16.gmra.mxu0 %v951
    %v990 = vpop.f32.mrf.mxu0
    %v991 = vadd.f32 %v85, %v990
    %v992 = vpop.f32.mrf.mxu0
    %v993 = vpop.f32.mrf.mxu0
    %v994 = vpop.f32.mrf.mxu0
    %995 = vdwg.mxu0
    %v996 = vsel %vm149, %v991, -inf
    %997 = vmax.xlane.f32.xlu0 %v996
    %v998 = vpop.xlane.xlu0 %997
    %v999 = vsub.f32 %v991, %v998
    %v1000 = vmul.f32 %v999, 1.442695
    %v1001 = vpow.pop %v1000
    %v1002 = vsel %vm149, %v1001, 0.0
    %1003 = vadd.xlane.f32.xlu0 %v1002
    %v1004 = vpop.xlane.xlu0 %1003
    %v1005 = vrcp.pop %v1004
    %v1006 = vmul.f32 %v1001, %v1005
    %v1007 = vpack.c.bf16 %v1006, %v1006
    %1008 = vrot.lane.b32.xlu0 %v606, 40
    %v1009 = vpop.permute.xlu0 %1008
    %v1011 = vsel %vm149, %v1007, 0
    %v1014 = vsel %vm213, %v1009, 0
    %1016 = vmatprep.subr.bf16.mxu0 0
    %1017 = vmatpush1.bf16.msra.mxu0 0
    %1018 = vmatprep.subr.bf16.mxu0 0
    %1019 = vmatpush1.bf16.msra.mxu0 0
    %1020 = vmatprep.subr.bf16.mxu0 0
    %1021 = vmatpush1.bf16.msra.mxu0 0
    %1022 = vmatprep.subr.bf16.mxu0 0
    %1023 = vmatpush1.bf16.msra.mxu0 0
    %1024 = vmatprep.subr.bf16.mxu0 0
    %1025 = vmatpush1.bf16.msra.mxu0 0
    %1026 = vmatprep.subr.bf16.mxu0 0
    %1027 = vmatpush1.bf16.msra.mxu0 0
    %1028 = vmatprep.subr.bf16.mxu0 0
    %1029 = vmatpush1.bf16.msra.mxu0 0
    %1030 = vmatprep.subr.bf16.mxu0 0
    %1031 = vmatpush1.bf16.msra.mxu0 %v1014
    %1032 = vmatprep.subr.bf16.mxu0 0
    %1033 = vmatpush2.bf16.msra.mxu0 0
    %1034 = vmatprep.subr.bf16.mxu0 0
    %1035 = vmatpush2.bf16.msra.mxu0 0
    %1036 = vmatprep.subr.bf16.mxu0 0
    %1037 = vmatpush2.bf16.msra.mxu0 0
    %1038 = vmatprep.subr.bf16.mxu0 0
    %1039 = vmatpush2.bf16.msra.mxu0 0
    %1040 = vmatprep.subr.bf16.mxu0 0
    %1041 = vmatpush2.bf16.msra.mxu0 0
    %1042 = vmatprep.subr.bf16.mxu0 0
    %1043 = vmatpush2.bf16.msra.mxu0 0
    %1044 = vmatprep.subr.bf16.mxu0 0
    %1045 = vmatpush2.bf16.msra.mxu0 0
    %1046 = vmatprep.subr.bf16.mxu0 0
    %1047 = vmatpush2.bf16.msra.mxu0 0
    %1048 = vmatprep.mubr.bf16.mxu0 0
    %1049 = vmatmul.mubr.bf16.gmra.mxu0 %v1011
    %v1050 = vpop.f32.mrf.mxu0
    %v1051 = vadd.f32 0.0, %v1050
    %v1052 = vpop.f32.mrf.mxu0
    %v1053 = vpop.f32.mrf.mxu0
    %v1054 = vpop.f32.mrf.mxu0
    %1055 = vdwg.mxu0
    %1057 = vrot.lane.b32.xlu0 %v1051, 24
    %v1058 = vpop.permute.xlu0 %1057
    %1060 = vst.msk [vmem:[#allocation2 + $0x8] sm:$0xff] %vm604, %v1058
    %v1061 = vld [vmem:[#allocation2] sm:$0xff]
    %v1062 = vld [vmem:[#allocation2 + $0x8] sm:$0xff]
    %v1063 = vld [vmem:[%s5] sm:$0xff]
    %v1064 = vld [vmem:[%s5 + $0x8] sm:$0xff]
    %v1065 = vld [vmem:[%s5 + $0x10] sm:$0xff]
    %v1066 = vld [vmem:[%s5 + $0x18] sm:$0xff]
    %v1067 = vpack.c.bf16 %v1062, %v1061
    %v1068 = vpack.c.bf16 %v1064, %v1063
    %v1069 = vpack.c.bf16 %v1066, %v1065
    %v1070 = vld [vmem:[%s6] sm:$0x1]
    %v1072 = vlaneseq
    %v1073 = vshrl.u32 %v1072, 7
    %v1074 = vsub.s32 0, %v1073
    %v1075 = vrot.slane %v1070, %v1074
    %v1078 = vsel %vm100, %v1067, 0
    %1080 = vmatprep.subr.bf16.mxu0 0
    %1081 = vmatpush1.bf16.msra.mxu0 0
    %1082 = vmatprep.subr.bf16.mxu0 0
    %1083 = vmatpush1.bf16.msra.mxu0 0
    %1084 = vmatprep.subr.bf16.mxu0 0
    %1085 = vmatpush1.bf16.msra.mxu0 0
    %1086 = vmatprep.subr.bf16.mxu0 0
    %1087 = vmatpush1.bf16.msra.mxu0 0
    %1088 = vmatprep.subr.bf16.mxu0 0
    %1089 = vmatpush1.bf16.msra.mxu0 0
    %1090 = vmatprep.subr.bf16.mxu0 0
    %1091 = vmatpush1.bf16.msra.mxu0 0
    %1092 = vmatprep.subr.bf16.mxu0 0
    %1093 = vmatpush1.bf16.msra.mxu0 %v1069
    %1094 = vmatprep.subr.bf16.mxu0 0
    %1095 = vmatpush1.bf16.msra.mxu0 %v1068
    %1096 = vmatprep.subr.bf16.mxu0 0
    %1097 = vmatpush2.bf16.msra.mxu0 0
    %1098 = vmatprep.subr.bf16.mxu0 0
    %1099 = vmatpush2.bf16.msra.mxu0 0
    %1100 = vmatprep.subr.bf16.mxu0 0
    %1101 = vmatpush2.bf16.msra.mxu0 0
    %1102 = vmatprep.subr.bf16.mxu0 0
    %1103 = vmatpush2.bf16.msra.mxu0 0
    %1104 = vmatprep.subr.bf16.mxu0 0
    %1105 = vmatpush2.bf16.msra.mxu0 0
    %1106 = vmatprep.subr.bf16.mxu0 0
    %1107 = vmatpush2.bf16.msra.mxu0 0
    %1108 = vmatprep.subr.bf16.mxu0 0
    %1109 = vmatpush2.bf16.msra.mxu0 0
    %1110 = vmatprep.subr.bf16.mxu0 0
    %1111 = vmatpush2.bf16.msra.mxu0 0
    %1112 = vmatprep.mubr.bf16.mxu0 0
    %1113 = vmatmul.mubr.bf16.gmra.mxu0 %v1078
    %v1114 = vpop.f32.mrf.mxu0
    %v1115 = vadd.f32 %v1075, %v1114
    %v1116 = vpop.f32.mrf.mxu0
    %v1117 = vpop.f32.mrf.mxu0
    %v1118 = vadd.f32 %v1075, %v1117
    %v1119 = vpop.f32.mrf.mxu0
    %1120 = vdwg.mxu0
    %v1121 = vadd.f32 %v73, %v1115
    %v1122 = vadd.f32 %v74, %v1118
    %v1123 = vld [vmem:[%s7] sm:$0x1]
    %v1124 = vld [vmem:[%s8] sm:$0x1]
    %v1125 = vsel %vm100, %v1121, 0.0
    %1126 = vadd.xlane.f32.xlu0 %v1125
    %v1127 = vpop.xlane.xlu0 %1126
    %v1128 = vsel %vm100, %v1122, 0.0
    %1129 = vadd.xlane.f32.xlu0 %v1128
    %v1130 = vpop.xlane.xlu0 %1129
    %v1131 = vrcp.pop 32.0
    %v1132 = vmul.f32 %v1127, %v1131
    %v1133 = vmul.f32 %v1130, %v1131
    %v1134 = vsub.f32 %v1121, %v1132
    %v1135 = vsub.f32 %v1122, %v1133
    %v1136 = vmul.f32 %v1134, %v1134
    %v1137 = vmul.f32 %v1135, %v1135
    %v1138 = vsel %vm100, %v1136, 0.0
    %1139 = vadd.xlane.f32.xlu0 %v1138
    %v1140 = vpop.xlane.xlu0 %1139
    %v1141 = vsel %vm100, %v1137, 0.0
    %1142 = vadd.xlane.f32.xlu0 %v1141
    %v1143 = vpop.xlane.xlu0 %1142
    %v1144 = vmul.f32 %v1140, %v1131
    %v1145 = vmul.f32 %v1143, %v1131
    %v1146 = vadd.f32 %v1144, 1e-05
    %v1147 = vadd.f32 %v1145, 1e-05
    %v1148 = vrsqrt.pop %v1146
    %v1149 = vrsqrt.pop %v1147
    %v1150 = vmul.f32 %v1134, %v1148
    %v1151 = vmul.f32 %v1135, %v1149
    %v1153 = vlaneseq
    %v1154 = vshrl.u32 %v1153, 7
    %v1155 = vsub.s32 0, %v1154
    %v1156 = vrot.slane %v1123, %v1155
    %v1158 = vmul.f32 %v1150, %v1156
    %v1159 = vmul.f32 %v1151, %v1156
    %v1161 = vlaneseq
    %v1162 = vshrl.u32 %v1161, 7
    %v1163 = vsub.s32 0, %v1162
    %v1164 = vrot.slane %v1124, %v1163
    %v1166 = vadd.f32 %v1158, %v1164
    %v1167 = vadd.f32 %v1159, %v1164
    %v1168 = vld [vmem:[%s9] sm:$0xff]
    %v1169 = vld [vmem:[%s9 + $0x8] sm:$0xff]
    %v1170 = vld [vmem:[%s9 + $0x10] sm:$0xff]
    %v1171 = vld [vmem:[%s9 + $0x18] sm:$0xff]
    %v1172 = vpack.c.bf16 %v1167, %v1166
    %v1173 = vpack.c.bf16 %v1169, %v1168
    %v1174 = vpack.c.bf16 %v1171, %v1170
    %v1175 = vld [vmem:[%s10] sm:$0x1]
    %v1177 = vlaneseq
    %v1178 = vshrl.u32 %v1177, 7
    %v1179 = vsub.s32 0, %v1178
    %v1180 = vrot.slane %v1175, %v1179
    %v1183 = vsel %vm100, %v1172, 0
    %1185 = vmatprep.subr.bf16.mxu0 0
    %1186 = vmatpush1.bf16.msra.mxu0 0
    %1187 = vmatprep.subr.bf16.mxu0 0
    %1188 = vmatpush1.bf16.msra.mxu0 0
    %1189 = vmatprep.subr.bf16.mxu0 0
    %1190 = vmatpush1.bf16.msra.mxu0 0
    %1191 = vmatprep.subr.bf16.mxu0 0
    %1192 = vmatpush1.bf16.msra.mxu0 0
    %1193 = vmatprep.subr.bf16.mxu0 0
    %1194 = vmatpush1.bf16.msra.mxu0 0
    %1195 = vmatprep.subr.bf16.mxu0 0
    %1196 = vmatpush1.bf16.msra.mxu0 0
    %1197 = vmatprep.subr.bf16.mxu0 0
    %1198 = vmatpush1.bf16.msra.mxu0 %v1174
    %1199 = vmatprep.subr.bf16.mxu0 0
    %1200 = vmatpush1.bf16.msra.mxu0 %v1173
    %1201 = vmatprep.subr.bf16.mxu0 0
    %1202 = vmatpush2.bf16.msra.mxu0 0
    %1203 = vmatprep.subr.bf16.mxu0 0
    %1204 = vmatpush2.bf16.msra.mxu0 0
    %1205 = vmatprep.subr.bf16.mxu0 0
    %1206 = vmatpush2.bf16.msra.mxu0 0
    %1207 = vmatprep.subr.bf16.mxu0 0
    %1208 = vmatpush2.bf16.msra.mxu0 0
    %1209 = vmatprep.subr.bf16.mxu0 0
    %1210 = vmatpush2.bf16.msra.mxu0 0
    %1211 = vmatprep.subr.bf16.mxu0 0
    %1212 = vmatpush2.bf16.msra.mxu0 0
    %1213 = vmatprep.subr.bf16.mxu0 0
    %1214 = vmatpush2.bf16.msra.mxu0 0
    %1215 = vmatprep.subr.bf16.mxu0 0
    %1216 = vmatpush2.bf16.msra.mxu0 0
    %1217 = vmatprep.mubr.bf16.mxu0 0
    %1218 = vmatmul.mubr.bf16.gmra.mxu0 %v1183
    %v1219 = vpop.f32.mrf.mxu0
    %v1220 = vadd.f32 %v1180, %v1219
    %v1221 = vpop.f32.mrf.mxu0
    %v1222 = vpop.f32.mrf.mxu0
    %v1223 = vadd.f32 %v1180, %v1222
    %v1224 = vpop.f32.mrf.mxu0
    %1225 = vdwg.mxu0
    %v1226 = vmax.f32 %v1220, 0.0
    %v1227 = vmax.f32 %v1223, 0.0
    %v1228 = vld [vmem:[%s11] sm:$0xff]
    %v1229 = vld [vmem:[%s11 + $0x8] sm:$0xff]
    %v1230 = vld [vmem:[%s11 + $0x10] sm:$0xff]
    %v1231 = vld [vmem:[%s11 + $0x18] sm:$0xff]
    %v1232 = vld [vmem:[%s11 + $0x20] sm:$0xff]
    %v1233 = vld [vmem:[%s11 + $0x28] sm:$0xff]
    %v1234 = vld [vmem:[%s11 + $0x30] sm:$0xff]
    %v1235 = vld [vmem:[%s11 + $0x38] sm:$0xff]
    %v1236 = vld [vmem:[%s11 + $0x40] sm:$0xff]
    %v1237 = vld [vmem:[%s11 + $0x48] sm:$0xff]
    %v1238 = vld [vmem:[%s11 + $0x50] sm:$0xff]
    %v1239 = vld [vmem:[%s11 + $0x58] sm:$0xff]
    %v1240 = vld [vmem:[%s11 + $0x60] sm:$0xff]
    %v1241 = vld [vmem:[%s11 + $0x68] sm:$0xff]
    %v1242 = vld [vmem:[%s11 + $0x70] sm:$0xff]
    %v1243 = vld [vmem:[%s11 + $0x78] sm:$0xff]
    %v1244 = vpack.c.bf16 %v1227, %v1226
    %v1245 = vpack.c.bf16 %v1229, %v1228
    %v1246 = vpack.c.bf16 %v1231, %v1230
    %v1247 = vpack.c.bf16 %v1233, %v1232
    %v1248 = vpack.c.bf16 %v1235, %v1234
    %v1249 = vpack.c.bf16 %v1237, %v1236
    %v1250 = vpack.c.bf16 %v1239, %v1238
    %v1251 = vpack.c.bf16 %v1241, %v1240
    %v1252 = vpack.c.bf16 %v1243, %v1242
    %v1253 = vld [vmem:[%s12] sm:$0x1]
    %v1255 = vlaneseq
    %v1256 = vshrl.u32 %v1255, 7
    %v1257 = vsub.s32 0, %v1256
    %v1258 = vrot.slane %v1253, %v1257
    %1260 = vmatprep.subr.bf16.mxu0 0
    %1261 = vmatpush1.bf16.msra.mxu0 %v1252
    %1262 = vmatprep.subr.bf16.mxu0 0
    %1263 = vmatpush1.bf16.msra.mxu0 %v1251
    %1264 = vmatprep.subr.bf16.mxu0 0
    %1265 = vmatpush1.bf16.msra.mxu0 %v1250
    %1266 = vmatprep.subr.bf16.mxu0 0
    %1267 = vmatpush1.bf16.msra.mxu0 %v1249
    %1268 = vmatprep.subr.bf16.mxu0 0
    %1269 = vmatpush1.bf16.msra.mxu0 %v1248
    %1270 = vmatprep.subr.bf16.mxu0 0
    %1271 = vmatpush1.bf16.msra.mxu0 %v1247
    %1272 = vmatprep.subr.bf16.mxu0 0
    %1273 = vmatpush1.bf16.msra.mxu0 %v1246
    %1274 = vmatprep.subr.bf16.mxu0 0
    %1275 = vmatpush1.bf16.msra.mxu0 %v1245
    %1276 = vmatprep.subr.bf16.mxu0 0
    %1277 = vmatpush2.bf16.msra.mxu0 0
    %1278 = vmatprep.subr.bf16.mxu0 0
    %1279 = vmatpush2.bf16.msra.mxu0 0
    %1280 = vmatprep.subr.bf16.mxu0 0
    %1281 = vmatpush2.bf16.msra.mxu0 0
    %1282 = vmatprep.subr.bf16.mxu0 0
    %1283 = vmatpush2.bf16.msra.mxu0 0
    %1284 = vmatprep.subr.bf16.mxu0 0
    %1285 = vmatpush2.bf16.msra.mxu0 0
    %1286 = vmatprep.subr.bf16.mxu0 0
    %1287 = vmatpush2.bf16.msra.mxu0 0
    %1288 = vmatprep.subr.bf16.mxu0 0
    %1289 = vmatpush2.bf16.msra.mxu0 0
    %1290 = vmatprep.subr.bf16.mxu0 0
    %1291 = vmatpush2.bf16.msra.mxu0 0
    %1292 = vmatprep.mubr.bf16.mxu0 0
    %1293 = vmatmul.mubr.bf16.gmra.mxu0 %v1244
    %v1294 = vpop.f32.mrf.mxu0
    %v1295 = vadd.f32 %v1258, %v1294
    %v1296 = vpop.f32.mrf.mxu0
    %v1297 = vpop.f32.mrf.mxu0
    %v1298 = vadd.f32 %v1258, %v1297
    %v1299 = vpop.f32.mrf.mxu0
    %1300 = vdwg.mxu0
    %v1301 = vadd.f32 %v1166, %v1295
    %v1302 = vadd.f32 %v1167, %v1298
    %v1303 = vld [vmem:[%s13] sm:$0x1]
    %v1304 = vld [vmem:[%s14] sm:$0x1]
    %v1305 = vsel %vm100, %v1301, 0.0
    %1306 = vadd.xlane.f32.xlu0 %v1305
    %v1307 = vpop.xlane.xlu0 %1306
    %v1308 = vsel %vm100, %v1302, 0.0
    %1309 = vadd.xlane.f32.xlu0 %v1308
    %v1310 = vpop.xlane.xlu0 %1309
    %v1311 = vmul.f32 %v1307, %v1131
    %v1312 = vmul.f32 %v1310, %v1131
    %v1313 = vsub.f32 %v1301, %v1311
    %v1314 = vsub.f32 %v1302, %v1312
    %v1315 = vmul.f32 %v1313, %v1313
    %v1316 = vmul.f32 %v1314, %v1314
    %v1317 = vsel %vm100, %v1315, 0.0
    %1318 = vadd.xlane.f32.xlu0 %v1317
    %v1319 = vpop.xlane.xlu0 %1318
    %v1320 = vsel %vm100, %v1316, 0.0
    %1321 = vadd.xlane.f32.xlu0 %v1320
    %v1322 = vpop.xlane.xlu0 %1321
    %v1323 = vmul.f32 %v1319, %v1131
    %v1324 = vmul.f32 %v1322, %v1131
    %v1325 = vadd.f32 %v1323, 1e-05
    %v1326 = vadd.f32 %v1324, 1e-05
    %v1327 = vrsqrt.pop %v1325
    %v1328 = vrsqrt.pop %v1326
    %v1329 = vmul.f32 %v1313, %v1327
    %v1330 = vmul.f32 %v1314, %v1328
    %v1332 = vlaneseq
    %v1333 = vshrl.u32 %v1332, 7
    %v1334 = vsub.s32 0, %v1333
    %v1335 = vrot.slane %v1303, %v1334
    %v1337 = vmul.f32 %v1329, %v1335
    %v1338 = vmul.f32 %v1330, %v1335
    %v1340 = vlaneseq
    %v1341 = vshrl.u32 %v1340, 7
    %v1342 = vsub.s32 0, %v1341
    %v1343 = vrot.slane %v1304, %v1342
    %v1345 = vadd.f32 %v1337, %v1343
    %v1346 = vadd.f32 %v1338, %v1343
    %s1347 = scalar_lea.vmem %s3, 32
    %v1348 = vld [vmem:[%s1347] sm:$0xff]
    %v1349 = vld [vmem:[%s1347 + $0x8] sm:$0xff]
    %v1350 = vld [vmem:[%s1347 + $0x10] sm:$0xff]
    %v1351 = vld [vmem:[%s1347 + $0x18] sm:$0xff]
    %v1352 = vpack.c.bf16 %v1346, %v1345
    %v1353 = vpack.c.bf16 %v1349, %v1348
    %v1354 = vpack.c.bf16 %v1351, %v1350
    %s1355 = scalar_lea.vmem %s4, 1
    %v1356 = vld [vmem:[%s1355] sm:$0x1]
    %v1358 = vlaneseq
    %v1359 = vshrl.u32 %v1358, 7
    %v1360 = vsub.s32 0, %v1359
    %v1361 = vrot.slane %v1356, %v1360
    %v1364 = vsel %vm100, %v1352, 0
    %1366 = vmatprep.subr.bf16.mxu0 0
    %1367 = vmatpush1.bf16.msra.mxu0 0
    %1368 = vmatprep.subr.bf16.mxu0 0
    %1369 = vmatpush1.bf16.msra.mxu0 0
    %1370 = vmatprep.subr.bf16.mxu0 0
    %1371 = vmatpush1.bf16.msra.mxu0 0
    %1372 = vmatprep.subr.bf16.mxu0 0
    %1373 = vmatpush1.bf16.msra.mxu0 0
    %1374 = vmatprep.subr.bf16.mxu0 0
    %1375 = vmatpush1.bf16.msra.mxu0 0
    %1376 = vmatprep.subr.bf16.mxu0 0
    %1377 = vmatpush1.bf16.msra.mxu0 0
    %1378 = vmatprep.subr.bf16.mxu0 0
    %1379 = vmatpush1.bf16.msra.mxu0 %v1354
    %1380 = vmatprep.subr.bf16.mxu0 0
    %1381 = vmatpush1.bf16.msra.mxu0 %v1353
    %1382 = vmatprep.subr.bf16.mxu0 0
    %1383 = vmatpush2.bf16.msra.mxu0 0
    %1384 = vmatprep.subr.bf16.mxu0 0
    %1385 = vmatpush2.bf16.msra.mxu0 0
    %1386 = vmatprep.subr.bf16.mxu0 0
    %1387 = vmatpush2.bf16.msra.mxu0 0
    %1388 = vmatprep.subr.bf16.mxu0 0
    %1389 = vmatpush2.bf16.msra.mxu0 0
    %1390 = vmatprep.subr.bf16.mxu0 0
    %1391 = vmatpush2.bf16.msra.mxu0 0
    %1392 = vmatprep.subr.bf16.mxu0 0
    %1393 = vmatpush2.bf16.msra.mxu0 0
    %1394 = vmatprep.subr.bf16.mxu0 0
    %1395 = vmatpush2.bf16.msra.mxu0 0
    %1396 = vmatprep.subr.bf16.mxu0 0
    %1397 = vmatpush2.bf16.msra.mxu0 0
    %1398 = vmatprep.mubr.bf16.mxu0 0
    %1399 = vmatmul.mubr.bf16.gmra.mxu0 %v1364
    %v1400 = vpop.f32.mrf.mxu0
    %v1401 = vadd.f32 %v1361, %v1400
    %v1402 = vpop.f32.mrf.mxu0
    %v1403 = vpop.f32.mrf.mxu0
    %v1404 = vadd.f32 %v1361, %v1403
    %v1405 = vpop.f32.mrf.mxu0
    %1406 = vdwg.mxu0
    %v1407 = vpack.c.bf16 %v1404, %v1401
    %1409 = vrot.lane.b32.xlu0 %v1407, 96
    %v1410 = vpop.permute.xlu0 %1409
    %v1412 = vsel %vm149, %v1407, 0
    %v1415 = vsel %vm149, %v1410, 0
    %1417 = vmatprep.subr.bf16.mxu0 0
    %1418 = vmatpush1.bf16.xpose.msra.mxu0 0
    %1419 = vmatprep.subr.bf16.mxu0 0
    %1420 = vmatpush1.bf16.xpose.msra.mxu0 0
    %1421 = vmatprep.subr.bf16.mxu0 0
    %1422 = vmatpush1.bf16.xpose.msra.mxu0 0
    %1423 = vmatprep.subr.bf16.mxu0 0
    %1424 = vmatpush1.bf16.xpose.msra.mxu0 0
    %1425 = vmatprep.subr.bf16.mxu0 0
    %1426 = vmatpush1.bf16.xpose.msra.mxu0 0
    %1427 = vmatprep.subr.bf16.mxu0 0
    %1428 = vmatpush1.bf16.xpose.msra.mxu0 0
    %1429 = vmatprep.subr.bf16.mxu0 0
    %1430 = vmatpush1.bf16.xpose.msra.mxu0 0
    %1431 = vmatprep.subr.bf16.mxu0 0
    %1432 = vmatpush1.bf16.xpose.msra.mxu0 %v1415
    %1433 = vmatprep.subr.bf16.mxu0 0
    %1434 = vmatpush2.bf16.xpose.msra.mxu0 0
    %1435 = vmatprep.subr.bf16.mxu0 0
    %1436 = vmatpush2.bf16.xpose.msra.mxu0 0
    %1437 = vmatprep.subr.bf16.mxu0 0
    %1438 = vmatpush2.bf16.xpose.msra.mxu0 0
    %1439 = vmatprep.subr.bf16.mxu0 0
    %1440 = vmatpush2.bf16.xpose.msra.mxu0 0
    %1441 = vmatprep.subr.bf16.mxu0 0
    %1442 = vmatpush2.bf16.xpose.msra.mxu0 0
    %1443 = vmatprep.subr.bf16.mxu0 0
    %1444 = vmatpush2.bf16.xpose.msra.mxu0 0
    %1445 = vmatprep.subr.bf16.mxu0 0
    %1446 = vmatpush2.bf16.xpose.msra.mxu0 0
    %1447 = vmatprep.subr.bf16.mxu0 0
    %1448 = vmatpush2.bf16.xpose.msra.mxu0 0
    %1449 = vmatprep.mubr.bf16.mxu0 0
    %1450 = vmatmul.mubr.bf16.gmra.mxu0 %v1412
    %v1451 = vpop.f32.mrf.mxu0
    %v1452 = vadd.f32 %v80, %v1451
    %v1453 = vpop.f32.mrf.mxu0
    %v1454 = vpop.f32.mrf.mxu0
    %v1455 = vpop.f32.mrf.mxu0
    %1456 = vdwg.mxu0
    %v1457 = vsel %vm149, %v1452, -inf
    %1458 = vmax.xlane.f32.xlu0 %v1457
    %v1459 = vpop.xlane.xlu0 %1458
    %v1460 = vsub.f32 %v1452, %v1459
    %v1461 = vmul.f32 %v1460, 1.442695
    %v1462 = vpow.pop %v1461
    %v1463 = vsel %vm149, %v1462, 0.0
    %1464 = vadd.xlane.f32.xlu0 %v1463
    %v1465 = vpop.xlane.xlu0 %1464
    %v1466 = vrcp.pop %v1465
    %v1467 = vmul.f32 %v1462, %v1466
    %v1468 = vpack.c.bf16 %v1467, %v1467
    %1469 = vrot.lane.b32.xlu0 %v1407, 64
    %v1470 = vpop.permute.xlu0 %1469
    %v1472 = vsel %vm149, %v1468, 0
    %v1475 = vsel %vm213, %v1470, 0
    %1477 = vmatprep.subr.bf16.mxu0 0
    %1478 = vmatpush1.bf16.msra.mxu0 0
    %1479 = vmatprep.subr.bf16.mxu0 0
    %1480 = vmatpush1.bf16.msra.mxu0 0
    %1481 = vmatprep.subr.bf16.mxu0 0
    %1482 = vmatpush1.bf16.msra.mxu0 0
    %1483 = vmatprep.subr.bf16.mxu0 0
    %1484 = vmatpush1.bf16.msra.mxu0 0
    %1485 = vmatprep.subr.bf16.mxu0 0
    %1486 = vmatpush1.bf16.msra.mxu0 0
    %1487 = vmatprep.subr.bf16.mxu0 0
    %1488 = vmatpush1.bf16.msra.mxu0 0
    %1489 = vmatprep.subr.bf16.mxu0 0
    %1490 = vmatpush1.bf16.msra.mxu0 0
    %1491 = vmatprep.subr.bf16.mxu0 0
    %1492 = vmatpush1.bf16.msra.mxu0 %v1475
    %1493 = vmatprep.subr.bf16.mxu0 0
    %1494 = vmatpush2.bf16.msra.mxu0 0
    %1495 = vmatprep.subr.bf16.mxu0 0
    %1496 = vmatpush2.bf16.msra.mxu0 0
    %1497 = vmatprep.subr.bf16.mxu0 0
    %1498 = vmatpush2.bf16.msra.mxu0 0
    %1499 = vmatprep.subr.bf16.mxu0 0
    %1500 = vmatpush2.bf16.msra.mxu0 0
    %1501 = vmatprep.subr.bf16.mxu0 0
    %1502 = vmatpush2.bf16.msra.mxu0 0
    %1503 = vmatprep.subr.bf16.mxu0 0
    %1504 = vmatpush2.bf16.msra.mxu0 0
    %1505 = vmatprep.subr.bf16.mxu0 0
    %1506 = vmatpush2.bf16.msra.mxu0 0
    %1507 = vmatprep.subr.bf16.mxu0 0
    %1508 = vmatpush2.bf16.msra.mxu0 0
    %1509 = vmatprep.mubr.bf16.mxu0 0
    %1510 = vmatmul.mubr.bf16.gmra.mxu0 %v1472
    %v1511 = vpop.f32.mrf.mxu0
    %v1512 = vadd.f32 0.0, %v1511
    %v1513 = vpop.f32.mrf.mxu0
    %v1514 = vpop.f32.mrf.mxu0
    %v1515 = vpop.f32.mrf.mxu0
    %1516 = vdwg.mxu0
    %1517 = vst.msk [vmem:[#allocation2] sm:$0xff] %vm149, %v1512
    %1518 = vrot.lane.b32.xlu0 %v1407, 120
    %v1519 = vpop.permute.xlu0 %1518
    %1520 = vrot.lane.b32.xlu0 %v1407, 88
    %v1521 = vpop.permute.xlu0 %1520
    %v1523 = vsel %vm149, %v1519, 0
    %v1526 = vsel %vm149, %v1521, 0
    %1528 = vmatprep.subr.bf16.mxu0 0
    %1529 = vmatpush1.bf16.xpose.msra.mxu0 0
    %1530 = vmatprep.subr.bf16.mxu0 0
    %1531 = vmatpush1.bf16.xpose.msra.mxu0 0
    %1532 = vmatprep.subr.bf16.mxu0 0
    %1533 = vmatpush1.bf16.xpose.msra.mxu0 0
    %1534 = vmatprep.subr.bf16.mxu0 0
    %1535 = vmatpush1.bf16.xpose.msra.mxu0 0
    %1536 = vmatprep.subr.bf16.mxu0 0
    %1537 = vmatpush1.bf16.xpose.msra.mxu0 0
    %1538 = vmatprep.subr.bf16.mxu0 0
    %1539 = vmatpush1.bf16.xpose.msra.mxu0 0
    %1540 = vmatprep.subr.bf16.mxu0 0
    %1541 = vmatpush1.bf16.xpose.msra.mxu0 0
    %1542 = vmatprep.subr.bf16.mxu0 0
    %1543 = vmatpush1.bf16.xpose.msra.mxu0 %v1526
    %1544 = vmatprep.subr.bf16.mxu0 0
    %1545 = vmatpush2.bf16.xpose.msra.mxu0 0
    %1546 = vmatprep.subr.bf16.mxu0 0
    %1547 = vmatpush2.bf16.xpose.msra.mxu0 0
    %1548 = vmatprep.subr.bf16.mxu0 0
    %1549 = vmatpush2.bf16.xpose.msra.mxu0 0
    %1550 = vmatprep.subr.bf16.mxu0 0
    %1551 = vmatpush2.bf16.xpose.msra.mxu0 0
    %1552 = vmatprep.subr.bf16.mxu0 0
    %1553 = vmatpush2.bf16.xpose.msra.mxu0 0
    %1554 = vmatprep.subr.bf16.mxu0 0
    %1555 = vmatpush2.bf16.xpose.msra.mxu0 0
    %1556 = vmatprep.subr.bf16.mxu0 0
    %1557 = vmatpush2.bf16.xpose.msra.mxu0 0
    %1558 = vmatprep.subr.bf16.mxu0 0
    %1559 = vmatpush2.bf16.xpose.msra.mxu0 0
    %1560 = vmatprep.mubr.bf16.mxu0 0
    %1561 = vmatmul.mubr.bf16.gmra.mxu0 %v1523
    %v1562 = vpop.f32.mrf.mxu0
    %v1563 = vadd.f32 %v80, %v1562
    %v1564 = vpop.f32.mrf.mxu0
    %v1565 = vpop.f32.mrf.mxu0
    %v1566 = vpop.f32.mrf.mxu0
    %1567 = vdwg.mxu0
    %v1568 = vsel %vm149, %v1563, -inf
    %1569 = vmax.xlane.f32.xlu0 %v1568
    %v1570 = vpop.xlane.xlu0 %1569
    %v1571 = vsub.f32 %v1563, %v1570
    %v1572 = vmul.f32 %v1571, 1.442695
    %v1573 = vpow.pop %v1572
    %v1574 = vsel %vm149, %v1573, 0.0
    %1575 = vadd.xlane.f32.xlu0 %v1574
    %v1576 = vpop.xlane.xlu0 %1575
    %v1577 = vrcp.pop %v1576
    %v1578 = vmul.f32 %v1573, %v1577
    %v1579 = vpack.c.bf16 %v1578, %v1578
    %1580 = vrot.lane.b32.xlu0 %v1407, 56
    %v1581 = vpop.permute.xlu0 %1580
    %v1583 = vsel %vm149, %v1579, 0
    %v1586 = vsel %vm213, %v1581, 0
    %1588 = vmatprep.subr.bf16.mxu0 0
    %1589 = vmatpush1.bf16.msra.mxu0 0
    %1590 = vmatprep.subr.bf16.mxu0 0
    %1591 = vmatpush1.bf16.msra.mxu0 0
    %1592 = vmatprep.subr.bf16.mxu0 0
    %1593 = vmatpush1.bf16.msra.mxu0 0
    %1594 = vmatprep.subr.bf16.mxu0 0
    %1595 = vmatpush1.bf16.msra.mxu0 0
    %1596 = vmatprep.subr.bf16.mxu0 0
    %1597 = vmatpush1.bf16.msra.mxu0 0
    %1598 = vmatprep.subr.bf16.mxu0 0
    %1599 = vmatpush1.bf16.msra.mxu0 0
    %1600 = vmatprep.subr.bf16.mxu0 0
    %1601 = vmatpush1.bf16.msra.mxu0 0
    %1602 = vmatprep.subr.bf16.mxu0 0
    %1603 = vmatpush1.bf16.msra.mxu0 %v1586
    %1604 = vmatprep.subr.bf16.mxu0 0
    %1605 = vmatpush2.bf16.msra.mxu0 0
    %1606 = vmatprep.subr.bf16.mxu0 0
    %1607 = vmatpush2.bf16.msra.mxu0 0
    %1608 = vmatprep.subr.bf16.mxu0 0
    %1609 = vmatpush2.bf16.msra.mxu0 0
    %1610 = vmatprep.subr.bf16.mxu0 0
    %1611 = vmatpush2.bf16.msra.mxu0 0
    %1612 = vmatprep.subr.bf16.mxu0 0
    %1613 = vmatpush2.bf16.msra.mxu0 0
    %1614 = vmatprep.subr.bf16.mxu0 0
    %1615 = vmatpush2.bf16.msra.mxu0 0
    %1616 = vmatprep.subr.bf16.mxu0 0
    %1617 = vmatpush2.bf16.msra.mxu0 0
    %1618 = vmatprep.subr.bf16.mxu0 0
    %1619 = vmatpush2.bf16.msra.mxu0 0
    %1620 = vmatprep.mubr.bf16.mxu0 0
    %1621 = vmatmul.mubr.bf16.gmra.mxu0 %v1583
    %v1622 = vpop.f32.mrf.mxu0
    %v1623 = vadd.f32 0.0, %v1622
    %v1624 = vpop.f32.mrf.mxu0
    %v1625 = vpop.f32.mrf.mxu0
    %v1626 = vpop.f32.mrf.mxu0
    %1627 = vdwg.mxu0
    %1629 = vrot.lane.b32.xlu0 %v1623, 8
    %v1630 = vpop.permute.xlu0 %1629
    %1632 = vst.msk [vmem:[#allocation2] sm:$0xff] %vm372, %v1630
    %1633 = vrot.lane.b32.xlu0 %v1407, 112
    %v1634 = vpop.permute.xlu0 %1633
    %1635 = vrot.lane.b32.xlu0 %v1407, 80
    %v1636 = vpop.permute.xlu0 %1635
    %v1638 = vsel %vm149, %v1634, 0
    %v1641 = vsel %vm149, %v1636, 0
    %1643 = vmatprep.subr.bf16.mxu0 0
    %1644 = vmatpush1.bf16.xpose.msra.mxu0 0
    %1645 = vmatprep.subr.bf16.mxu0 0
    %1646 = vmatpush1.bf16.xpose.msra.mxu0 0
    %1647 = vmatprep.subr.bf16.mxu0 0
    %1648 = vmatpush1.bf16.xpose.msra.mxu0 0
    %1649 = vmatprep.subr.bf16.mxu0 0
    %1650 = vmatpush1.bf16.xpose.msra.mxu0 0
    %1651 = vmatprep.subr.bf16.mxu0 0
    %1652 = vmatpush1.bf16.xpose.msra.mxu0 0
    %1653 = vmatprep.subr.bf16.mxu0 0
    %1654 = vmatpush1.bf16.xpose.msra.mxu0 0
    %1655 = vmatprep.subr.bf16.mxu0 0
    %1656 = vmatpush1.bf16.xpose.msra.mxu0 0
    %1657 = vmatprep.subr.bf16.mxu0 0
    %1658 = vmatpush1.bf16.xpose.msra.mxu0 %v1641
    %1659 = vmatprep.subr.bf16.mxu0 0
    %1660 = vmatpush2.bf16.xpose.msra.mxu0 0
    %1661 = vmatprep.subr.bf16.mxu0 0
    %1662 = vmatpush2.bf16.xpose.msra.mxu0 0
    %1663 = vmatprep.subr.bf16.mxu0 0
    %1664 = vmatpush2.bf16.xpose.msra.mxu0 0
    %1665 = vmatprep.subr.bf16.mxu0 0
    %1666 = vmatpush2.bf16.xpose.msra.mxu0 0
    %1667 = vmatprep.subr.bf16.mxu0 0
    %1668 = vmatpush2.bf16.xpose.msra.mxu0 0
    %1669 = vmatprep.subr.bf16.mxu0 0
    %1670 = vmatpush2.bf16.xpose.msra.mxu0 0
    %1671 = vmatprep.subr.bf16.mxu0 0
    %1672 = vmatpush2.bf16.xpose.msra.mxu0 0
    %1673 = vmatprep.subr.bf16.mxu0 0
    %1674 = vmatpush2.bf16.xpose.msra.mxu0 0
    %1675 = vmatprep.mubr.bf16.mxu0 0
    %1676 = vmatmul.mubr.bf16.gmra.mxu0 %v1638
    %v1677 = vpop.f32.mrf.mxu0
    %v1678 = vadd.f32 %v80, %v1677
    %v1679 = vpop.f32.mrf.mxu0
    %v1680 = vpop.f32.mrf.mxu0
    %v1681 = vpop.f32.mrf.mxu0
    %1682 = vdwg.mxu0
    %v1683 = vsel %vm149, %v1678, -inf
    %1684 = vmax.xlane.f32.xlu0 %v1683
    %v1685 = vpop.xlane.xlu0 %1684
    %v1686 = vsub.f32 %v1678, %v1685
    %v1687 = vmul.f32 %v1686, 1.442695
    %v1688 = vpow.pop %v1687
    %v1689 = vsel %vm149, %v1688, 0.0
    %1690 = vadd.xlane.f32.xlu0 %v1689
    %v1691 = vpop.xlane.xlu0 %1690
    %v1692 = vrcp.pop %v1691
    %v1693 = vmul.f32 %v1688, %v1692
    %v1694 = vpack.c.bf16 %v1693, %v1693
    %1695 = vrot.lane.b32.xlu0 %v1407, 48
    %v1696 = vpop.permute.xlu0 %1695
    %v1698 = vsel %vm149, %v1694, 0
    %v1701 = vsel %vm213, %v1696, 0
    %1703 = vmatprep.subr.bf16.mxu0 0
    %1704 = vmatpush1.bf16.msra.mxu0 0
    %1705 = vmatprep.subr.bf16.mxu0 0
    %1706 = vmatpush1.bf16.msra.mxu0 0
    %1707 = vmatprep.subr.bf16.mxu0 0
    %1708 = vmatpush1.bf16.msra.mxu0 0
    %1709 = vmatprep.subr.bf16.mxu0 0
    %1710 = vmatpush1.bf16.msra.mxu0 0
    %1711 = vmatprep.subr.bf16.mxu0 0
    %1712 = vmatpush1.bf16.msra.mxu0 0
    %1713 = vmatprep.subr.bf16.mxu0 0
    %1714 = vmatpush1.bf16.msra.mxu0 0
    %1715 = vmatprep.subr.bf16.mxu0 0
    %1716 = vmatpush1.bf16.msra.mxu0 0
    %1717 = vmatprep.subr.bf16.mxu0 0
    %1718 = vmatpush1.bf16.msra.mxu0 %v1701
    %1719 = vmatprep.subr.bf16.mxu0 0
    %1720 = vmatpush2.bf16.msra.mxu0 0
    %1721 = vmatprep.subr.bf16.mxu0 0
    %1722 = vmatpush2.bf16.msra.mxu0 0
    %1723 = vmatprep.subr.bf16.mxu0 0
    %1724 = vmatpush2.bf16.msra.mxu0 0
    %1725 = vmatprep.subr.bf16.mxu0 0
    %1726 = vmatpush2.bf16.msra.mxu0 0
    %1727 = vmatprep.subr.bf16.mxu0 0
    %1728 = vmatpush2.bf16.msra.mxu0 0
    %1729 = vmatprep.subr.bf16.mxu0 0
    %1730 = vmatpush2.bf16.msra.mxu0 0
    %1731 = vmatprep.subr.bf16.mxu0 0
    %1732 = vmatpush2.bf16.msra.mxu0 0
    %1733 = vmatprep.subr.bf16.mxu0 0
    %1734 = vmatpush2.bf16.msra.mxu0 0
    %1735 = vmatprep.mubr.bf16.mxu0 0
    %1736 = vmatmul.mubr.bf16.gmra.mxu0 %v1698
    %v1737 = vpop.f32.mrf.mxu0
    %v1738 = vadd.f32 0.0, %v1737
    %v1739 = vpop.f32.mrf.mxu0
    %v1740 = vpop.f32.mrf.mxu0
    %v1741 = vpop.f32.mrf.mxu0
    %1742 = vdwg.mxu0
    %1744 = vrot.lane.b32.xlu0 %v1738, 16
    %v1745 = vpop.permute.xlu0 %1744
    %1747 = vst.msk [vmem:[#allocation2] sm:$0xff] %vm488, %v1745
    %1748 = vrot.lane.b32.xlu0 %v1407, 104
    %v1749 = vpop.permute.xlu0 %1748
    %1750 = vrot.lane.b32.xlu0 %v1407, 72
    %v1751 = vpop.permute.xlu0 %1750
    %v1753 = vsel %vm149, %v1749, 0
    %v1756 = vsel %vm149, %v1751, 0
    %1758 = vmatprep.subr.bf16.mxu0 0
    %1759 = vmatpush1.bf16.xpose.msra.mxu0 0
    %1760 = vmatprep.subr.bf16.mxu0 0
    %1761 = vmatpush1.bf16.xpose.msra.mxu0 0
    %1762 = vmatprep.subr.bf16.mxu0 0
    %1763 = vmatpush1.bf16.xpose.msra.mxu0 0
    %1764 = vmatprep.subr.bf16.mxu0 0
    %1765 = vmatpush1.bf16.xpose.msra.mxu0 0
    %1766 = vmatprep.subr.bf16.mxu0 0
    %1767 = vmatpush1.bf16.xpose.msra.mxu0 0
    %1768 = vmatprep.subr.bf16.mxu0 0
    %1769 = vmatpush1.bf16.xpose.msra.mxu0 0
    %1770 = vmatprep.subr.bf16.mxu0 0
    %1771 = vmatpush1.bf16.xpose.msra.mxu0 0
    %1772 = vmatprep.subr.bf16.mxu0 0
    %1773 = vmatpush1.bf16.xpose.msra.mxu0 %v1756
    %1774 = vmatprep.subr.bf16.mxu0 0
    %1775 = vmatpush2.bf16.xpose.msra.mxu0 0
    %1776 = vmatprep.subr.bf16.mxu0 0
    %1777 = vmatpush2.bf16.xpose.msra.mxu0 0
    %1778 = vmatprep.subr.bf16.mxu0 0
    %1779 = vmatpush2.bf16.xpose.msra.mxu0 0
    %1780 = vmatprep.subr.bf16.mxu0 0
    %1781 = vmatpush2.bf16.xpose.msra.mxu0 0
    %1782 = vmatprep.subr.bf16.mxu0 0
    %1783 = vmatpush2.bf16.xpose.msra.mxu0 0
    %1784 = vmatprep.subr.bf16.mxu0 0
    %1785 = vmatpush2.bf16.xpose.msra.mxu0 0
    %1786 = vmatprep.subr.bf16.mxu0 0
    %1787 = vmatpush2.bf16.xpose.msra.mxu0 0
    %1788 = vmatprep.subr.bf16.mxu0 0
    %1789 = vmatpush2.bf16.xpose.msra.mxu0 0
    %1790 = vmatprep.mubr.bf16.mxu0 0
    %1791 = vmatmul.mubr.bf16.gmra.mxu0 %v1753
    %v1792 = vpop.f32.mrf.mxu0
    %v1793 = vadd.f32 %v80, %v1792
    %v1794 = vpop.f32.mrf.mxu0
    %v1795 = vpop.f32.mrf.mxu0
    %v1796 = vpop.f32.mrf.mxu0
    %1797 = vdwg.mxu0
    %v1798 = vsel %vm149, %v1793, -inf
    %1799 = vmax.xlane.f32.xlu0 %v1798
    %v1800 = vpop.xlane.xlu0 %1799
    %v1801 = vsub.f32 %v1793, %v1800
    %v1802 = vmul.f32 %v1801, 1.442695
    %v1803 = vpow.pop %v1802
    %v1804 = vsel %vm149, %v1803, 0.0
    %1805 = vadd.xlane.f32.xlu0 %v1804
    %v1806 = vpop.xlane.xlu0 %1805
    %v1807 = vrcp.pop %v1806
    %v1808 = vmul.f32 %v1803, %v1807
    %v1809 = vpack.c.bf16 %v1808, %v1808
    %1810 = vrot.lane.b32.xlu0 %v1407, 40
    %v1811 = vpop.permute.xlu0 %1810
    %v1813 = vsel %vm149, %v1809, 0
    %v1816 = vsel %vm213, %v1811, 0
    %1818 = vmatprep.subr.bf16.mxu0 0
    %1819 = vmatpush1.bf16.msra.mxu0 0
    %1820 = vmatprep.subr.bf16.mxu0 0
    %1821 = vmatpush1.bf16.msra.mxu0 0
    %1822 = vmatprep.subr.bf16.mxu0 0
    %1823 = vmatpush1.bf16.msra.mxu0 0
    %1824 = vmatprep.subr.bf16.mxu0 0
    %1825 = vmatpush1.bf16.msra.mxu0 0
    %1826 = vmatprep.subr.bf16.mxu0 0
    %1827 = vmatpush1.bf16.msra.mxu0 0
    %1828 = vmatprep.subr.bf16.mxu0 0
    %1829 = vmatpush1.bf16.msra.mxu0 0
    %1830 = vmatprep.subr.bf16.mxu0 0
    %1831 = vmatpush1.bf16.msra.mxu0 0
    %1832 = vmatprep.subr.bf16.mxu0 0
    %1833 = vmatpush1.bf16.msra.mxu0 %v1816
    %1834 = vmatprep.subr.bf16.mxu0 0
    %1835 = vmatpush2.bf16.msra.mxu0 0
    %1836 = vmatprep.subr.bf16.mxu0 0
    %1837 = vmatpush2.bf16.msra.mxu0 0
    %1838 = vmatprep.subr.bf16.mxu0 0
    %1839 = vmatpush2.bf16.msra.mxu0 0
    %1840 = vmatprep.subr.bf16.mxu0 0
    %1841 = vmatpush2.bf16.msra.mxu0 0
    %1842 = vmatprep.subr.bf16.mxu0 0
    %1843 = vmatpush2.bf16.msra.mxu0 0
    %1844 = vmatprep.subr.bf16.mxu0 0
    %1845 = vmatpush2.bf16.msra.mxu0 0
    %1846 = vmatprep.subr.bf16.mxu0 0
    %1847 = vmatpush2.bf16.msra.mxu0 0
    %1848 = vmatprep.subr.bf16.mxu0 0
    %1849 = vmatpush2.bf16.msra.mxu0 0
    %1850 = vmatprep.mubr.bf16.mxu0 0
    %1851 = vmatmul.mubr.bf16.gmra.mxu0 %v1813
    %v1852 = vpop.f32.mrf.mxu0
    %v1853 = vadd.f32 0.0, %v1852
    %v1854 = vpop.f32.mrf.mxu0
    %v1855 = vpop.f32.mrf.mxu0
    %v1856 = vpop.f32.mrf.mxu0
    %1857 = vdwg.mxu0
    %1859 = vrot.lane.b32.xlu0 %v1853, 24
    %v1860 = vpop.permute.xlu0 %1859
    %1862 = vst.msk [vmem:[#allocation2] sm:$0xff] %vm604, %v1860
    %v1863 = vrot.slane %v1407, 4
    %1864 = vrot.lane.b32.xlu0 %v1863, 96
    %v1865 = vpop.permute.xlu0 %1864
    %v1867 = vsel %vm149, %v1863, 0
    %v1870 = vsel %vm149, %v1865, 0
    %1872 = vmatprep.subr.bf16.mxu0 0
    %1873 = vmatpush1.bf16.xpose.msra.mxu0 0
    %1874 = vmatprep.subr.bf16.mxu0 0
    %1875 = vmatpush1.bf16.xpose.msra.mxu0 0
    %1876 = vmatprep.subr.bf16.mxu0 0
    %1877 = vmatpush1.bf16.xpose.msra.mxu0 0
    %1878 = vmatprep.subr.bf16.mxu0 0
    %1879 = vmatpush1.bf16.xpose.msra.mxu0 0
    %1880 = vmatprep.subr.bf16.mxu0 0
    %1881 = vmatpush1.bf16.xpose.msra.mxu0 0
    %1882 = vmatprep.subr.bf16.mxu0 0
    %1883 = vmatpush1.bf16.xpose.msra.mxu0 0
    %1884 = vmatprep.subr.bf16.mxu0 0
    %1885 = vmatpush1.bf16.xpose.msra.mxu0 0
    %1886 = vmatprep.subr.bf16.mxu0 0
    %1887 = vmatpush1.bf16.xpose.msra.mxu0 %v1870
    %1888 = vmatprep.subr.bf16.mxu0 0
    %1889 = vmatpush2.bf16.xpose.msra.mxu0 0
    %1890 = vmatprep.subr.bf16.mxu0 0
    %1891 = vmatpush2.bf16.xpose.msra.mxu0 0
    %1892 = vmatprep.subr.bf16.mxu0 0
    %1893 = vmatpush2.bf16.xpose.msra.mxu0 0
    %1894 = vmatprep.subr.bf16.mxu0 0
    %1895 = vmatpush2.bf16.xpose.msra.mxu0 0
    %1896 = vmatprep.subr.bf16.mxu0 0
    %1897 = vmatpush2.bf16.xpose.msra.mxu0 0
    %1898 = vmatprep.subr.bf16.mxu0 0
    %1899 = vmatpush2.bf16.xpose.msra.mxu0 0
    %1900 = vmatprep.subr.bf16.mxu0 0
    %1901 = vmatpush2.bf16.xpose.msra.mxu0 0
    %1902 = vmatprep.subr.bf16.mxu0 0
    %1903 = vmatpush2.bf16.xpose.msra.mxu0 0
    %1904 = vmatprep.mubr.bf16.mxu0 0
    %1905 = vmatmul.mubr.bf16.gmra.mxu0 %v1867
    %v1906 = vpop.f32.mrf.mxu0
    %v1907 = vadd.f32 %v85, %v1906
    %v1908 = vpop.f32.mrf.mxu0
    %v1909 = vpop.f32.mrf.mxu0
    %v1910 = vpop.f32.mrf.mxu0
    %1911 = vdwg.mxu0
    %v1912 = vsel %vm149, %v1907, -inf
    %1913 = vmax.xlane.f32.xlu0 %v1912
    %v1914 = vpop.xlane.xlu0 %1913
    %v1915 = vsub.f32 %v1907, %v1914
    %v1916 = vmul.f32 %v1915, 1.442695
    %v1917 = vpow.pop %v1916
    %v1918 = vsel %vm149, %v1917, 0.0
    %1919 = vadd.xlane.f32.xlu0 %v1918
    %v1920 = vpop.xlane.xlu0 %1919
    %v1921 = vrcp.pop %v1920
    %v1922 = vmul.f32 %v1917, %v1921
    %v1923 = vpack.c.bf16 %v1922, %v1922
    %1924 = vrot.lane.b32.xlu0 %v1863, 64
    %v1925 = vpop.permute.xlu0 %1924
    %v1927 = vsel %vm149, %v1923, 0
    %v1930 = vsel %vm213, %v1925, 0
    %1932 = vmatprep.subr.bf16.mxu0 0
    %1933 = vmatpush1.bf16.msra.mxu0 0
    %1934 = vmatprep.subr.bf16.mxu0 0
    %1935 = vmatpush1.bf16.msra.mxu0 0
    %1936 = vmatprep.subr.bf16.mxu0 0
    %1937 = vmatpush1.bf16.msra.mxu0 0
    %1938 = vmatprep.subr.bf16.mxu0 0
    %1939 = vmatpush1.bf16.msra.mxu0 0
    %1940 = vmatprep.subr.bf16.mxu0 0
    %1941 = vmatpush1.bf16.msra.mxu0 0
    %1942 = vmatprep.subr.bf16.mxu0 0
    %1943 = vmatpush1.bf16.msra.mxu0 0
    %1944 = vmatprep.subr.bf16.mxu0 0
    %1945 = vmatpush1.bf16.msra.mxu0 0
    %1946 = vmatprep.subr.bf16.mxu0 0
    %1947 = vmatpush1.bf16.msra.mxu0 %v1930
    %1948 = vmatprep.subr.bf16.mxu0 0
    %1949 = vmatpush2.bf16.msra.mxu0 0
    %1950 = vmatprep.subr.bf16.mxu0 0
    %1951 = vmatpush2.bf16.msra.mxu0 0
    %1952 = vmatprep.subr.bf16.mxu0 0
    %1953 = vmatpush2.bf16.msra.mxu0 0
    %1954 = vmatprep.subr.bf16.mxu0 0
    %1955 = vmatpush2.bf16.msra.mxu0 0
    %1956 = vmatprep.subr.bf16.mxu0 0
    %1957 = vmatpush2.bf16.msra.mxu0 0
    %1958 = vmatprep.subr.bf16.mxu0 0
    %1959 = vmatpush2.bf16.msra.mxu0 0
    %1960 = vmatprep.subr.bf16.mxu0 0
    %1961 = vmatpush2.bf16.msra.mxu0 0
    %1962 = vmatprep.subr.bf16.mxu0 0
    %1963 = vmatpush2.bf16.msra.mxu0 0
    %1964 = vmatprep.mubr.bf16.mxu0 0
    %1965 = vmatmul.mubr.bf16.gmra.mxu0 %v1927
    %v1966 = vpop.f32.mrf.mxu0
    %v1967 = vadd.f32 0.0, %v1966
    %v1968 = vpop.f32.mrf.mxu0
    %v1969 = vpop.f32.mrf.mxu0
    %v1970 = vpop.f32.mrf.mxu0
    %1971 = vdwg.mxu0
    %1972 = vst.msk [vmem:[#allocation2 + $0x8] sm:$0xff] %vm149, %v1967
    %1973 = vrot.lane.b32.xlu0 %v1863, 120
    %v1974 = vpop.permute.xlu0 %1973
    %1975 = vrot.lane.b32.xlu0 %v1863, 88
    %v1976 = vpop.permute.xlu0 %1975
    %v1978 = vsel %vm149, %v1974, 0
    %v1981 = vsel %vm149, %v1976, 0
    %1983 = vmatprep.subr.bf16.mxu0 0
    %1984 = vmatpush1.bf16.xpose.msra.mxu0 0
    %1985 = vmatprep.subr.bf16.mxu0 0
    %1986 = vmatpush1.bf16.xpose.msra.mxu0 0
    %1987 = vmatprep.subr.bf16.mxu0 0
    %1988 = vmatpush1.bf16.xpose.msra.mxu0 0
    %1989 = vmatprep.subr.bf16.mxu0 0
    %1990 = vmatpush1.bf16.xpose.msra.mxu0 0
    %1991 = vmatprep.subr.bf16.mxu0 0
    %1992 = vmatpush1.bf16.xpose.msra.mxu0 0
    %1993 = vmatprep.subr.bf16.mxu0 0
    %1994 = vmatpush1.bf16.xpose.msra.mxu0 0
    %1995 = vmatprep.subr.bf16.mxu0 0
    %1996 = vmatpush1.bf16.xpose.msra.mxu0 0
    %1997 = vmatprep.subr.bf16.mxu0 0
    %1998 = vmatpush1.bf16.xpose.msra.mxu0 %v1981
    %1999 = vmatprep.subr.bf16.mxu0 0
    %2000 = vmatpush2.bf16.xpose.msra.mxu0 0
    %2001 = vmatprep.subr.bf16.mxu0 0
    %2002 = vmatpush2.bf16.xpose.msra.mxu0 0
    %2003 = vmatprep.subr.bf16.mxu0 0
    %2004 = vmatpush2.bf16.xpose.msra.mxu0 0
    %2005 = vmatprep.subr.bf16.mxu0 0
    %2006 = vmatpush2.bf16.xpose.msra.mxu0 0
    %2007 = vmatprep.subr.bf16.mxu0 0
    %2008 = vmatpush2.bf16.xpose.msra.mxu0 0
    %2009 = vmatprep.subr.bf16.mxu0 0
    %2010 = vmatpush2.bf16.xpose.msra.mxu0 0
    %2011 = vmatprep.subr.bf16.mxu0 0
    %2012 = vmatpush2.bf16.xpose.msra.mxu0 0
    %2013 = vmatprep.subr.bf16.mxu0 0
    %2014 = vmatpush2.bf16.xpose.msra.mxu0 0
    %2015 = vmatprep.mubr.bf16.mxu0 0
    %2016 = vmatmul.mubr.bf16.gmra.mxu0 %v1978
    %v2017 = vpop.f32.mrf.mxu0
    %v2018 = vadd.f32 %v85, %v2017
    %v2019 = vpop.f32.mrf.mxu0
    %v2020 = vpop.f32.mrf.mxu0
    %v2021 = vpop.f32.mrf.mxu0
    %2022 = vdwg.mxu0
    %v2023 = vsel %vm149, %v2018, -inf
    %2024 = vmax.xlane.f32.xlu0 %v2023
    %v2025 = vpop.xlane.xlu0 %2024
    %v2026 = vsub.f32 %v2018, %v2025
    %v2027 = vmul.f32 %v2026, 1.442695
    %v2028 = vpow.pop %v2027
    %v2029 = vsel %vm149, %v2028, 0.0
    %2030 = vadd.xlane.f32.xlu0 %v2029
    %v2031 = vpop.xlane.xlu0 %2030
    %v2032 = vrcp.pop %v2031
    %v2033 = vmul.f32 %v2028, %v2032
    %v2034 = vpack.c.bf16 %v2033, %v2033
    %2035 = vrot.lane.b32.xlu0 %v1863, 56
    %v2036 = vpop.permute.xlu0 %2035
    %v2038 = vsel %vm149, %v2034, 0
    %v2041 = vsel %vm213, %v2036, 0
    %2043 = vmatprep.subr.bf16.mxu0 0
    %2044 = vmatpush1.bf16.msra.mxu0 0
    %2045 = vmatprep.subr.bf16.mxu0 0
    %2046 = vmatpush1.bf16.msra.mxu0 0
    %2047 = vmatprep.subr.bf16.mxu0 0
    %2048 = vmatpush1.bf16.msra.mxu0 0
    %2049 = vmatprep.subr.bf16.mxu0 0
    %2050 = vmatpush1.bf16.msra.mxu0 0
    %2051 = vmatprep.subr.bf16.mxu0 0
    %2052 = vmatpush1.bf16.msra.mxu0 0
    %2053 = vmatprep.subr.bf16.mxu0 0
    %2054 = vmatpush1.bf16.msra.mxu0 0
    %2055 = vmatprep.subr.bf16.mxu0 0
    %2056 = vmatpush1.bf16.msra.mxu0 0
    %2057 = vmatprep.subr.bf16.mxu0 0
    %2058 = vmatpush1.bf16.msra.mxu0 %v2041
    %2059 = vmatprep.subr.bf16.mxu0 0
    %2060 = vmatpush2.bf16.msra.mxu0 0
    %2061 = vmatprep.subr.bf16.mxu0 0
    %2062 = vmatpush2.bf16.msra.mxu0 0
    %2063 = vmatprep.subr.bf16.mxu0 0
    %2064 = vmatpush2.bf16.msra.mxu0 0
    %2065 = vmatprep.subr.bf16.mxu0 0
    %2066 = vmatpush2.bf16.msra.mxu0 0
    %2067 = vmatprep.subr.bf16.mxu0 0
    %2068 = vmatpush2.bf16.msra.mxu0 0
    %2069 = vmatprep.subr.bf16.mxu0 0
    %2070 = vmatpush2.bf16.msra.mxu0 0
    %2071 = vmatprep.subr.bf16.mxu0 0
    %2072 = vmatpush2.bf16.msra.mxu0 0
    %2073 = vmatprep.subr.bf16.mxu0 0
    %2074 = vmatpush2.bf16.msra.mxu0 0
    %2075 = vmatprep.mubr.bf16.mxu0 0
    %2076 = vmatmul.mubr.bf16.gmra.mxu0 %v2038
    %v2077 = vpop.f32.mrf.mxu0
    %v2078 = vadd.f32 0.0, %v2077
    %v2079 = vpop.f32.mrf.mxu0
    %v2080 = vpop.f32.mrf.mxu0
    %v2081 = vpop.f32.mrf.mxu0
    %2082 = vdwg.mxu0
    %2084 = vrot.lane.b32.xlu0 %v2078, 8
    %v2085 = vpop.permute.xlu0 %2084
    %2087 = vst.msk [vmem:[#allocation2 + $0x8] sm:$0xff] %vm372, %v2085
    %2088 = vrot.lane.b32.xlu0 %v1863, 112
    %v2089 = vpop.permute.xlu0 %2088
    %2090 = vrot.lane.b32.xlu0 %v1863, 80
    %v2091 = vpop.permute.xlu0 %2090
    %v2093 = vsel %vm149, %v2089, 0
    %v2096 = vsel %vm149, %v2091, 0
    %2098 = vmatprep.subr.bf16.mxu0 0
    %2099 = vmatpush1.bf16.xpose.msra.mxu0 0
    %2100 = vmatprep.subr.bf16.mxu0 0
    %2101 = vmatpush1.bf16.xpose.msra.mxu0 0
    %2102 = vmatprep.subr.bf16.mxu0 0
    %2103 = vmatpush1.bf16.xpose.msra.mxu0 0
    %2104 = vmatprep.subr.bf16.mxu0 0
    %2105 = vmatpush1.bf16.xpose.msra.mxu0 0
    %2106 = vmatprep.subr.bf16.mxu0 0
    %2107 = vmatpush1.bf16.xpose.msra.mxu0 0
    %2108 = vmatprep.subr.bf16.mxu0 0
    %2109 = vmatpush1.bf16.xpose.msra.mxu0 0
    %2110 = vmatprep.subr.bf16.mxu0 0
    %2111 = vmatpush1.bf16.xpose.msra.mxu0 0
    %2112 = vmatprep.subr.bf16.mxu0 0
    %2113 = vmatpush1.bf16.xpose.msra.mxu0 %v2096
    %2114 = vmatprep.subr.bf16.mxu0 0
    %2115 = vmatpush2.bf16.xpose.msra.mxu0 0
    %2116 = vmatprep.subr.bf16.mxu0 0
    %2117 = vmatpush2.bf16.xpose.msra.mxu0 0
    %2118 = vmatprep.subr.bf16.mxu0 0
    %2119 = vmatpush2.bf16.xpose.msra.mxu0 0
    %2120 = vmatprep.subr.bf16.mxu0 0
    %2121 = vmatpush2.bf16.xpose.msra.mxu0 0
    %2122 = vmatprep.subr.bf16.mxu0 0
    %2123 = vmatpush2.bf16.xpose.msra.mxu0 0
    %2124 = vmatprep.subr.bf16.mxu0 0
    %2125 = vmatpush2.bf16.xpose.msra.mxu0 0
    %2126 = vmatprep.subr.bf16.mxu0 0
    %2127 = vmatpush2.bf16.xpose.msra.mxu0 0
    %2128 = vmatprep.subr.bf16.mxu0 0
    %2129 = vmatpush2.bf16.xpose.msra.mxu0 0
    %2130 = vmatprep.mubr.bf16.mxu0 0
    %2131 = vmatmul.mubr.bf16.gmra.mxu0 %v2093
    %v2132 = vpop.f32.mrf.mxu0
    %v2133 = vadd.f32 %v85, %v2132
    %v2134 = vpop.f32.mrf.mxu0
    %v2135 = vpop.f32.mrf.mxu0
    %v2136 = vpop.f32.mrf.mxu0
    %2137 = vdwg.mxu0
    %v2138 = vsel %vm149, %v2133, -inf
    %2139 = vmax.xlane.f32.xlu0 %v2138
    %v2140 = vpop.xlane.xlu0 %2139
    %v2141 = vsub.f32 %v2133, %v2140
    %v2142 = vmul.f32 %v2141, 1.442695
    %v2143 = vpow.pop %v2142
    %v2144 = vsel %vm149, %v2143, 0.0
    %2145 = vadd.xlane.f32.xlu0 %v2144
    %v2146 = vpop.xlane.xlu0 %2145
    %v2147 = vrcp.pop %v2146
    %v2148 = vmul.f32 %v2143, %v2147
    %v2149 = vpack.c.bf16 %v2148, %v2148
    %2150 = vrot.lane.b32.xlu0 %v1863, 48
    %v2151 = vpop.permute.xlu0 %2150
    %v2153 = vsel %vm149, %v2149, 0
    %v2156 = vsel %vm213, %v2151, 0
    %2158 = vmatprep.subr.bf16.mxu0 0
    %2159 = vmatpush1.bf16.msra.mxu0 0
    %2160 = vmatprep.subr.bf16.mxu0 0
    %2161 = vmatpush1.bf16.msra.mxu0 0
    %2162 = vmatprep.subr.bf16.mxu0 0
    %2163 = vmatpush1.bf16.msra.mxu0 0
    %2164 = vmatprep.subr.bf16.mxu0 0
    %2165 = vmatpush1.bf16.msra.mxu0 0
    %2166 = vmatprep.subr.bf16.mxu0 0
    %2167 = vmatpush1.bf16.msra.mxu0 0
    %2168 = vmatprep.subr.bf16.mxu0 0
    %2169 = vmatpush1.bf16.msra.mxu0 0
    %2170 = vmatprep.subr.bf16.mxu0 0
    %2171 = vmatpush1.bf16.msra.mxu0 0
    %2172 = vmatprep.subr.bf16.mxu0 0
    %2173 = vmatpush1.bf16.msra.mxu0 %v2156
    %2174 = vmatprep.subr.bf16.mxu0 0
    %2175 = vmatpush2.bf16.msra.mxu0 0
    %2176 = vmatprep.subr.bf16.mxu0 0
    %2177 = vmatpush2.bf16.msra.mxu0 0
    %2178 = vmatprep.subr.bf16.mxu0 0
    %2179 = vmatpush2.bf16.msra.mxu0 0
    %2180 = vmatprep.subr.bf16.mxu0 0
    %2181 = vmatpush2.bf16.msra.mxu0 0
    %2182 = vmatprep.subr.bf16.mxu0 0
    %2183 = vmatpush2.bf16.msra.mxu0 0
    %2184 = vmatprep.subr.bf16.mxu0 0
    %2185 = vmatpush2.bf16.msra.mxu0 0
    %2186 = vmatprep.subr.bf16.mxu0 0
    %2187 = vmatpush2.bf16.msra.mxu0 0
    %2188 = vmatprep.subr.bf16.mxu0 0
    %2189 = vmatpush2.bf16.msra.mxu0 0
    %2190 = vmatprep.mubr.bf16.mxu0 0
    %2191 = vmatmul.mubr.bf16.gmra.mxu0 %v2153
    %v2192 = vpop.f32.mrf.mxu0
    %v2193 = vadd.f32 0.0, %v2192
    %v2194 = vpop.f32.mrf.mxu0
    %v2195 = vpop.f32.mrf.mxu0
    %v2196 = vpop.f32.mrf.mxu0
    %2197 = vdwg.mxu0
    %2199 = vrot.lane.b32.xlu0 %v2193, 16
    %v2200 = vpop.permute.xlu0 %2199
    %2202 = vst.msk [vmem:[#allocation2 + $0x8] sm:$0xff] %vm488, %v2200
    %2203 = vrot.lane.b32.xlu0 %v1863, 104
    %v2204 = vpop.permute.xlu0 %2203
    %2205 = vrot.lane.b32.xlu0 %v1863, 72
    %v2206 = vpop.permute.xlu0 %2205
    %v2208 = vsel %vm149, %v2204, 0
    %v2211 = vsel %vm149, %v2206, 0
    %2213 = vmatprep.subr.bf16.mxu0 0
    %2214 = vmatpush1.bf16.xpose.msra.mxu0 0
    %2215 = vmatprep.subr.bf16.mxu0 0
    %2216 = vmatpush1.bf16.xpose.msra.mxu0 0
    %2217 = vmatprep.subr.bf16.mxu0 0
    %2218 = vmatpush1.bf16.xpose.msra.mxu0 0
    %2219 = vmatprep.subr.bf16.mxu0 0
    %2220 = vmatpush1.bf16.xpose.msra.mxu0 0
    %2221 = vmatprep.subr.bf16.mxu0 0
    %2222 = vmatpush1.bf16.xpose.msra.mxu0 0
    %2223 = vmatprep.subr.bf16.mxu0 0
    %2224 = vmatpush1.bf16.xpose.msra.mxu0 0
    %2225 = vmatprep.subr.bf16.mxu0 0
    %2226 = vmatpush1.bf16.xpose.msra.mxu0 0
    %2227 = vmatprep.subr.bf16.mxu0 0
    %2228 = vmatpush1.bf16.xpose.msra.mxu0 %v2211
    %2229 = vmatprep.subr.bf16.mxu0 0
    %2230 = vmatpush2.bf16.xpose.msra.mxu0 0
    %2231 = vmatprep.subr.bf16.mxu0 0
    %2232 = vmatpush2.bf16.xpose.msra.mxu0 0
    %2233 = vmatprep.subr.bf16.mxu0 0
    %2234 = vmatpush2.bf16.xpose.msra.mxu0 0
    %2235 = vmatprep.subr.bf16.mxu0 0
    %2236 = vmatpush2.bf16.xpose.msra.mxu0 0
    %2237 = vmatprep.subr.bf16.mxu0 0
    %2238 = vmatpush2.bf16.xpose.msra.mxu0 0
    %2239 = vmatprep.subr.bf16.mxu0 0
    %2240 = vmatpush2.bf16.xpose.msra.mxu0 0
    %2241 = vmatprep.subr.bf16.mxu0 0
    %2242 = vmatpush2.bf16.xpose.msra.mxu0 0
    %2243 = vmatprep.subr.bf16.mxu0 0
    %2244 = vmatpush2.bf16.xpose.msra.mxu0 0
    %2245 = vmatprep.mubr.bf16.mxu0 0
    %2246 = vmatmul.mubr.bf16.gmra.mxu0 %v2208
    %v2247 = vpop.f32.mrf.mxu0
    %v2248 = vadd.f32 %v85, %v2247
    %v2249 = vpop.f32.mrf.mxu0
    %v2250 = vpop.f32.mrf.mxu0
    %v2251 = vpop.f32.mrf.mxu0
    %2252 = vdwg.mxu0
    %v2253 = vsel %vm149, %v2248, -inf
    %2254 = vmax.xlane.f32.xlu0 %v2253
    %v2255 = vpop.xlane.xlu0 %2254
    %v2256 = vsub.f32 %v2248, %v2255
    %v2257 = vmul.f32 %v2256, 1.442695
    %v2258 = vpow.pop %v2257
    %v2259 = vsel %vm149, %v2258, 0.0
    %2260 = vadd.xlane.f32.xlu0 %v2259
    %v2261 = vpop.xlane.xlu0 %2260
    %v2262 = vrcp.pop %v2261
    %v2263 = vmul.f32 %v2258, %v2262
    %v2264 = vpack.c.bf16 %v2263, %v2263
    %2265 = vrot.lane.b32.xlu0 %v1863, 40
    %v2266 = vpop.permute.xlu0 %2265
    %v2268 = vsel %vm149, %v2264, 0
    %v2271 = vsel %vm213, %v2266, 0
    %2273 = vmatprep.subr.bf16.mxu0 0
    %2274 = vmatpush1.bf16.msra.mxu0 0
    %2275 = vmatprep.subr.bf16.mxu0 0
    %2276 = vmatpush1.bf16.msra.mxu0 0
    %2277 = vmatprep.subr.bf16.mxu0 0
    %2278 = vmatpush1.bf16.msra.mxu0 0
    %2279 = vmatprep.subr.bf16.mxu0 0
    %2280 = vmatpush1.bf16.msra.mxu0 0
    %2281 = vmatprep.subr.bf16.mxu0 0
    %2282 = vmatpush1.bf16.msra.mxu0 0
    %2283 = vmatprep.subr.bf16.mxu0 0
    %2284 = vmatpush1.bf16.msra.mxu0 0
    %2285 = vmatprep.subr.bf16.mxu0 0
    %2286 = vmatpush1.bf16.msra.mxu0 0
    %2287 = vmatprep.subr.bf16.mxu0 0
    %2288 = vmatpush1.bf16.msra.mxu0 %v2271
    %2289 = vmatprep.subr.bf16.mxu0 0
    %2290 = vmatpush2.bf16.msra.mxu0 0
    %2291 = vmatprep.subr.bf16.mxu0 0
    %2292 = vmatpush2.bf16.msra.mxu0 0
    %2293 = vmatprep.subr.bf16.mxu0 0
    %2294 = vmatpush2.bf16.msra.mxu0 0
    %2295 = vmatprep.subr.bf16.mxu0 0
    %2296 = vmatpush2.bf16.msra.mxu0 0
    %2297 = vmatprep.subr.bf16.mxu0 0
    %2298 = vmatpush2.bf16.msra.mxu0 0
    %2299 = vmatprep.subr.bf16.mxu0 0
    %2300 = vmatpush2.bf16.msra.mxu0 0
    %2301 = vmatprep.subr.bf16.mxu0 0
    %2302 = vmatpush2.bf16.msra.mxu0 0
    %2303 = vmatprep.subr.bf16.mxu0 0
    %2304 = vmatpush2.bf16.msra.mxu0 0
    %2305 = vmatprep.mubr.bf16.mxu0 0
    %2306 = vmatmul.mubr.bf16.gmra.mxu0 %v2268
    %v2307 = vpop.f32.mrf.mxu0
    %v2308 = vadd.f32 0.0, %v2307
    %v2309 = vpop.f32.mrf.mxu0
    %v2310 = vpop.f32.mrf.mxu0
    %v2311 = vpop.f32.mrf.mxu0
    %2312 = vdwg.mxu0
    %2314 = vrot.lane.b32.xlu0 %v2308, 24
    %v2315 = vpop.permute.xlu0 %2314
    %2317 = vst.msk [vmem:[#allocation2 + $0x8] sm:$0xff] %vm604, %v2315
    %v2318 = vld [vmem:[#allocation2] sm:$0xff]
    %v2319 = vld [vmem:[#allocation2 + $0x8] sm:$0xff]
    %s2320 = scalar_lea.vmem %s5, 32
    %v2321 = vld [vmem:[%s2320] sm:$0xff]
    %v2322 = vld [vmem:[%s2320 + $0x8] sm:$0xff]
    %v2323 = vld [vmem:[%s2320 + $0x10] sm:$0xff]
    %v2324 = vld [vmem:[%s2320 + $0x18] sm:$0xff]
    %v2325 = vpack.c.bf16 %v2319, %v2318
    %v2326 = vpack.c.bf16 %v2322, %v2321
    %v2327 = vpack.c.bf16 %v2324, %v2323
    %s2328 = scalar_lea.vmem %s6, 1
    %v2329 = vld [vmem:[%s2328] sm:$0x1]
    %v2331 = vlaneseq
    %v2332 = vshrl.u32 %v2331, 7
    %v2333 = vsub.s32 0, %v2332
    %v2334 = vrot.slane %v2329, %v2333
    %v2337 = vsel %vm100, %v2325, 0
    %2339 = vmatprep.subr.bf16.mxu0 0
    %2340 = vmatpush1.bf16.msra.mxu0 0
    %2341 = vmatprep.subr.bf16.mxu0 0
    %2342 = vmatpush1.bf16.msra.mxu0 0
    %2343 = vmatprep.subr.bf16.mxu0 0
    %2344 = vmatpush1.bf16.msra.mxu0 0
    %2345 = vmatprep.subr.bf16.mxu0 0
    %2346 = vmatpush1.bf16.msra.mxu0 0
    %2347 = vmatprep.subr.bf16.mxu0 0
    %2348 = vmatpush1.bf16.msra.mxu0 0
    %2349 = vmatprep.subr.bf16.mxu0 0
    %2350 = vmatpush1.bf16.msra.mxu0 0
    %2351 = vmatprep.subr.bf16.mxu0 0
    %2352 = vmatpush1.bf16.msra.mxu0 %v2327
    %2353 = vmatprep.subr.bf16.mxu0 0
    %2354 = vmatpush1.bf16.msra.mxu0 %v2326
    %2355 = vmatprep.subr.bf16.mxu0 0
    %2356 = vmatpush2.bf16.msra.mxu0 0
    %2357 = vmatprep.subr.bf16.mxu0 0
    %2358 = vmatpush2.bf16.msra.mxu0 0
    %2359 = vmatprep.subr.bf16.mxu0 0
    %2360 = vmatpush2.bf16.msra.mxu0 0
    %2361 = vmatprep.subr.bf16.mxu0 0
    %2362 = vmatpush2.bf16.msra.mxu0 0
    %2363 = vmatprep.subr.bf16.mxu0 0
    %2364 = vmatpush2.bf16.msra.mxu0 0
    %2365 = vmatprep.subr.bf16.mxu0 0
    %2366 = vmatpush2.bf16.msra.mxu0 0
    %2367 = vmatprep.subr.bf16.mxu0 0
    %2368 = vmatpush2.bf16.msra.mxu0 0
    %2369 = vmatprep.subr.bf16.mxu0 0
    %2370 = vmatpush2.bf16.msra.mxu0 0
    %2371 = vmatprep.mubr.bf16.mxu0 0
    %2372 = vmatmul.mubr.bf16.gmra.mxu0 %v2337
    %v2373 = vpop.f32.mrf.mxu0
    %v2374 = vadd.f32 %v2334, %v2373
    %v2375 = vpop.f32.mrf.mxu0
    %v2376 = vpop.f32.mrf.mxu0
    %v2377 = vadd.f32 %v2334, %v2376
    %v2378 = vpop.f32.mrf.mxu0
    %2379 = vdwg.mxu0
    %v2380 = vadd.f32 %v1345, %v2374
    %v2381 = vadd.f32 %v1346, %v2377
    %s2382 = scalar_lea.vmem %s7, 1
    %v2383 = vld [vmem:[%s2382] sm:$0x1]
    %s2384 = scalar_lea.vmem %s8, 1
    %v2385 = vld [vmem:[%s2384] sm:$0x1]
    %v2386 = vsel %vm100, %v2380, 0.0
    %2387 = vadd.xlane.f32.xlu0 %v2386
    %v2388 = vpop.xlane.xlu0 %2387
    %v2389 = vsel %vm100, %v2381, 0.0
    %2390 = vadd.xlane.f32.xlu0 %v2389
    %v2391 = vpop.xlane.xlu0 %2390
    %v2392 = vmul.f32 %v2388, %v1131
    %v2393 = vmul.f32 %v2391, %v1131
    %v2394 = vsub.f32 %v2380, %v2392
    %v2395 = vsub.f32 %v2381, %v2393
    %v2396 = vmul.f32 %v2394, %v2394
    %v2397 = vmul.f32 %v2395, %v2395
    %v2398 = vsel %vm100, %v2396, 0.0
    %2399 = vadd.xlane.f32.xlu0 %v2398
    %v2400 = vpop.xlane.xlu0 %2399
    %v2401 = vsel %vm100, %v2397, 0.0
    %2402 = vadd.xlane.f32.xlu0 %v2401
    %v2403 = vpop.xlane.xlu0 %2402
    %v2404 = vmul.f32 %v2400, %v1131
    %v2405 = vmul.f32 %v2403, %v1131
    %v2406 = vadd.f32 %v2404, 1e-05
    %v2407 = vadd.f32 %v2405, 1e-05
    %v2408 = vrsqrt.pop %v2406
    %v2409 = vrsqrt.pop %v2407
    %v2410 = vmul.f32 %v2394, %v2408
    %v2411 = vmul.f32 %v2395, %v2409
    %v2413 = vlaneseq
    %v2414 = vshrl.u32 %v2413, 7
    %v2415 = vsub.s32 0, %v2414
    %v2416 = vrot.slane %v2383, %v2415
    %v2418 = vmul.f32 %v2410, %v2416
    %v2419 = vmul.f32 %v2411, %v2416
    %v2421 = vlaneseq
    %v2422 = vshrl.u32 %v2421, 7
    %v2423 = vsub.s32 0, %v2422
    %v2424 = vrot.slane %v2385, %v2423
    %v2426 = vadd.f32 %v2418, %v2424
    %v2427 = vadd.f32 %v2419, %v2424
    %s2428 = scalar_lea.vmem %s9, 32
    %v2429 = vld [vmem:[%s2428] sm:$0xff]
    %v2430 = vld [vmem:[%s2428 + $0x8] sm:$0xff]
    %v2431 = vld [vmem:[%s2428 + $0x10] sm:$0xff]
    %v2432 = vld [vmem:[%s2428 + $0x18] sm:$0xff]
    %v2433 = vpack.c.bf16 %v2427, %v2426
    %v2434 = vpack.c.bf16 %v2430, %v2429
    %v2435 = vpack.c.bf16 %v2432, %v2431
    %s2436 = scalar_lea.vmem %s10, 1
    %v2437 = vld [vmem:[%s2436] sm:$0x1]
    %v2439 = vlaneseq
    %v2440 = vshrl.u32 %v2439, 7
    %v2441 = vsub.s32 0, %v2440
    %v2442 = vrot.slane %v2437, %v2441
    %v2445 = vsel %vm100, %v2433, 0
    %2447 = vmatprep.subr.bf16.mxu0 0
    %2448 = vmatpush1.bf16.msra.mxu0 0
    %2449 = vmatprep.subr.bf16.mxu0 0
    %2450 = vmatpush1.bf16.msra.mxu0 0
    %2451 = vmatprep.subr.bf16.mxu0 0
    %2452 = vmatpush1.bf16.msra.mxu0 0
    %2453 = vmatprep.subr.bf16.mxu0 0
    %2454 = vmatpush1.bf16.msra.mxu0 0
    %2455 = vmatprep.subr.bf16.mxu0 0
    %2456 = vmatpush1.bf16.msra.mxu0 0
    %2457 = vmatprep.subr.bf16.mxu0 0
    %2458 = vmatpush1.bf16.msra.mxu0 0
    %2459 = vmatprep.subr.bf16.mxu0 0
    %2460 = vmatpush1.bf16.msra.mxu0 %v2435
    %2461 = vmatprep.subr.bf16.mxu0 0
    %2462 = vmatpush1.bf16.msra.mxu0 %v2434
    %2463 = vmatprep.subr.bf16.mxu0 0
    %2464 = vmatpush2.bf16.msra.mxu0 0
    %2465 = vmatprep.subr.bf16.mxu0 0
    %2466 = vmatpush2.bf16.msra.mxu0 0
    %2467 = vmatprep.subr.bf16.mxu0 0
    %2468 = vmatpush2.bf16.msra.mxu0 0
    %2469 = vmatprep.subr.bf16.mxu0 0
    %2470 = vmatpush2.bf16.msra.mxu0 0
    %2471 = vmatprep.subr.bf16.mxu0 0
    %2472 = vmatpush2.bf16.msra.mxu0 0
    %2473 = vmatprep.subr.bf16.mxu0 0
    %2474 = vmatpush2.bf16.msra.mxu0 0
    %2475 = vmatprep.subr.bf16.mxu0 0
    %2476 = vmatpush2.bf16.msra.mxu0 0
    %2477 = vmatprep.subr.bf16.mxu0 0
    %2478 = vmatpush2.bf16.msra.mxu0 0
    %2479 = vmatprep.mubr.bf16.mxu0 0
    %2480 = vmatmul.mubr.bf16.gmra.mxu0 %v2445
    %v2481 = vpop.f32.mrf.mxu0
    %v2482 = vadd.f32 %v2442, %v2481
    %v2483 = vpop.f32.mrf.mxu0
    %v2484 = vpop.f32.mrf.mxu0
    %v2485 = vadd.f32 %v2442, %v2484
    %v2486 = vpop.f32.mrf.mxu0
    %2487 = vdwg.mxu0
    %v2488 = vmax.f32 %v2482, 0.0
    %v2489 = vmax.f32 %v2485, 0.0
    %s2490 = scalar_lea.vmem %s11, 128
    %v2491 = vld [vmem:[%s2490] sm:$0xff]
    %v2492 = vld [vmem:[%s2490 + $0x8] sm:$0xff]
    %v2493 = vld [vmem:[%s2490 + $0x10] sm:$0xff]
    %v2494 = vld [vmem:[%s2490 + $0x18] sm:$0xff]
    %v2495 = vld [vmem:[%s2490 + $0x20] sm:$0xff]
    %v2496 = vld [vmem:[%s2490 + $0x28] sm:$0xff]
    %v2497 = vld [vmem:[%s2490 + $0x30] sm:$0xff]
    %v2498 = vld [vmem:[%s2490 + $0x38] sm:$0xff]
    %v2499 = vld [vmem:[%s2490 + $0x40] sm:$0xff]
    %v2500 = vld [vmem:[%s2490 + $0x48] sm:$0xff]
    %v2501 = vld [vmem:[%s2490 + $0x50] sm:$0xff]
    %v2502 = vld [vmem:[%s2490 + $0x58] sm:$0xff]
    %v2503 = vld [vmem:[%s2490 + $0x60] sm:$0xff]
    %v2504 = vld [vmem:[%s2490 + $0x68] sm:$0xff]
    %v2505 = vld [vmem:[%s2490 + $0x70] sm:$0xff]
    %v2506 = vld [vmem:[%s2490 + $0x78] sm:$0xff]
    %v2507 = vpack.c.bf16 %v2489, %v2488
    %v2508 = vpack.c.bf16 %v2492, %v2491
    %v2509 = vpack.c.bf16 %v2494, %v2493
    %v2510 = vpack.c.bf16 %v2496, %v2495
    %v2511 = vpack.c.bf16 %v2498, %v2497
    %v2512 = vpack.c.bf16 %v2500, %v2499
    %v2513 = vpack.c.bf16 %v2502, %v2501
    %v2514 = vpack.c.bf16 %v2504, %v2503
    %v2515 = vpack.c.bf16 %v2506, %v2505
    %s2516 = scalar_lea.vmem %s12, 1
    %v2517 = vld [vmem:[%s2516] sm:$0x1]
    %v2519 = vlaneseq
    %v2520 = vshrl.u32 %v2519, 7
    %v2521 = vsub.s32 0, %v2520
    %v2522 = vrot.slane %v2517, %v2521
    %2524 = vmatprep.subr.bf16.mxu0 0
    %2525 = vmatpush1.bf16.msra.mxu0 %v2515
    %2526 = vmatprep.subr.bf16.mxu0 0
    %2527 = vmatpush1.bf16.msra.mxu0 %v2514
    %2528 = vmatprep.subr.bf16.mxu0 0
    %2529 = vmatpush1.bf16.msra.mxu0 %v2513
    %2530 = vmatprep.subr.bf16.mxu0 0
    %2531 = vmatpush1.bf16.msra.mxu0 %v2512
    %2532 = vmatprep.subr.bf16.mxu0 0
    %2533 = vmatpush1.bf16.msra.mxu0 %v2511
    %2534 = vmatprep.subr.bf16.mxu0 0
    %2535 = vmatpush1.bf16.msra.mxu0 %v2510
    %2536 = vmatprep.subr.bf16.mxu0 0
    %2537 = vmatpush1.bf16.msra.mxu0 %v2509
    %2538 = vmatprep.subr.bf16.mxu0 0
    %2539 = vmatpush1.bf16.msra.mxu0 %v2508
    %2540 = vmatprep.subr.bf16.mxu0 0
    %2541 = vmatpush2.bf16.msra.mxu0 0
    %2542 = vmatprep.subr.bf16.mxu0 0
    %2543 = vmatpush2.bf16.msra.mxu0 0
    %2544 = vmatprep.subr.bf16.mxu0 0
    %2545 = vmatpush2.bf16.msra.mxu0 0
    %2546 = vmatprep.subr.bf16.mxu0 0
    %2547 = vmatpush2.bf16.msra.mxu0 0
    %2548 = vmatprep.subr.bf16.mxu0 0
    %2549 = vmatpush2.bf16.msra.mxu0 0
    %2550 = vmatprep.subr.bf16.mxu0 0
    %2551 = vmatpush2.bf16.msra.mxu0 0
    %2552 = vmatprep.subr.bf16.mxu0 0
    %2553 = vmatpush2.bf16.msra.mxu0 0
    %2554 = vmatprep.subr.bf16.mxu0 0
    %2555 = vmatpush2.bf16.msra.mxu0 0
    %2556 = vmatprep.mubr.bf16.mxu0 0
    %2557 = vmatmul.mubr.bf16.gmra.mxu0 %v2507
    %v2558 = vpop.f32.mrf.mxu0
    %v2559 = vadd.f32 %v2522, %v2558
    %v2560 = vpop.f32.mrf.mxu0
    %v2561 = vpop.f32.mrf.mxu0
    %v2562 = vadd.f32 %v2522, %v2561
    %v2563 = vpop.f32.mrf.mxu0
    %2564 = vdwg.mxu0
    %v2565 = vadd.f32 %v2426, %v2559
    %v2566 = vadd.f32 %v2427, %v2562
    %s2567 = scalar_lea.vmem %s13, 1
    %v2568 = vld [vmem:[%s2567] sm:$0x1]
    %s2569 = scalar_lea.vmem %s14, 1
    %v2570 = vld [vmem:[%s2569] sm:$0x1]
    %v2571 = vsel %vm100, %v2565, 0.0
    %2572 = vadd.xlane.f32.xlu0 %v2571
    %v2573 = vpop.xlane.xlu0 %2572
    %v2574 = vsel %vm100, %v2566, 0.0
    %2575 = vadd.xlane.f32.xlu0 %v2574
    %v2576 = vpop.xlane.xlu0 %2575
    %v2577 = vmul.f32 %v2573, %v1131
    %v2578 = vmul.f32 %v2576, %v1131
    %v2579 = vsub.f32 %v2565, %v2577
    %v2580 = vsub.f32 %v2566, %v2578
    %v2581 = vmul.f32 %v2579, %v2579
    %v2582 = vmul.f32 %v2580, %v2580
    %v2583 = vsel %vm100, %v2581, 0.0
    %2584 = vadd.xlane.f32.xlu0 %v2583
    %v2585 = vpop.xlane.xlu0 %2584
    %v2586 = vsel %vm100, %v2582, 0.0
    %2587 = vadd.xlane.f32.xlu0 %v2586
    %v2588 = vpop.xlane.xlu0 %2587
    %v2589 = vmul.f32 %v2585, %v1131
    %v2590 = vmul.f32 %v2588, %v1131
    %v2591 = vadd.f32 %v2589, 1e-05
    %v2592 = vadd.f32 %v2590, 1e-05
    %v2593 = vrsqrt.pop %v2591
    %v2594 = vrsqrt.pop %v2592
    %v2595 = vmul.f32 %v2579, %v2593
    %v2596 = vmul.f32 %v2580, %v2594
    %v2598 = vlaneseq
    %v2599 = vshrl.u32 %v2598, 7
    %v2600 = vsub.s32 0, %v2599
    %v2601 = vrot.slane %v2568, %v2600
    %v2603 = vmul.f32 %v2595, %v2601
    %v2604 = vmul.f32 %v2596, %v2601
    %v2606 = vlaneseq
    %v2607 = vshrl.u32 %v2606, 7
    %v2608 = vsub.s32 0, %v2607
    %v2609 = vrot.slane %v2570, %v2608
    %v2611 = vadd.f32 %v2603, %v2609
    %v2612 = vadd.f32 %v2604, %v2609
    %v2614 = vrot.slane %v2612, 7
    %vm2616 = vcmask 1040384
    %v2617 = vsel %vm2616, %v2611, %v2614
    %v2618 = vld [vmem:[%s15] sm:$0xff]
    %v2619 = vld [vmem:[%s15 + $0x8] sm:$0xff]
    %v2620 = vld [vmem:[%s15 + $0x10] sm:$0xff]
    %v2621 = vld [vmem:[%s15 + $0x18] sm:$0xff]
    %v2622 = vpack.c.bf16 %v2617, %v2617
    %v2623 = vpack.c.bf16 %v2619, %v2618
    %v2624 = vpack.c.bf16 %v2621, %v2620
    %v2625 = vld [vmem:[%s16] sm:$0x1]
    %v2627 = vlaneseq
    %v2628 = vshrl.u32 %v2627, 7
    %v2629 = vsub.s32 0, %v2628
    %v2630 = vrot.slane %v2625, %v2629
    %v2633 = vsel %vm100, %v2622, 0
    %2635 = vmatprep.subr.bf16.mxu0 0
    %2636 = vmatpush1.bf16.msra.mxu0 0
    %2637 = vmatprep.subr.bf16.mxu0 0
    %2638 = vmatpush1.bf16.msra.mxu0 0
    %2639 = vmatprep.subr.bf16.mxu0 0
    %2640 = vmatpush1.bf16.msra.mxu0 0
    %2641 = vmatprep.subr.bf16.mxu0 0
    %2642 = vmatpush1.bf16.msra.mxu0 0
    %2643 = vmatprep.subr.bf16.mxu0 0
    %2644 = vmatpush1.bf16.msra.mxu0 0
    %2645 = vmatprep.subr.bf16.mxu0 0
    %2646 = vmatpush1.bf16.msra.mxu0 0
    %2647 = vmatprep.subr.bf16.mxu0 0
    %2648 = vmatpush1.bf16.msra.mxu0 %v2624
    %2649 = vmatprep.subr.bf16.mxu0 0
    %2650 = vmatpush1.bf16.msra.mxu0 %v2623
    %2651 = vmatprep.subr.bf16.mxu0 0
    %2652 = vmatpush2.bf16.msra.mxu0 0
    %2653 = vmatprep.subr.bf16.mxu0 0
    %2654 = vmatpush2.bf16.msra.mxu0 0
    %2655 = vmatprep.subr.bf16.mxu0 0
    %2656 = vmatpush2.bf16.msra.mxu0 0
    %2657 = vmatprep.subr.bf16.mxu0 0
    %2658 = vmatpush2.bf16.msra.mxu0 0
    %2659 = vmatprep.subr.bf16.mxu0 0
    %2660 = vmatpush2.bf16.msra.mxu0 0
    %2661 = vmatprep.subr.bf16.mxu0 0
    %2662 = vmatpush2.bf16.msra.mxu0 0
    %2663 = vmatprep.subr.bf16.mxu0 0
    %2664 = vmatpush2.bf16.msra.mxu0 0
    %2665 = vmatprep.subr.bf16.mxu0 0
    %2666 = vmatpush2.bf16.msra.mxu0 0
    %2667 = vmatprep.mubr.bf16.mxu0 0
    %2668 = vmatmul.mubr.bf16.gmra.mxu0 %v2633
    %v2669 = vpop.f32.mrf.mxu0
    %v2670 = vadd.f32 %v2630, %v2669
    %v2671 = vpop.f32.mrf.mxu0
    %v2672 = vpop.f32.mrf.mxu0
    %v2673 = vpop.f32.mrf.mxu0
    %2674 = vdwg.mxu0
    %v2675 = vmax.f32 %v2670, 0.0
    %v2676 = vld [vmem:[%s17] sm:$0xff]
    %v2677 = vld [vmem:[%s17 + $0x8] sm:$0xff]
    %v2678 = vld [vmem:[%s17 + $0x10] sm:$0xff]
    %v2679 = vld [vmem:[%s17 + $0x18] sm:$0xff]
    %v2680 = vpack.c.bf16 %v2675, %v2675
    %v2681 = vpack.c.bf16 %v2677, %v2676
    %v2682 = vpack.c.bf16 %v2679, %v2678
    %v2683 = vld [vmem:[%s18] sm:$0x1]
    %v2685 = vlaneseq
    %v2686 = vshrl.u32 %v2685, 7
    %v2687 = vsub.s32 0, %v2686
    %v2688 = vrot.slane %v2683, %v2687
    %v2691 = vsel %vm100, %v2680, 0
    %2693 = vmatprep.subr.bf16.mxu0 0
    %2694 = vmatpush1.bf16.msra.mxu0 0
    %2695 = vmatprep.subr.bf16.mxu0 0
    %2696 = vmatpush1.bf16.msra.mxu0 0
    %2697 = vmatprep.subr.bf16.mxu0 0
    %2698 = vmatpush1.bf16.msra.mxu0 0
    %2699 = vmatprep.subr.bf16.mxu0 0
    %2700 = vmatpush1.bf16.msra.mxu0 0
    %2701 = vmatprep.subr.bf16.mxu0 0
    %2702 = vmatpush1.bf16.msra.mxu0 0
    %2703 = vmatprep.subr.bf16.mxu0 0
    %2704 = vmatpush1.bf16.msra.mxu0 0
    %2705 = vmatprep.subr.bf16.mxu0 0
    %2706 = vmatpush1.bf16.msra.mxu0 %v2682
    %2707 = vmatprep.subr.bf16.mxu0 0
    %2708 = vmatpush1.bf16.msra.mxu0 %v2681
    %2709 = vmatprep.subr.bf16.mxu0 0
    %2710 = vmatpush2.bf16.msra.mxu0 0
    %2711 = vmatprep.subr.bf16.mxu0 0
    %2712 = vmatpush2.bf16.msra.mxu0 0
    %2713 = vmatprep.subr.bf16.mxu0 0
    %2714 = vmatpush2.bf16.msra.mxu0 0
    %2715 = vmatprep.subr.bf16.mxu0 0
    %2716 = vmatpush2.bf16.msra.mxu0 0
    %2717 = vmatprep.subr.bf16.mxu0 0
    %2718 = vmatpush2.bf16.msra.mxu0 0
    %2719 = vmatprep.subr.bf16.mxu0 0
    %2720 = vmatpush2.bf16.msra.mxu0 0
    %2721 = vmatprep.subr.bf16.mxu0 0
    %2722 = vmatpush2.bf16.msra.mxu0 0
    %2723 = vmatprep.subr.bf16.mxu0 0
    %2724 = vmatpush2.bf16.msra.mxu0 0
    %2725 = vmatprep.mubr.bf16.mxu0 0
    %2726 = vmatmul.mubr.bf16.gmra.mxu0 %v2691
    %v2727 = vpop.f32.mrf.mxu0
    %v2728 = vadd.f32 %v2688, %v2727
    %v2729 = vpop.f32.mrf.mxu0
    %v2730 = vpop.f32.mrf.mxu0
    %v2731 = vpop.f32.mrf.mxu0
    %2732 = vdwg.mxu0
    %vm2733 = vcmask 123904
    %2734 = vst.msk [vmem:[#allocation5] sm:$0x3] %vm2733, %v2728
    // Predicated region
    $region74: #{bert_forward.1} parent=1 // pred_check
      _
    $region75: #{bert_forward.1} parent=1 // pred_check_branch
      %2736 = sbr.rel (0) target = $region77
    $region76: #{bert_forward.1} parent=1 // pred_region
      %s2738 = ssub.s32 32, 32
      %2739 = vsyncadd [#allocation6], %s2738
      %s2741 = sshll.u32 [#allocation5], 4
      %s2742 = int_to_ptr.vmem [resolvable:$true] %s2741
      %2744 = dma.vmem_to_hbm [thread:$0]  %s2742, 32, %s19, [#allocation6]
    $region77: #{bert_forward.1} parent=1 // pred_fallthru
      _
    // Predicated region
    $region78: #{bert_forward.1} parent=1 // pred_check
      _
    $region79: #{bert_forward.1} parent=1 // pred_check_branch
      %2746 = sbr.rel (0) target = $region81
    $region80: #{bert_forward.1} parent=1 // pred_region
      %2747 = dma.done [#allocation6], 32
    $region81: #{bert_forward.1} parent=1 // pred_fallthru
      _
    %2748 = vsyncpa [#allocation6], 1

</llo_original>
